<compile_context>
chip_gen: v7x
topology: tpu7x:2x2x1
jax: 0.10.0
libtpu: 0.0.40
codegen_flags: <defaults>
</compile_context>

<pallas_src>
import functools

import jax
import jax.numpy as jnp
from jax import lax
from jax.experimental import pallas as pl
from jax.experimental.pallas import tpu as pltpu


def _round_up(x, m):
    return (x + m - 1) // m * m


# ----------------------------------------------------------------------------
# Kernel 1: 3x3x3 conv + folded BN (+ optional ReLU), channels-last, lane-dense
# ----------------------------------------------------------------------------
def _conv3d_bn_kernel(x_ref, w_ref, b_ref, o_ref, acc_ref, *, H, W, relu):
    """grid = (N, T, 3); innermost axis = temporal tap (reduction).

    x_ref : (1, 1, H+2, W+2, Cp)  bf16   spatially padded input slab (t + dt)
    w_ref : (1, 9*Cp, Cop)        bf16   folded weights for this temporal tap
    b_ref : (1, Cop)              f32    folded BN bias
    o_ref : (1, 1, H*W, Cop)      out
    acc   : (H*W, Cop)            f32    VMEM accumulator
    """
    dt = pl.program_id(2)

    @pl.when(dt == 0)
    def _init():
        acc_ref[...] = jnp.zeros_like(acc_ref)

    Cp = x_ref.shape[-1]
    HW = H * W
    xv = x_ref[0, 0]                                   # (H+2, W+2, Cp) bf16

    partial = None
    for j in range(9):                                 # 9 spatial taps, unrolled
        dh, dw = divmod(j, 3)
        xs = xv[dh:dh + H, dw:dw + W, :].reshape(HW, Cp)
        wj = w_ref[0, j * Cp:(j + 1) * Cp, :]
        d = jnp.dot(xs, wj, preferred_element_type=jnp.float32)
        partial = d if partial is None else partial + d
    acc_ref[...] += partial

    @pl.when(dt == pl.num_programs(2) - 1)
    def _finalize():
        r = acc_ref[...] + b_ref[...]
        if relu:
            r = jnp.maximum(r, 0.0)
        o_ref[0, 0] = r.astype(o_ref.dtype)


def conv3x3x3_bn(x_cl, wmat, bvec, *, relu, out_dtype):
    """x_cl: (N, T, H, W, Cp) -> (N, T, H*W, Cop).  stride=1, pad=1, BN folded."""
    N, T, H, W, Cp = x_cl.shape
    Cop = wmat.shape[-1]
    HW = H * W
    xp = jnp.pad(x_cl, ((0, 0), (1, 1), (1, 1), (1, 1), (0, 0))).astype(jnp.bfloat16)

    kern = functools.partial(_conv3d_bn_kernel, H=H, W=W, relu=relu)
    return pl.pallas_call(
        kern,
        out_shape=jax.ShapeDtypeStruct((N, T, HW, Cop), out_dtype),
        grid_spec=pltpu.PrefetchScalarGridSpec(
            num_scalar_prefetch=0,
            grid=(N, T, 3),
            in_specs=[
                pl.BlockSpec((1, 1, H + 2, W + 2, Cp),
                             lambda n, t, dt: (n, t + dt, 0, 0, 0)),
                pl.BlockSpec((1, 9 * Cp, Cop), lambda n, t, dt: (dt, 0, 0)),
                pl.BlockSpec((1, Cop), lambda n, t, dt: (0, 0)),
            ],
            out_specs=pl.BlockSpec((1, 1, HW, Cop), lambda n, t, dt: (n, t, 0, 0)),
            scratch_shapes=[pltpu.VMEM((HW, Cop), jnp.float32)],
        ),
        compiler_params=pltpu.CompilerParams(
            dimension_semantics=("parallel", "parallel", "arbitrary")),
    )(xp, wmat, bvec)


# ----------------------------------------------------------------------------
# Kernel 2: fused relation gating + residual + ReLU (+ 1x1x1 reduction conv)
# ----------------------------------------------------------------------------
def _modulate_kernel(*refs, apply_reduction):
    """z = relu(x + h2 * sigmoid(c_rel + t_rel + s_rel)); optionally z @ Wred + b.

    h_ref / x_ref : (1, 1, HW, Cp) f32
    st_ref        : (1, 1, HW, 1)  f32   t_rel + s_rel per voxel
    c_ref         : (1, 1, Cp)     f32   channel relation logits
    [w_ref (Cp,Cop) bf16, b_ref (1,Cop) f32]   reduction conv, if any
    o_ref         : (1, 1, HW, Cop) f32
    """
    if apply_reduction:
        h_ref, x_ref, st_ref, c_ref, w_ref, b_ref, o_ref = refs
    else:
        h_ref, x_ref, st_ref, c_ref, o_ref = refs

    h = h_ref[0, 0].astype(jnp.float32)            # (HW, Cp)
    xr = x_ref[0, 0].astype(jnp.float32)           # (HW, Cp)
    logits = st_ref[0, 0] + c_ref[0]               # (HW,1)+(1,Cp) -> (HW,Cp)
    z = jnp.maximum(xr + h * jax.nn.sigmoid(logits), 0.0)   # f32 VPU/EUP math

    if apply_reduction:
        out = jnp.dot(z.astype(w_ref.dtype), w_ref[...],
                      preferred_element_type=jnp.float32) + b_ref[...]
        o_ref[0, 0] = out.astype(o_ref.dtype)
    else:
        o_ref[0, 0] = z.astype(o_ref.dtype)


def modulate_residual_reduce(h2, x_res, st_rel, c_rel, wred, bred, *, apply_reduction):
    N, T, HW, Cp = h2.shape
    Cop = wred.shape[-1] if apply_reduction else Cp

    in_specs = [
        pl.BlockSpec((1, 1, HW, Cp), lambda n, t: (n, t, 0, 0)),   # h2
        pl.BlockSpec((1, 1, HW, Cp), lambda n, t: (n, t, 0, 0)),   # residual x
        pl.BlockSpec((1, 1, HW, 1), lambda n, t: (n, t, 0, 0)),    # t_rel + s_rel
        pl.BlockSpec((1, 1, Cp), lambda n, t: (n, 0, 0)),          # c_rel
    ]
    args = [h2, x_res, st_rel, c_rel]
    if apply_reduction:
        in_specs += [pl.BlockSpec((Cp, Cop), lambda n, t: (0, 0)),
                     pl.BlockSpec((1, Cop), lambda n, t: (0, 0))]
        args += [wred, bred]

    kern = functools.partial(_modulate_kernel, apply_reduction=apply_reduction)
    return pl.pallas_call(
        kern,
        out_shape=jax.ShapeDtypeStruct((N, T, HW, Cop), jnp.float32),
        grid_spec=pltpu.PrefetchScalarGridSpec(
            num_scalar_prefetch=0,
            grid=(N, T),
            in_specs=in_specs,
            out_specs=pl.BlockSpec((1, 1, HW, Cop), lambda n, t: (n, t, 0, 0)),
        ),
        compiler_params=pltpu.CompilerParams(
            dimension_semantics=("parallel", "parallel")),
    )(*args)


# ----------------------------------------------------------------------------
# Parameters (torch-layout weights, eval-mode BN stats)
# ----------------------------------------------------------------------------
def init_params(key, c_in, c_out, seq_len, c_mlp_r=1, t_mlp_r=1):
    ks = jax.random.split(key, 8)

    def nrm(k, shape, std=0.05):
        return std * jax.random.normal(k, shape, jnp.float32)

    c_hid = max(1, c_in // c_mlp_r)
    t_hid = max(1, seq_len // t_mlp_r)
    ones = lambda n: jnp.ones((n,), jnp.float32)
    zeros = lambda n: jnp.zeros((n,), jnp.float32)
    return dict(
        conv1_w=nrm(ks[0], (c_in, c_in, 3, 3, 3)), conv1_b=zeros(c_in),
        conv2_w=nrm(ks[1], (c_in, c_in, 3, 3, 3)), conv2_b=zeros(c_in),
        bn1_gamma=ones(c_in), bn1_beta=zeros(c_in),
        bn1_mean=zeros(c_in), bn1_var=ones(c_in),
        bn2_gamma=ones(c_in), bn2_beta=zeros(c_in),
        bn2_mean=zeros(c_in), bn2_var=ones(c_in),
        c_fc1_w=nrm(ks[2], (c_in, c_hid)), c_fc1_b=zeros(c_hid),
        c_fc2_w=nrm(ks[3], (c_hid, c_in)), c_fc2_b=zeros(c_in),
        t_fc1_w=nrm(ks[4], (seq_len, t_hid)), t_fc1_b=zeros(t_hid),
        t_fc2_w=nrm(ks[5], (t_hid, seq_len)), t_fc2_b=zeros(seq_len),
        s_conv_w=nrm(ks[6], (1, 1, 1, 1, 1)), s_conv_b=zeros(1),
        # reduction Conv3d(1x1x1): trunc_normal(std=0.02) weight, zero bias
        red_w=0.02 * jax.random.truncated_normal(
            ks[7], -2.0, 2.0, (c_out, c_in, 1, 1, 1), jnp.float32),
        red_b=zeros(c_out),
    )


# ----------------------------------------------------------------------------
# Forward pass
# ----------------------------------------------------------------------------
def meta_block_forward(params, x, eps=1e-5):
    N, C, T, H, W = x.shape
    c_out = params["red_w"].shape[0]
    HW = H * W
    Cp = _round_up(C, 128)          # lane-padded in/out channels
    Cop = _round_up(c_out, 128)

    # ---- channels-last, zero-padded to 128 lanes -----------------------------
    x_cl = jnp.transpose(x, (0, 2, 3, 4, 1)).astype(jnp.float32)     # (N,T,H,W,C)
    x_cl = jnp.pad(x_cl, ((0, 0), (0, 0), (0, 0), (0, 0), (0, Cp - C)))
    x_res = x_cl.reshape(N, T, HW, Cp)                               # f32 residual

    # ---- fold eval-mode BN into conv weights, pad, bf16 ----------------------
    def fold(w, b, gamma, beta, mean, var):
        co, ci = w.shape[0], w.shape[1]
        scale = gamma / jnp.sqrt(var + eps)
        wf = jnp.transpose(w, (2, 3, 4, 1, 0)) * scale               # (kt,kh,kw,Ci,Co)
        wf = jnp.pad(wf, ((0, 0), (0, 0), (0, 0), (0, Cp - ci), (0, Cp - co)))
        wf = wf.reshape(3, 9 * Cp, Cp).astype(jnp.bfloat16)
        bv = (b - mean) * scale + beta
        bv = jnp.pad(bv, (0, Cp - co)).reshape(1, Cp).astype(jnp.float32)
        return wf, bv

    w1, b1 = fold(params["conv1_w"], params["conv1_b"], params["bn1_gamma"],
                  params["bn1_beta"], params["bn1_mean"], params["bn1_var"])
    w2, b2 = fold(params["conv2_w"], params["conv2_b"], params["bn2_gamma"],
                  params["bn2_beta"], params["bn2_mean"], params["bn2_var"])

    # ---- i3d basic block body (two fused conv+BN kernels) --------------------
    h1 = conv3x3x3_bn(x_cl.astype(jnp.bfloat16), w1, b1,
                      relu=True, out_dtype=jnp.bfloat16)             # (N,T,HW,Cp)
    h2 = conv3x3x3_bn(h1.reshape(N, T, H, W, Cp), w2, b2,
                      relu=False, out_dtype=jnp.float32)             # (N,T,HW,Cp)

    # ---- CoTeRe CTSR relations (tiny: plain JAX / XLA) ------------------------
    h2r = h2[..., :C]                                                # real channels
    pooled_c = h2r.mean(axis=(1, 2))                                 # (N, C)
    pooled_t = h2r.mean(axis=(2, 3))                                 # (N, T)
    pooled_s = h2r.mean(axis=3)                                      # (N, T, HW)

    def mlp(v, wa, ba, wb, bb):
        return jax.nn.relu(v @ wa + ba) @ wb + bb

    c_rel = mlp(pooled_c, params["c_fc1_w"], params["c_fc1_b"],
                params["c_fc2_w"], params["c_fc2_b"])                # (N, C)
    t_rel = mlp(pooled_t, params["t_fc1_w"], params["t_fc1_b"],
                params["t_fc2_w"], params["t_fc2_b"])                # (N, T)
    s_rel = (pooled_s * params["s_conv_w"].reshape(())
             + params["s_conv_b"].reshape(()))                       # (N, T, HW)

    st_rel = (t_rel[:, :, None] + s_rel)[..., None].astype(jnp.float32)   # (N,T,HW,1)
    c_rel_p = jnp.pad(c_rel, ((0, 0), (0, Cp - C)))[:, None, :].astype(jnp.float32)

    # ---- fused gate + residual + ReLU (+ 1x1x1 reduction conv) ----------------
    apply_reduction = (C != c_out)
    wred = jnp.pad(params["red_w"].reshape(c_out, C).T,
                   ((0, Cp - C), (0, Cop - c_out))).astype(jnp.bfloat16)
    bred = jnp.pad(params["red_b"], (0, Cop - c_out)).reshape(1, Cop).astype(jnp.float32)

    out = modulate_residual_reduce(h2, x_res, st_rel, c_rel_p, wred, bred,
                                   apply_reduction=apply_reduction)
    co = c_out if apply_reduction else C
    out = out[..., :co].reshape(N, T, H, W, co)
    return jnp.transpose(out, (0, 4, 1, 2, 3))                       # NCTHW


# ----------------------------------------------------------------------------
# Pure-JAX reference (f32) for a correctness self-check
# ----------------------------------------------------------------------------
def meta_block_reference(params, x, eps=1e-5):
    N, C, T, H, W = x.shape
    c_out = params["red_w"].shape[0]

    def conv_bn(v, w, b, g, bt, mn, vr, relu):
        scale = g / jnp.sqrt(vr + eps)
        out = lax.conv_general_dilated(
            v, w, (1, 1, 1), ((1, 1), (1, 1), (1, 1)),
            dimension_numbers=("NCDHW", "OIDHW", "NCDHW"))
        out = (out * scale[None, :, None, None, None]
               + ((b - mn) * scale + bt)[None, :, None, None, None])
        return jax.nn.relu(out) if relu else out

    h1 = conv_bn(x, params["conv1_w"], params["conv1_b"], params["bn1_gamma"],
                 params["bn1_beta"], params["bn1_mean"], params["bn1_var"], True)
    h2 = conv_bn(h1, params["conv2_w"], params["conv2_b"], params["bn2_gamma"],
                 params["bn2_beta"], params["bn2_mean"], params["bn2_var"], False)

    pooled_c = h2.mean(axis=(2, 3, 4))
    pooled_t = h2.mean(axis=(1, 3, 4))
    pooled_s = h2.mean(axis=1, keepdims=True)
    c_rel = (jax.nn.relu(pooled_c @ params["c_fc1_w"] + params["c_fc1_b"])
             @ params["c_fc2_w"] + params["c_fc2_b"])
    t_rel = (jax.nn.relu(pooled_t @ params["t_fc1_w"] + params["t_fc1_b"])
             @ params["t_fc2_w"] + params["t_fc2_b"])
    s_rel = pooled_s * params["s_conv_w"].reshape(()) + params["s_conv_b"].reshape(())
    logits = c_rel[:, :, None, None, None] + t_rel[:, None, :, None, None] + s_rel
    z = jax.nn.relu(x + h2 * jax.nn.sigmoid(logits))
    if C == c_out:
        return z
    zz = z.transpose(0, 2, 3, 4, 1) @ params["red_w"].reshape(c_out, C).T + params["red_b"]
    return zz.transpose(0, 4, 1, 2, 3)


# ----------------------------------------------------------------------------
if __name__ == "__main__":
    key = jax.random.PRNGKey(0)
    k_param, k_x = jax.random.split(key)

    N, C_IN, C_OUT, T, H, W = 2, 8, 16, 4, 8, 8   # in != out -> reduction path
    params = init_params(k_param, C_IN, C_OUT, seq_len=T)
    x = jax.random.normal(k_x, (N, C_IN, T, H, W), jnp.float32)

    fwd = jax.jit(meta_block_forward)
    y = fwd(params, x)
    jax.block_until_ready(y)
    assert y.shape == (N, C_OUT, T, H, W), y.shape

    y_ref = jax.jit(meta_block_reference)(params, x)
    jax.block_until_ready(y_ref)
    err = float(jnp.max(jnp.abs(y - y_ref)))
    assert err < 5e-2, f"max abs err {err}"

    print("KERNEL_OK")
</pallas_src>

<mosaic_0001>
module attributes {stable_mosaic.version = 11 : i64} {
  func.func @_conv3d_bn_kernel(%arg0: i32, %arg1: i32, %arg2: i32, %arg3: memref<1x1x10x10x128xbf16, #tpu.memory_space<vmem>>, %arg4: memref<1x1152x128xbf16, #tpu.memory_space<vmem>>, %arg5: memref<1x128xf32, #tpu.memory_space<vmem>>, %arg6: memref<1x1x64x128xbf16, #tpu.memory_space<vmem>>, %arg7: memref<64x128xf32, #tpu.memory_space<vmem>>) attributes {dimension_semantics = [#tpu.dimension_semantics<parallel>, #tpu.dimension_semantics<parallel>, #tpu.dimension_semantics<arbitrary>], iteration_bounds = array<i64: 2, 4, 3>, scalar_prefetch = 0 : i64, scratch_operands = 1 : i64, tpu.core_type = #tpu.core_type<tc>, window_params = [{transform_indices = @transform_0, window_bounds = array<i64: 1, 1, 10, 10, 128>}, {transform_indices = @transform_1, window_bounds = array<i64: 1, 1152, 128>}, {pipeline_mode = #tpu.pipeline_mode<synchronous>, transform_indices = @transform_2, window_bounds = array<i64: 1, 128>}, {transform_indices = @transform_3, window_bounds = array<i64: 1, 1, 64, 128>}]} {
    %c0_i32 = arith.constant 0 : i32
    %0 = arith.cmpi eq, %arg2, %c0_i32 : i32
    %1 = arith.extui %0 : i1 to i32
    %c0_i32_0 = arith.constant 0 : i32
    %2 = arith.cmpi ne, %1, %c0_i32_0 : i32
    scf.if %2 {
      %cst_37 = arith.constant 0.000000e+00 : f32
      %64 = vector.broadcast %cst_37 : f32 to vector<64x128xf32>
      %c0_38 = arith.constant 0 : index
      %c0_39 = arith.constant 0 : index
      %65 = vector.load %arg7[%c0_38, %c0_39] : memref<64x128xf32, #tpu.memory_space<vmem>>, vector<64x128xf32>
      tpu.vector_store %arg7[%c0_38, %c0_39], %64 {strides = array<i32>} : memref<64x128xf32, #tpu.memory_space<vmem>>, vector<64x128xf32>,
    } else {
    }
    %c0 = arith.constant 0 : index
    %c0_1 = arith.constant 0 : index
    %c0_2 = arith.constant 0 : index
    %c0_3 = arith.constant 0 : index
    %c0_4 = arith.constant 0 : index
    %3 = vector.load %arg3[%c0, %c0_1, %c0_2, %c0_3, %c0_4] : memref<1x1x10x10x128xbf16, #tpu.memory_space<vmem>>, vector<1x1x10x10x128xbf16>
    %4 = vector.shape_cast %3 : vector<1x1x10x10x128xbf16> to vector<10x10x128xbf16>
    %5 = vector.extract_strided_slice %4 {offsets = [0, 0, 0], sizes = [8, 8, 128], strides = [1, 1, 1]} : vector<10x10x128xbf16> to vector<8x8x128xbf16>
    %6 = vector.shape_cast %5 : vector<8x8x128xbf16> to vector<64x128xbf16>
    %c0_5 = arith.constant 0 : index
    %c0_6 = arith.constant 0 : index
    %c0_7 = arith.constant 0 : index
    %7 = vector.load %arg4[%c0_5, %c0_6, %c0_7] : memref<1x1152x128xbf16, #tpu.memory_space<vmem>>, vector<1x128x128xbf16>
    %8 = vector.shape_cast %7 : vector<1x128x128xbf16> to vector<128x128xbf16>
    %cst = arith.constant dense<0.000000e+00> : vector<64x128xf32>
    %9 = tpu.matmul %6, %8, %cst {dimension_numbers = #tpu.dot_dimension_numbers<[1], [0], [0], [1], [0, 0, 1, 1], [], []>} : vector<64x128xbf16>, vector<128x128xbf16>, vector<64x128xf32> -> vector<64x128xf32>
    %10 = vector.extract_strided_slice %4 {offsets = [0, 1, 0], sizes = [8, 8, 128], strides = [1, 1, 1]} : vector<10x10x128xbf16> to vector<8x8x128xbf16>
    %11 = vector.shape_cast %10 : vector<8x8x128xbf16> to vector<64x128xbf16>
    %c0_8 = arith.constant 0 : index
    %c128 = arith.constant 128 : index
    %c0_9 = arith.constant 0 : index
    %12 = vector.load %arg4[%c0_8, %c128, %c0_9] : memref<1x1152x128xbf16, #tpu.memory_space<vmem>>, vector<1x128x128xbf16>
    %13 = vector.shape_cast %12 : vector<1x128x128xbf16> to vector<128x128xbf16>
    %cst_10 = arith.constant dense<0.000000e+00> : vector<64x128xf32>
    %14 = tpu.matmul %11, %13, %cst_10 {dimension_numbers = #tpu.dot_dimension_numbers<[1], [0], [0], [1], [0, 0, 1, 1], [], []>} : vector<64x128xbf16>, vector<128x128xbf16>, vector<64x128xf32> -> vector<64x128xf32>
    %15 = arith.addf %9, %14 : vector<64x128xf32>
    %16 = vector.extract_strided_slice %4 {offsets = [0, 2, 0], sizes = [8, 8, 128], strides = [1, 1, 1]} : vector<10x10x128xbf16> to vector<8x8x128xbf16>
    %17 = vector.shape_cast %16 : vector<8x8x128xbf16> to vector<64x128xbf16>
    %c0_11 = arith.constant 0 : index
    %c256 = arith.constant 256 : index
    %c0_12 = arith.constant 0 : index
    %18 = vector.load %arg4[%c0_11, %c256, %c0_12] : memref<1x1152x128xbf16, #tpu.memory_space<vmem>>, vector<1x128x128xbf16>
    %19 = vector.shape_cast %18 : vector<1x128x128xbf16> to vector<128x128xbf16>
    %cst_13 = arith.constant dense<0.000000e+00> : vector<64x128xf32>
    %20 = tpu.matmul %17, %19, %cst_13 {dimension_numbers = #tpu.dot_dimension_numbers<[1], [0], [0], [1], [0, 0, 1, 1], [], []>} : vector<64x128xbf16>, vector<128x128xbf16>, vector<64x128xf32> -> vector<64x128xf32>
    %21 = arith.addf %15, %20 : vector<64x128xf32>
    %22 = vector.extract_strided_slice %4 {offsets = [1, 0, 0], sizes = [8, 8, 128], strides = [1, 1, 1]} : vector<10x10x128xbf16> to vector<8x8x128xbf16>
    %23 = vector.shape_cast %22 : vector<8x8x128xbf16> to vector<64x128xbf16>
    %c0_14 = arith.constant 0 : index
    %c384 = arith.constant 384 : index
    %c0_15 = arith.constant 0 : index
    %24 = vector.load %arg4[%c0_14, %c384, %c0_15] : memref<1x1152x128xbf16, #tpu.memory_space<vmem>>, vector<1x128x128xbf16>
    %25 = vector.shape_cast %24 : vector<1x128x128xbf16> to vector<128x128xbf16>
    %cst_16 = arith.constant dense<0.000000e+00> : vector<64x128xf32>
    %26 = tpu.matmul %23, %25, %cst_16 {dimension_numbers = #tpu.dot_dimension_numbers<[1], [0], [0], [1], [0, 0, 1, 1], [], []>} : vector<64x128xbf16>, vector<128x128xbf16>, vector<64x128xf32> -> vector<64x128xf32>
    %27 = arith.addf %21, %26 : vector<64x128xf32>
    %28 = vector.extract_strided_slice %4 {offsets = [1, 1, 0], sizes = [8, 8, 128], strides = [1, 1, 1]} : vector<10x10x128xbf16> to vector<8x8x128xbf16>
    %29 = vector.shape_cast %28 : vector<8x8x128xbf16> to vector<64x128xbf16>
    %c0_17 = arith.constant 0 : index
    %c512 = arith.constant 512 : index
    %c0_18 = arith.constant 0 : index
    %30 = vector.load %arg4[%c0_17, %c512, %c0_18] : memref<1x1152x128xbf16, #tpu.memory_space<vmem>>, vector<1x128x128xbf16>
    %31 = vector.shape_cast %30 : vector<1x128x128xbf16> to vector<128x128xbf16>
    %cst_19 = arith.constant dense<0.000000e+00> : vector<64x128xf32>
    %32 = tpu.matmul %29, %31, %cst_19 {dimension_numbers = #tpu.dot_dimension_numbers<[1], [0], [0], [1], [0, 0, 1, 1], [], []>} : vector<64x128xbf16>, vector<128x128xbf16>, vector<64x128xf32> -> vector<64x128xf32>
    %33 = arith.addf %27, %32 : vector<64x128xf32>
    %34 = vector.extract_strided_slice %4 {offsets = [1, 2, 0], sizes = [8, 8, 128], strides = [1, 1, 1]} : vector<10x10x128xbf16> to vector<8x8x128xbf16>
    %35 = vector.shape_cast %34 : vector<8x8x128xbf16> to vector<64x128xbf16>
    %c0_20 = arith.constant 0 : index
    %c640 = arith.constant 640 : index
    %c0_21 = arith.constant 0 : index
    %36 = vector.load %arg4[%c0_20, %c640, %c0_21] : memref<1x1152x128xbf16, #tpu.memory_space<vmem>>, vector<1x128x128xbf16>
    %37 = vector.shape_cast %36 : vector<1x128x128xbf16> to vector<128x128xbf16>
    %cst_22 = arith.constant dense<0.000000e+00> : vector<64x128xf32>
    %38 = tpu.matmul %35, %37, %cst_22 {dimension_numbers = #tpu.dot_dimension_numbers<[1], [0], [0], [1], [0, 0, 1, 1], [], []>} : vector<64x128xbf16>, vector<128x128xbf16>, vector<64x128xf32> -> vector<64x128xf32>
    %39 = arith.addf %33, %38 : vector<64x128xf32>
    %40 = vector.extract_strided_slice %4 {offsets = [2, 0, 0], sizes = [8, 8, 128], strides = [1, 1, 1]} : vector<10x10x128xbf16> to vector<8x8x128xbf16>
    %41 = vector.shape_cast %40 : vector<8x8x128xbf16> to vector<64x128xbf16>
    %c0_23 = arith.constant 0 : index
    %c768 = arith.constant 768 : index
    %c0_24 = arith.constant 0 : index
    %42 = vector.load %arg4[%c0_23, %c768, %c0_24] : memref<1x1152x128xbf16, #tpu.memory_space<vmem>>, vector<1x128x128xbf16>
    %43 = vector.shape_cast %42 : vector<1x128x128xbf16> to vector<128x128xbf16>
    %cst_25 = arith.constant dense<0.000000e+00> : vector<64x128xf32>
    %44 = tpu.matmul %41, %43, %cst_25 {dimension_numbers = #tpu.dot_dimension_numbers<[1], [0], [0], [1], [0, 0, 1, 1], [], []>} : vector<64x128xbf16>, vector<128x128xbf16>, vector<64x128xf32> -> vector<64x128xf32>
    %45 = arith.addf %39, %44 : vector<64x128xf32>
    %46 = vector.extract_strided_slice %4 {offsets = [2, 1, 0], sizes = [8, 8, 128], strides = [1, 1, 1]} : vector<10x10x128xbf16> to vector<8x8x128xbf16>
    %47 = vector.shape_cast %46 : vector<8x8x128xbf16> to vector<64x128xbf16>
    %c0_26 = arith.constant 0 : index
    %c896 = arith.constant 896 : index
    %c0_27 = arith.constant 0 : index
    %48 = vector.load %arg4[%c0_26, %c896, %c0_27] : memref<1x1152x128xbf16, #tpu.memory_space<vmem>>, vector<1x128x128xbf16>
    %49 = vector.shape_cast %48 : vector<1x128x128xbf16> to vector<128x128xbf16>
    %cst_28 = arith.constant dense<0.000000e+00> : vector<64x128xf32>
    %50 = tpu.matmul %47, %49, %cst_28 {dimension_numbers = #tpu.dot_dimension_numbers<[1], [0], [0], [1], [0, 0, 1, 1], [], []>} : vector<64x128xbf16>, vector<128x128xbf16>, vector<64x128xf32> -> vector<64x128xf32>
    %51 = arith.addf %45, %50 : vector<64x128xf32>
    %52 = vector.extract_strided_slice %4 {offsets = [2, 2, 0], sizes = [8, 8, 128], strides = [1, 1, 1]} : vector<10x10x128xbf16> to vector<8x8x128xbf16>
    %53 = vector.shape_cast %52 : vector<8x8x128xbf16> to vector<64x128xbf16>
    %c0_29 = arith.constant 0 : index
    %c1024 = arith.constant 1024 : index
    %c0_30 = arith.constant 0 : index
    %54 = vector.load %arg4[%c0_29, %c1024, %c0_30] : memref<1x1152x128xbf16, #tpu.memory_space<vmem>>, vector<1x128x128xbf16>
    %55 = vector.shape_cast %54 : vector<1x128x128xbf16> to vector<128x128xbf16>
    %cst_31 = arith.constant dense<0.000000e+00> : vector<64x128xf32>
    %56 = tpu.matmul %53, %55, %cst_31 {dimension_numbers = #tpu.dot_dimension_numbers<[1], [0], [0], [1], [0, 0, 1, 1], [], []>} : vector<64x128xbf16>, vector<128x128xbf16>, vector<64x128xf32> -> vector<64x128xf32>
    %57 = arith.addf %51, %56 : vector<64x128xf32>
    %c0_32 = arith.constant 0 : index
    %c0_33 = arith.constant 0 : index
    %58 = vector.load %arg7[%c0_32, %c0_33] : memref<64x128xf32, #tpu.memory_space<vmem>>, vector<64x128xf32>
    %59 = arith.addf %58, %57 : vector<64x128xf32>
    %c0_34 = arith.constant 0 : index
    %c0_35 = arith.constant 0 : index
    %60 = vector.load %arg7[%c0_34, %c0_35] : memref<64x128xf32, #tpu.memory_space<vmem>>, vector<64x128xf32>
    tpu.vector_store %arg7[%c0_34, %c0_35], %59 {strides = array<i32>} : memref<64x128xf32, #tpu.memory_space<vmem>>, vector<64x128xf32>,
    %c2_i32 = arith.constant 2 : i32
    %61 = arith.cmpi eq, %arg2, %c2_i32 : i32
    %62 = arith.extui %61 : i1 to i32
    %c0_i32_36 = arith.constant 0 : i32
    %63 = arith.cmpi ne, %62, %c0_i32_36 : i32
    scf.if %63 {
      %c0_37 = arith.constant 0 : index
      %c0_38 = arith.constant 0 : index
      %64 = vector.load %arg7[%c0_37, %c0_38] : memref<64x128xf32, #tpu.memory_space<vmem>>, vector<64x128xf32>
      %c0_39 = arith.constant 0 : index
      %c0_40 = arith.constant 0 : index
      %65 = vector.load %arg5[%c0_39, %c0_40] : memref<1x128xf32, #tpu.memory_space<vmem>>, vector<1x128xf32>
      %66 = vector.broadcast %65 : vector<1x128xf32> to vector<64x128xf32>
      %67 = arith.addf %64, %66 : vector<64x128xf32>
      %cst_41 = arith.constant 0.000000e+00 : f32
      %68 = vector.broadcast %cst_41 : f32 to vector<64x128xf32>
      %69 = arith.maximumf %67, %68 : vector<64x128xf32>
      %70 = arith.truncf %69 : vector<64x128xf32> to vector<64x128xbf16>
      %c0_42 = arith.constant 0 : index
      %c0_43 = arith.constant 0 : index
      %c0_44 = arith.constant 0 : index
      %c0_45 = arith.constant 0 : index
      %71 = vector.load %arg6[%c0_42, %c0_43, %c0_44, %c0_45] : memref<1x1x64x128xbf16, #tpu.memory_space<vmem>>, vector<1x1x64x128xbf16>
      %72 = vector.shape_cast %71 : vector<1x1x64x128xbf16> to vector<64x128xbf16>
      %73 = vector.shape_cast %70 : vector<64x128xbf16> to vector<1x1x64x128xbf16>
      tpu.vector_store %arg6[%c0_42, %c0_43, %c0_44, %c0_45], %73 {strides = array<i32>} : memref<1x1x64x128xbf16, #tpu.memory_space<vmem>>, vector<1x1x64x128xbf16>,
    } else {
    }
    return
  }
  func.func @transform_0(%arg0: i32, %arg1: i32, %arg2: i32) -> (i32, i32, i32, i32, i32) {
    %0 = arith.addi %arg1, %arg2 : i32
    %c0_i32 = arith.constant 0 : i32
    %c0_i32_0 = arith.constant 0 : i32
    %c0_i32_1 = arith.constant 0 : i32
    %c0_i32_2 = arith.constant 0 : i32
    return %arg0, %0, %c0_i32, %c0_i32_0, %c0_i32_1 : i32, i32, i32, i32, i32
  }
  func.func @transform_1(%arg0: i32, %arg1: i32, %arg2: i32) -> (i32, i32, i32) {
    %c0_i32 = arith.constant 0 : i32
    %c0_i32_0 = arith.constant 0 : i32
    %c0_i32_1 = arith.constant 0 : i32
    return %arg2, %c0_i32, %c0_i32_0 : i32, i32, i32
  }
  func.func @transform_2(%arg0: i32, %arg1: i32, %arg2: i32) -> (i32, i32) {
    %c0_i32 = arith.constant 0 : i32
    %c0_i32_0 = arith.constant 0 : i32
    %c0_i32_1 = arith.constant 0 : i32
    return %c0_i32, %c0_i32_0 : i32, i32
  }
  func.func @transform_3(%arg0: i32, %arg1: i32, %arg2: i32) -> (i32, i32, i32, i32) {
    %c0_i32 = arith.constant 0 : i32
    %c0_i32_0 = arith.constant 0 : i32
    %c0_i32_1 = arith.constant 0 : i32
    return %arg0, %arg1, %c0_i32, %c0_i32_0 : i32, i32, i32, i32
  }
}

module attributes {stable_mosaic.version = 11 : i64} {
  func.func @_conv3d_bn_kernel(%arg0: i32, %arg1: i32, %arg2: i32, %arg3: memref<1x1x10x10x128xbf16, #tpu.memory_space<vmem>>, %arg4: memref<1x1152x128xbf16, #tpu.memory_space<vmem>>, %arg5: memref<1x128xf32, #tpu.memory_space<vmem>>, %arg6: memref<1x1x64x128xf32, #tpu.memory_space<vmem>>, %arg7: memref<64x128xf32, #tpu.memory_space<vmem>>) attributes {dimension_semantics = [#tpu.dimension_semantics<parallel>, #tpu.dimension_semantics<parallel>, #tpu.dimension_semantics<arbitrary>], iteration_bounds = array<i64: 2, 4, 3>, scalar_prefetch = 0 : i64, scratch_operands = 1 : i64, tpu.core_type = #tpu.core_type<tc>, window_params = [{transform_indices = @transform_0, window_bounds = array<i64: 1, 1, 10, 10, 128>}, {transform_indices = @transform_1, window_bounds = array<i64: 1, 1152, 128>}, {pipeline_mode = #tpu.pipeline_mode<synchronous>, transform_indices = @transform_2, window_bounds = array<i64: 1, 128>}, {transform_indices = @transform_3, window_bounds = array<i64: 1, 1, 64, 128>}]} {
    %c0_i32 = arith.constant 0 : i32
    %0 = arith.cmpi eq, %arg2, %c0_i32 : i32
    %1 = arith.extui %0 : i1 to i32
    %c0_i32_0 = arith.constant 0 : i32
    %2 = arith.cmpi ne, %1, %c0_i32_0 : i32
    scf.if %2 {
      %cst_37 = arith.constant 0.000000e+00 : f32
      %64 = vector.broadcast %cst_37 : f32 to vector<64x128xf32>
      %c0_38 = arith.constant 0 : index
      %c0_39 = arith.constant 0 : index
      %65 = vector.load %arg7[%c0_38, %c0_39] : memref<64x128xf32, #tpu.memory_space<vmem>>, vector<64x128xf32>
      tpu.vector_store %arg7[%c0_38, %c0_39], %64 {strides = array<i32>} : memref<64x128xf32, #tpu.memory_space<vmem>>, vector<64x128xf32>,
    } else {
    }
    %c0 = arith.constant 0 : index
    %c0_1 = arith.constant 0 : index
    %c0_2 = arith.constant 0 : index
    %c0_3 = arith.constant 0 : index
    %c0_4 = arith.constant 0 : index
    %3 = vector.load %arg3[%c0, %c0_1, %c0_2, %c0_3, %c0_4] : memref<1x1x10x10x128xbf16, #tpu.memory_space<vmem>>, vector<1x1x10x10x128xbf16>
    %4 = vector.shape_cast %3 : vector<1x1x10x10x128xbf16> to vector<10x10x128xbf16>
    %5 = vector.extract_strided_slice %4 {offsets = [0, 0, 0], sizes = [8, 8, 128], strides = [1, 1, 1]} : vector<10x10x128xbf16> to vector<8x8x128xbf16>
    %6 = vector.shape_cast %5 : vector<8x8x128xbf16> to vector<64x128xbf16>
    %c0_5 = arith.constant 0 : index
    %c0_6 = arith.constant 0 : index
    %c0_7 = arith.constant 0 : index
    %7 = vector.load %arg4[%c0_5, %c0_6, %c0_7] : memref<1x1152x128xbf16, #tpu.memory_space<vmem>>, vector<1x128x128xbf16>
    %8 = vector.shape_cast %7 : vector<1x128x128xbf16> to vector<128x128xbf16>
    %cst = arith.constant dense<0.000000e+00> : vector<64x128xf32>
    %9 = tpu.matmul %6, %8, %cst {dimension_numbers = #tpu.dot_dimension_numbers<[1], [0], [0], [1], [0, 0, 1, 1], [], []>} : vector<64x128xbf16>, vector<128x128xbf16>, vector<64x128xf32> -> vector<64x128xf32>
    %10 = vector.extract_strided_slice %4 {offsets = [0, 1, 0], sizes = [8, 8, 128], strides = [1, 1, 1]} : vector<10x10x128xbf16> to vector<8x8x128xbf16>
    %11 = vector.shape_cast %10 : vector<8x8x128xbf16> to vector<64x128xbf16>
    %c0_8 = arith.constant 0 : index
    %c128 = arith.constant 128 : index
    %c0_9 = arith.constant 0 : index
    %12 = vector.load %arg4[%c0_8, %c128, %c0_9] : memref<1x1152x128xbf16, #tpu.memory_space<vmem>>, vector<1x128x128xbf16>
    %13 = vector.shape_cast %12 : vector<1x128x128xbf16> to vector<128x128xbf16>
    %cst_10 = arith.constant dense<0.000000e+00> : vector<64x128xf32>
    %14 = tpu.matmul %11, %13, %cst_10 {dimension_numbers = #tpu.dot_dimension_numbers<[1], [0], [0], [1], [0, 0, 1, 1], [], []>} : vector<64x128xbf16>, vector<128x128xbf16>, vector<64x128xf32> -> vector<64x128xf32>
    %15 = arith.addf %9, %14 : vector<64x128xf32>
    %16 = vector.extract_strided_slice %4 {offsets = [0, 2, 0], sizes = [8, 8, 128], strides = [1, 1, 1]} : vector<10x10x128xbf16> to vector<8x8x128xbf16>
    %17 = vector.shape_cast %16 : vector<8x8x128xbf16> to vector<64x128xbf16>
    %c0_11 = arith.constant 0 : index
    %c256 = arith.constant 256 : index
    %c0_12 = arith.constant 0 : index
    %18 = vector.load %arg4[%c0_11, %c256, %c0_12] : memref<1x1152x128xbf16, #tpu.memory_space<vmem>>, vector<1x128x128xbf16>
    %19 = vector.shape_cast %18 : vector<1x128x128xbf16> to vector<128x128xbf16>
    %cst_13 = arith.constant dense<0.000000e+00> : vector<64x128xf32>
    %20 = tpu.matmul %17, %19, %cst_13 {dimension_numbers = #tpu.dot_dimension_numbers<[1], [0], [0], [1], [0, 0, 1, 1], [], []>} : vector<64x128xbf16>, vector<128x128xbf16>, vector<64x128xf32> -> vector<64x128xf32>
    %21 = arith.addf %15, %20 : vector<64x128xf32>
    %22 = vector.extract_strided_slice %4 {offsets = [1, 0, 0], sizes = [8, 8, 128], strides = [1, 1, 1]} : vector<10x10x128xbf16> to vector<8x8x128xbf16>
    %23 = vector.shape_cast %22 : vector<8x8x128xbf16> to vector<64x128xbf16>
    %c0_14 = arith.constant 0 : index
    %c384 = arith.constant 384 : index
    %c0_15 = arith.constant 0 : index
    %24 = vector.load %arg4[%c0_14, %c384, %c0_15] : memref<1x1152x128xbf16, #tpu.memory_space<vmem>>, vector<1x128x128xbf16>
    %25 = vector.shape_cast %24 : vector<1x128x128xbf16> to vector<128x128xbf16>
    %cst_16 = arith.constant dense<0.000000e+00> : vector<64x128xf32>
    %26 = tpu.matmul %23, %25, %cst_16 {dimension_numbers = #tpu.dot_dimension_numbers<[1], [0], [0], [1], [0, 0, 1, 1], [], []>} : vector<64x128xbf16>, vector<128x128xbf16>, vector<64x128xf32> -> vector<64x128xf32>
    %27 = arith.addf %21, %26 : vector<64x128xf32>
    %28 = vector.extract_strided_slice %4 {offsets = [1, 1, 0], sizes = [8, 8, 128], strides = [1, 1, 1]} : vector<10x10x128xbf16> to vector<8x8x128xbf16>
    %29 = vector.shape_cast %28 : vector<8x8x128xbf16> to vector<64x128xbf16>
    %c0_17 = arith.constant 0 : index
    %c512 = arith.constant 512 : index
    %c0_18 = arith.constant 0 : index
    %30 = vector.load %arg4[%c0_17, %c512, %c0_18] : memref<1x1152x128xbf16, #tpu.memory_space<vmem>>, vector<1x128x128xbf16>
    %31 = vector.shape_cast %30 : vector<1x128x128xbf16> to vector<128x128xbf16>
    %cst_19 = arith.constant dense<0.000000e+00> : vector<64x128xf32>
    %32 = tpu.matmul %29, %31, %cst_19 {dimension_numbers = #tpu.dot_dimension_numbers<[1], [0], [0], [1], [0, 0, 1, 1], [], []>} : vector<64x128xbf16>, vector<128x128xbf16>, vector<64x128xf32> -> vector<64x128xf32>
    %33 = arith.addf %27, %32 : vector<64x128xf32>
    %34 = vector.extract_strided_slice %4 {offsets = [1, 2, 0], sizes = [8, 8, 128], strides = [1, 1, 1]} : vector<10x10x128xbf16> to vector<8x8x128xbf16>
    %35 = vector.shape_cast %34 : vector<8x8x128xbf16> to vector<64x128xbf16>
    %c0_20 = arith.constant 0 : index
    %c640 = arith.constant 640 : index
    %c0_21 = arith.constant 0 : index
    %36 = vector.load %arg4[%c0_20, %c640, %c0_21] : memref<1x1152x128xbf16, #tpu.memory_space<vmem>>, vector<1x128x128xbf16>
    %37 = vector.shape_cast %36 : vector<1x128x128xbf16> to vector<128x128xbf16>
    %cst_22 = arith.constant dense<0.000000e+00> : vector<64x128xf32>
    %38 = tpu.matmul %35, %37, %cst_22 {dimension_numbers = #tpu.dot_dimension_numbers<[1], [0], [0], [1], [0, 0, 1, 1], [], []>} : vector<64x128xbf16>, vector<128x128xbf16>, vector<64x128xf32> -> vector<64x128xf32>
    %39 = arith.addf %33, %38 : vector<64x128xf32>
    %40 = vector.extract_strided_slice %4 {offsets = [2, 0, 0], sizes = [8, 8, 128], strides = [1, 1, 1]} : vector<10x10x128xbf16> to vector<8x8x128xbf16>
    %41 = vector.shape_cast %40 : vector<8x8x128xbf16> to vector<64x128xbf16>
    %c0_23 = arith.constant 0 : index
    %c768 = arith.constant 768 : index
    %c0_24 = arith.constant 0 : index
    %42 = vector.load %arg4[%c0_23, %c768, %c0_24] : memref<1x1152x128xbf16, #tpu.memory_space<vmem>>, vector<1x128x128xbf16>
    %43 = vector.shape_cast %42 : vector<1x128x128xbf16> to vector<128x128xbf16>
    %cst_25 = arith.constant dense<0.000000e+00> : vector<64x128xf32>
    %44 = tpu.matmul %41, %43, %cst_25 {dimension_numbers = #tpu.dot_dimension_numbers<[1], [0], [0], [1], [0, 0, 1, 1], [], []>} : vector<64x128xbf16>, vector<128x128xbf16>, vector<64x128xf32> -> vector<64x128xf32>
    %45 = arith.addf %39, %44 : vector<64x128xf32>
    %46 = vector.extract_strided_slice %4 {offsets = [2, 1, 0], sizes = [8, 8, 128], strides = [1, 1, 1]} : vector<10x10x128xbf16> to vector<8x8x128xbf16>
    %47 = vector.shape_cast %46 : vector<8x8x128xbf16> to vector<64x128xbf16>
    %c0_26 = arith.constant 0 : index
    %c896 = arith.constant 896 : index
    %c0_27 = arith.constant 0 : index
    %48 = vector.load %arg4[%c0_26, %c896, %c0_27] : memref<1x1152x128xbf16, #tpu.memory_space<vmem>>, vector<1x128x128xbf16>
    %49 = vector.shape_cast %48 : vector<1x128x128xbf16> to vector<128x128xbf16>
    %cst_28 = arith.constant dense<0.000000e+00> : vector<64x128xf32>
    %50 = tpu.matmul %47, %49, %cst_28 {dimension_numbers = #tpu.dot_dimension_numbers<[1], [0], [0], [1], [0, 0, 1, 1], [], []>} : vector<64x128xbf16>, vector<128x128xbf16>, vector<64x128xf32> -> vector<64x128xf32>
    %51 = arith.addf %45, %50 : vector<64x128xf32>
    %52 = vector.extract_strided_slice %4 {offsets = [2, 2, 0], sizes = [8, 8, 128], strides = [1, 1, 1]} : vector<10x10x128xbf16> to vector<8x8x128xbf16>
    %53 = vector.shape_cast %52 : vector<8x8x128xbf16> to vector<64x128xbf16>
    %c0_29 = arith.constant 0 : index
    %c1024 = arith.constant 1024 : index
    %c0_30 = arith.constant 0 : index
    %54 = vector.load %arg4[%c0_29, %c1024, %c0_30] : memref<1x1152x128xbf16, #tpu.memory_space<vmem>>, vector<1x128x128xbf16>
    %55 = vector.shape_cast %54 : vector<1x128x128xbf16> to vector<128x128xbf16>
    %cst_31 = arith.constant dense<0.000000e+00> : vector<64x128xf32>
    %56 = tpu.matmul %53, %55, %cst_31 {dimension_numbers = #tpu.dot_dimension_numbers<[1], [0], [0], [1], [0, 0, 1, 1], [], []>} : vector<64x128xbf16>, vector<128x128xbf16>, vector<64x128xf32> -> vector<64x128xf32>
    %57 = arith.addf %51, %56 : vector<64x128xf32>
    %c0_32 = arith.constant 0 : index
    %c0_33 = arith.constant 0 : index
    %58 = vector.load %arg7[%c0_32, %c0_33] : memref<64x128xf32, #tpu.memory_space<vmem>>, vector<64x128xf32>
    %59 = arith.addf %58, %57 : vector<64x128xf32>
    %c0_34 = arith.constant 0 : index
    %c0_35 = arith.constant 0 : index
    %60 = vector.load %arg7[%c0_34, %c0_35] : memref<64x128xf32, #tpu.memory_space<vmem>>, vector<64x128xf32>
    tpu.vector_store %arg7[%c0_34, %c0_35], %59 {strides = array<i32>} : memref<64x128xf32, #tpu.memory_space<vmem>>, vector<64x128xf32>,
    %c2_i32 = arith.constant 2 : i32
    %61 = arith.cmpi eq, %arg2, %c2_i32 : i32
    %62 = arith.extui %61 : i1 to i32
    %c0_i32_36 = arith.constant 0 : i32
    %63 = arith.cmpi ne, %62, %c0_i32_36 : i32
    scf.if %63 {
      %c0_37 = arith.constant 0 : index
      %c0_38 = arith.constant 0 : index
      %64 = vector.load %arg7[%c0_37, %c0_38] : memref<64x128xf32, #tpu.memory_space<vmem>>, vector<64x128xf32>
      %c0_39 = arith.constant 0 : index
      %c0_40 = arith.constant 0 : index
      %65 = vector.load %arg5[%c0_39, %c0_40] : memref<1x128xf32, #tpu.memory_space<vmem>>, vector<1x128xf32>
      %66 = vector.broadcast %65 : vector<1x128xf32> to vector<64x128xf32>
      %67 = arith.addf %64, %66 : vector<64x128xf32>
      %c0_41 = arith.constant 0 : index
      %c0_42 = arith.constant 0 : index
      %c0_43 = arith.constant 0 : index
      %c0_44 = arith.constant 0 : index
      %68 = vector.load %arg6[%c0_41, %c0_42, %c0_43, %c0_44] : memref<1x1x64x128xf32, #tpu.memory_space<vmem>>, vector<1x1x64x128xf32>
      %69 = vector.shape_cast %68 : vector<1x1x64x128xf32> to vector<64x128xf32>
      %70 = vector.shape_cast %67 : vector<64x128xf32> to vector<1x1x64x128xf32>
      tpu.vector_store %arg6[%c0_41, %c0_42, %c0_43, %c0_44], %70 {strides = array<i32>} : memref<1x1x64x128xf32, #tpu.memory_space<vmem>>, vector<1x1x64x128xf32>,
    } else {
    }
    return
  }
  func.func @transform_0(%arg0: i32, %arg1: i32, %arg2: i32) -> (i32, i32, i32, i32, i32) {
    %0 = arith.addi %arg1, %arg2 : i32
    %c0_i32 = arith.constant 0 : i32
    %c0_i32_0 = arith.constant 0 : i32
    %c0_i32_1 = arith.constant 0 : i32
    %c0_i32_2 = arith.constant 0 : i32
    return %arg0, %0, %c0_i32, %c0_i32_0, %c0_i32_1 : i32, i32, i32, i32, i32
  }
  func.func @transform_1(%arg0: i32, %arg1: i32, %arg2: i32) -> (i32, i32, i32) {
    %c0_i32 = arith.constant 0 : i32
    %c0_i32_0 = arith.constant 0 : i32
    %c0_i32_1 = arith.constant 0 : i32
    return %arg2, %c0_i32, %c0_i32_0 : i32, i32, i32
  }
  func.func @transform_2(%arg0: i32, %arg1: i32, %arg2: i32) -> (i32, i32) {
    %c0_i32 = arith.constant 0 : i32
    %c0_i32_0 = arith.constant 0 : i32
    %c0_i32_1 = arith.constant 0 : i32
    return %c0_i32, %c0_i32_0 : i32, i32
  }
  func.func @transform_3(%arg0: i32, %arg1: i32, %arg2: i32) -> (i32, i32, i32, i32) {
    %c0_i32 = arith.constant 0 : i32
    %c0_i32_0 = arith.constant 0 : i32
    %c0_i32_1 = arith.constant 0 : i32
    return %arg0, %arg1, %c0_i32, %c0_i32_0 : i32, i32, i32, i32
  }
}

module attributes {stable_mosaic.version = 11 : i64} {
  func.func @_modulate_kernel(%arg0: i32, %arg1: i32, %arg2: memref<1x1x64x128xf32, #tpu.memory_space<vmem>>, %arg3: memref<1x1x64x128xf32, #tpu.memory_space<vmem>>, %arg4: memref<1x1x64x1xf32, #tpu.memory_space<vmem>>, %arg5: memref<1x1x128xf32, #tpu.memory_space<vmem>>, %arg6: memref<128x128xbf16, #tpu.memory_space<vmem>>, %arg7: memref<1x128xf32, #tpu.memory_space<vmem>>, %arg8: memref<1x1x64x128xf32, #tpu.memory_space<vmem>>) attributes {dimension_semantics = [#tpu.dimension_semantics<parallel>, #tpu.dimension_semantics<parallel>], iteration_bounds = array<i64: 2, 4>, scalar_prefetch = 0 : i64, scratch_operands = 0 : i64, tpu.core_type = #tpu.core_type<tc>, window_params = [{transform_indices = @transform_0, window_bounds = array<i64: 1, 1, 64, 128>}, {transform_indices = @transform_1, window_bounds = array<i64: 1, 1, 64, 128>}, {transform_indices = @transform_2, window_bounds = array<i64: 1, 1, 64, 1>}, {transform_indices = @transform_3, window_bounds = array<i64: 1, 1, 128>}, {pipeline_mode = #tpu.pipeline_mode<synchronous>, transform_indices = @transform_4, window_bounds = array<i64: 128, 128>}, {pipeline_mode = #tpu.pipeline_mode<synchronous>, transform_indices = @transform_5, window_bounds = array<i64: 1, 128>}, {transform_indices = @transform_6, window_bounds = array<i64: 1, 1, 64, 128>}]} {
    %c0 = arith.constant 0 : index
    %c0_0 = arith.constant 0 : index
    %c0_1 = arith.constant 0 : index
    %c0_2 = arith.constant 0 : index
    %0 = vector.load %arg2[%c0, %c0_0, %c0_1, %c0_2] : memref<1x1x64x128xf32, #tpu.memory_space<vmem>>, vector<1x1x64x128xf32>
    %1 = vector.shape_cast %0 : vector<1x1x64x128xf32> to vector<64x128xf32>
    %c0_3 = arith.constant 0 : index
    %c0_4 = arith.constant 0 : index
    %c0_5 = arith.constant 0 : index
    %c0_6 = arith.constant 0 : index
    %2 = vector.load %arg3[%c0_3, %c0_4, %c0_5, %c0_6] : memref<1x1x64x128xf32, #tpu.memory_space<vmem>>, vector<1x1x64x128xf32>
    %3 = vector.shape_cast %2 : vector<1x1x64x128xf32> to vector<64x128xf32>
    %c0_7 = arith.constant 0 : index
    %c0_8 = arith.constant 0 : index
    %c0_9 = arith.constant 0 : index
    %c0_10 = arith.constant 0 : index
    %4 = vector.load %arg4[%c0_7, %c0_8, %c0_9, %c0_10] : memref<1x1x64x1xf32, #tpu.memory_space<vmem>>, vector<1x1x64x1xf32>
    %5 = vector.shape_cast %4 : vector<1x1x64x1xf32> to vector<64x1xf32>
    %c0_11 = arith.constant 0 : index
    %c0_12 = arith.constant 0 : index
    %c0_13 = arith.constant 0 : index
    %6 = vector.load %arg5[%c0_11, %c0_12, %c0_13] : memref<1x1x128xf32, #tpu.memory_space<vmem>>, vector<1x1x128xf32>
    %7 = vector.shape_cast %6 : vector<1x1x128xf32> to vector<1x128xf32>
    %8 = vector.broadcast %5 : vector<64x1xf32> to vector<64x128xf32>
    %9 = vector.broadcast %7 : vector<1x128xf32> to vector<64x128xf32>
    %10 = arith.addf %8, %9 : vector<64x128xf32>
    %11 = arith.negf %10 : vector<64x128xf32>
    %12 = math.exp %11 : vector<64x128xf32>
    %cst = arith.constant 1.000000e+00 : f32
    %13 = vector.broadcast %cst : f32 to vector<64x128xf32>
    %14 = arith.addf %13, %12 : vector<64x128xf32>
    %15 = arith.divf %13, %14 : vector<64x128xf32>
    %16 = arith.mulf %1, %15 : vector<64x128xf32>
    %17 = arith.addf %3, %16 : vector<64x128xf32>
    %cst_14 = arith.constant 0.000000e+00 : f32
    %18 = vector.broadcast %cst_14 : f32 to vector<64x128xf32>
    %19 = arith.maximumf %17, %18 : vector<64x128xf32>
    %20 = arith.truncf %19 : vector<64x128xf32> to vector<64x128xbf16>
    %c0_15 = arith.constant 0 : index
    %c0_16 = arith.constant 0 : index
    %21 = vector.load %arg6[%c0_15, %c0_16] : memref<128x128xbf16, #tpu.memory_space<vmem>>, vector<128x128xbf16>
    %cst_17 = arith.constant dense<0.000000e+00> : vector<64x128xf32>
    %22 = tpu.matmul %20, %21, %cst_17 {dimension_numbers = #tpu.dot_dimension_numbers<[1], [0], [0], [1], [0, 0, 1, 1], [], []>} : vector<64x128xbf16>, vector<128x128xbf16>, vector<64x128xf32> -> vector<64x128xf32>
    %c0_18 = arith.constant 0 : index
    %c0_19 = arith.constant 0 : index
    %23 = vector.load %arg7[%c0_18, %c0_19] : memref<1x128xf32, #tpu.memory_space<vmem>>, vector<1x128xf32>
    %24 = vector.broadcast %23 : vector<1x128xf32> to vector<64x128xf32>
    %25 = arith.addf %22, %24 : vector<64x128xf32>
    %c0_20 = arith.constant 0 : index
    %c0_21 = arith.constant 0 : index
    %c0_22 = arith.constant 0 : index
    %c0_23 = arith.constant 0 : index
    %26 = vector.load %arg8[%c0_20, %c0_21, %c0_22, %c0_23] : memref<1x1x64x128xf32, #tpu.memory_space<vmem>>, vector<1x1x64x128xf32>
    %27 = vector.shape_cast %26 : vector<1x1x64x128xf32> to vector<64x128xf32>
    %28 = vector.shape_cast %25 : vector<64x128xf32> to vector<1x1x64x128xf32>
    tpu.vector_store %arg8[%c0_20, %c0_21, %c0_22, %c0_23], %28 {strides = array<i32>} : memref<1x1x64x128xf32, #tpu.memory_space<vmem>>, vector<1x1x64x128xf32>,
    return
  }
  func.func @transform_0(%arg0: i32, %arg1: i32) -> (i32, i32, i32, i32) {
    %c0_i32 = arith.constant 0 : i32
    %c0_i32_0 = arith.constant 0 : i32
    %c0_i32_1 = arith.constant 0 : i32
    return %arg0, %arg1, %c0_i32, %c0_i32_0 : i32, i32, i32, i32
  }
  func.func @transform_1(%arg0: i32, %arg1: i32) -> (i32, i32, i32, i32) {
    %c0_i32 = arith.constant 0 : i32
    %c0_i32_0 = arith.constant 0 : i32
    %c0_i32_1 = arith.constant 0 : i32
    return %arg0, %arg1, %c0_i32, %c0_i32_0 : i32, i32, i32, i32
  }
  func.func @transform_2(%arg0: i32, %arg1: i32) -> (i32, i32, i32, i32) {
    %c0_i32 = arith.constant 0 : i32
    %c0_i32_0 = arith.constant 0 : i32
    %c0_i32_1 = arith.constant 0 : i32
    return %arg0, %arg1, %c0_i32, %c0_i32_0 : i32, i32, i32, i32
  }
  func.func @transform_3(%arg0: i32, %arg1: i32) -> (i32, i32, i32) {
    %c0_i32 = arith.constant 0 : i32
    %c0_i32_0 = arith.constant 0 : i32
    %c0_i32_1 = arith.constant 0 : i32
    return %arg0, %c0_i32, %c0_i32_0 : i32, i32, i32
  }
  func.func @transform_4(%arg0: i32, %arg1: i32) -> (i32, i32) {
    %c0_i32 = arith.constant 0 : i32
    %c0_i32_0 = arith.constant 0 : i32
    %c0_i32_1 = arith.constant 0 : i32
    return %c0_i32, %c0_i32_0 : i32, i32
  }
  func.func @transform_5(%arg0: i32, %arg1: i32) -> (i32, i32) {
    %c0_i32 = arith.constant 0 : i32
    %c0_i32_0 = arith.constant 0 : i32
    %c0_i32_1 = arith.constant 0 : i32
    return %c0_i32, %c0_i32_0 : i32, i32
  }
  func.func @transform_6(%arg0: i32, %arg1: i32) -> (i32, i32, i32, i32) {
    %c0_i32 = arith.constant 0 : i32
    %c0_i32_0 = arith.constant 0 : i32
    %c0_i32_1 = arith.constant 0 : i32
    return %arg0, %arg1, %c0_i32, %c0_i32_0 : i32, i32, i32, i32
  }
}

</mosaic_0001>

<llo_original>
// kernel: meta_block_forward.4
$region0: #{meta_block_forward.4}
  #allocation0 [shape = 'u32[]', space=smem, size = 0x4, offset = 0x4, fixed_abs, tag = 'smem constant byte address 0x4 - core index']
  #allocation1 [shape = 'u32[144,128]{1,0:T(1,128)}', space=vmem, size = 0x12000, scoped, tag = 'internal scratch']
  #allocation2 [shape = 'f32[64,128]{1,0:T(8,128)}', space=vmem, size = 0x8000, scoped, tag = 'scratch operand']
  %s0 = inlined_call_operand.vmem [shape: bf16[2,6,10,10,128], index: 0, kind: input, shape index: {}]
  %s1 = inlined_call_operand.vmem [shape: bf16[3,1152,128], index: 1, kind: input, shape index: {}]
  %s2 = inlined_call_operand.vmem [shape: f32[1,128], index: 2, kind: input, shape index: {}]
  %s3 = inlined_call_operand.vmem [shape: f32[2,4,64,128], index: 3, kind: output, shape index: {}]
  %s4 = sld [smem:[#allocation0]]
  $region53: #{meta_block_forward.4} parent=0
    _
  %s6 = ssub.s32 1, %s4
  %s7 = scalar_select 0, %s6, %s4
  loop: start=0, step=1, limit=26
  $region2: #{meta_block_forward.4} parent=0 // loop_pre_header
    _
  $region3: #{meta_block_forward.4} parent=0 // loop_header
    %s9 = sphi 0, %s13
    %p10 = scmp.ge.s32.totalorder %s9, 26
    %s16 = sphi 0, %s35
    %s17 = sphi 0, %s31
    %s18 = sphi 0, %s27
    %s19 = sphi 0, %s16
    %s20 = sphi 0, %s17
    %s21 = sphi 0, %s18
    %s22 = sphi 0, %s19
    %s23 = sphi 0, %s20
    %s24 = sphi 0, %s21
    %s42 = sphi 0, %s44
    %s45 = sphi 0, %s42
    %s46 = sphi 0, %s45
    %s62 = sphi 0, %s46
    %s68 = sphi 0, %s70
    %s71 = sphi 0, %s68
    %s72 = sphi 0, %s71
    %s88 = sphi 0, %s72
    %s92 = sphi 0, %s92
    %s94 = sphi 0, %s92
    %s95 = sphi 0, %s94
    %s109 = sphi 0, %s95
    %s117 = sphi 0, %s119
    %s120 = sphi 0, %s117
    %s121 = sphi 0, %s120
    %s137 = sphi 0, %s121
  $region4: #{meta_block_forward.4} parent=0 // loop_header_branch
    %12 = sbr.rel (%p10) target = $region8
  $region5: #{meta_block_forward.4} parent=0 // loop_body
    %s14 = ssub.s32 %s9, 1
    %s15 = ssub.s32 %s9, 2
    %s25 = sadd.s32 1, %s18
    %p26 = scmp.ge.s32.totalorder %s25, 3
    %s27 = scalar_select %p26, 0, %s25
    %s28 = sadd.s32 1, %s17
    %s29 = scalar_select %p26, %s28, %s17
    %p30 = scmp.ge.s32.totalorder %s29, 4
    %s31 = scalar_select %p30, 0, %s29
    %s32 = sadd.s32 1, %s16
    %s33 = scalar_select %p30, %s32, %s16
    %p34 = scmp.ge.s32.totalorder %s33, 2
    %s35 = scalar_select %p34, 0, %s33
    %s36 = sadd.s32 %s17, %s18
    %s37 = sadd.s32 %s31, %s27
    %s38 = ssub.s32 %s16, %s35
    %s39 = ssub.s32 %s36, %s37
    %s40 = sor.u32 %s38, %s39
    %p41 = scmp.eq.s32.totalorder %s40, 0
    %s43 = sadd.s32 %s42, 1
    %s44 = scalar_select %p41, %s42, %s43
    %p47 = pneg %p41
    %p48 = scmp.eq.s32.totalorder %s9, 23
    %p49 = por %p47, %p48
    %p50 = scmp.ne.s32.totalorder %s42, %s45
    %p51 = scmp.eq.s32.totalorder %s9, 0
    %p52 = por %p50, %p51
    %p53 = scmp.ne.s32.totalorder %s42, %s45
    %p54 = scmp.eq.s32.totalorder %s14, 23
    %p55 = por %p53, %p54
    %p56 = scmp.ne.s32.totalorder %s45, %s46
    %p57 = scmp.eq.s32.totalorder %s14, 0
    %p58 = por %p56, %p57
    %p59 = scmp.ne.s32.totalorder %s45, %s46
    %p60 = scmp.eq.s32.totalorder %s15, 23
    %p61 = por %p59, %p60
    %p63 = scmp.ne.s32.totalorder %s46, %s62
    %p64 = scmp.eq.s32.totalorder %s15, 0
    %p65 = por %p63, %p64
    %s66 = ssub.s32 %s18, %s27
    %p67 = scmp.eq.s32.totalorder %s66, 0
    %s69 = sadd.s32 %s68, 1
    %s70 = scalar_select %p67, %s68, %s69
    %p73 = pneg %p67
    %p74 = scmp.eq.s32.totalorder %s9, 23
    %p75 = por %p73, %p74
    %p76 = scmp.ne.s32.totalorder %s68, %s71
    %p77 = scmp.eq.s32.totalorder %s9, 0
    %p78 = por %p76, %p77
    %p79 = scmp.ne.s32.totalorder %s68, %s71
    %p80 = scmp.eq.s32.totalorder %s14, 23
    %p81 = por %p79, %p80
    %p82 = scmp.ne.s32.totalorder %s71, %s72
    %p83 = scmp.eq.s32.totalorder %s14, 0
    %p84 = por %p82, %p83
    %p85 = scmp.ne.s32.totalorder %s71, %s72
    %p86 = scmp.eq.s32.totalorder %s15, 23
    %p87 = por %p85, %p86
    %p89 = scmp.ne.s32.totalorder %s72, %s88
    %p90 = scmp.eq.s32.totalorder %s15, 0
    %p91 = por %p89, %p90
    %s93 = sadd.s32 %s92, 1
    %p96 = scmp.eq.s32.totalorder %s9, 23
    %p97 = scmp.ne.s32.totalorder %s92, %s94
    %p98 = scmp.eq.s32.totalorder %s9, 0
    %p99 = por %p97, %p98
    %p100 = scmp.ne.s32.totalorder %s92, %s94
    %p101 = scmp.eq.s32.totalorder %s14, 23
    %p102 = por %p100, %p101
    %p103 = scmp.ne.s32.totalorder %s94, %s95
    %p104 = scmp.eq.s32.totalorder %s14, 0
    %p105 = por %p103, %p104
    %p106 = scmp.ne.s32.totalorder %s94, %s95
    %p107 = scmp.eq.s32.totalorder %s15, 23
    %p108 = por %p106, %p107
    %p110 = scmp.ne.s32.totalorder %s95, %s109
    %p111 = scmp.eq.s32.totalorder %s15, 0
    %p112 = por %p110, %p111
    %s113 = ssub.s32 %s16, %s35
    %s114 = ssub.s32 %s17, %s31
    %s115 = sor.u32 %s113, %s114
    %p116 = scmp.eq.s32.totalorder %s115, 0
    %s118 = sadd.s32 %s117, 1
    %s119 = scalar_select %p116, %s117, %s118
    %p122 = pneg %p116
    %p123 = scmp.eq.s32.totalorder %s9, 23
    %p124 = por %p122, %p123
    %p125 = scmp.ne.s32.totalorder %s117, %s120
    %p126 = scmp.eq.s32.totalorder %s9, 0
    %p127 = por %p125, %p126
    %p128 = scmp.ne.s32.totalorder %s117, %s120
    %p129 = scmp.eq.s32.totalorder %s14, 23
    %p130 = por %p128, %p129
    %p131 = scmp.ne.s32.totalorder %s120, %s121
    %p132 = scmp.eq.s32.totalorder %s14, 0
    %p133 = por %p131, %p132
    %p134 = scmp.ne.s32.totalorder %s120, %s121
    %p135 = scmp.eq.s32.totalorder %s15, 23
    %p136 = por %p134, %p135
    %p138 = scmp.ne.s32.totalorder %s121, %s137
    %p139 = scmp.eq.s32.totalorder %s15, 0
    %p140 = por %p138, %p139
    %p141 = scmp.le.s32.totalorder 1, %s9
    %p142 = scmp.lt.s32.totalorder %s9, 25
    %p143 = pnand %p141, %p142
    %p144 = pneg %p143
    // Predicated region
    $region9: #{meta_block_forward.4} parent=5 // pred_check
      _
    $region10: #{meta_block_forward.4} parent=5 // pred_check_branch
      %146 = sbr.rel (%p143) target = $region12
    $region11: #{meta_block_forward.4} parent=5 // pred_region
      %s147 = ssub.s32 %s9, 1
      // Predicated region
      $region13: #{meta_block_forward.4} parent=11 // pred_check
        %p148 = pneg %p105
      $region14: #{meta_block_forward.4} parent=11 // pred_check_branch
        %150 = sbr.rel (%p148) target = $region16
      $region15: #{meta_block_forward.4} parent=11 // pred_region
        _
      $region16: #{meta_block_forward.4} parent=11 // pred_fallthru
        _
    $region12: #{meta_block_forward.4} parent=5 // pred_fallthru
      _
    %p151 = scmp.lt.s32.totalorder %s9, 24
    // Predicated region
    $region17: #{meta_block_forward.4} parent=5 // pred_check
      %p152 = pneg %p151
    $region18: #{meta_block_forward.4} parent=5 // pred_check_branch
      %154 = sbr.rel (%p152) target = $region20
    $region19: #{meta_block_forward.4} parent=5 // pred_region
      // Predicated region
      $region21: #{meta_block_forward.4} parent=19 // pred_check
        %p155 = pneg %p52
      $region22: #{meta_block_forward.4} parent=19 // pred_check_branch
        %157 = sbr.rel (%p155) target = $region24
      $region23: #{meta_block_forward.4} parent=19 // pred_region
        %s158 = sadd.s32 %s17, %s18
        %p159 = scmp.lt.s32.totalorder %s16, 1
        %s160 = scalar_select %p159, %s16, 1
        %p161 = scmp.lt.s32.totalorder %s158, 5
        %s162 = scalar_select %p161, %s158, 5
        %s163 = smul.addr %s162, 20
        %s164 = smul.addr %s160, 120
        %s165 = sadd.s32 %s163, %s164
        %s166 = smul.addr %s165, 4
        %s167 = scalar_lea.vmem %s0, %s166
        %s168 = sadd.s32 %s17, %s18
      $region24: #{meta_block_forward.4} parent=19 // pred_fallthru
        _
      // Predicated region
      $region25: #{meta_block_forward.4} parent=19 // pred_check
        %p169 = pneg %p78
      $region26: #{meta_block_forward.4} parent=19 // pred_check_branch
        %171 = sbr.rel (%p169) target = $region28
      $region27: #{meta_block_forward.4} parent=19 // pred_region
        %p172 = scmp.lt.s32.totalorder %s18, 2
        %s173 = scalar_select %p172, %s18, 2
        %s174 = smul.addr %s173, 144
        %s175 = smul.addr %s174, 4
        %s176 = scalar_lea.vmem %s1, %s175
      $region28: #{meta_block_forward.4} parent=19 // pred_fallthru
        _
    $region20: #{meta_block_forward.4} parent=5 // pred_fallthru
      _
    %p177 = scmp.le.s32.totalorder 1, %s9
    %p178 = scmp.lt.s32.totalorder %s9, 25
    %p179 = pnand %p177, %p178
    %p180 = pneg %p179
    // Predicated region
    $region29: #{meta_block_forward.4} parent=5 // pred_check
      _
    $region30: #{meta_block_forward.4} parent=5 // pred_check_branch
      %182 = sbr.rel (%p179) target = $region32
    $region31: #{meta_block_forward.4} parent=5 // pred_region
      %s183 = ssub.s32 %s9, 1
      %s184 = sadd.s32 %s20, %s21
      %p185 = scmp.lt.s32.totalorder %s19, 1
      %s186 = scalar_select %p185, %s19, 1
      %p187 = scmp.lt.s32.totalorder %s184, 5
      %s188 = scalar_select %p187, %s184, 5
      %s189 = smul.addr %s188, 20
      %s190 = smul.addr %s186, 120
      %s191 = sadd.s32 %s189, %s190
      %s192 = smul.addr %s191, 4
      %s193 = scalar_lea.vmem %s0, %s192
      %p194 = pneg %p58
      %p195 = pneg %p55
      %p196 = scmp.lt.s32.totalorder %s21, 2
      %s197 = scalar_select %p196, %s21, 2
      %s198 = smul.addr %s197, 144
      %s199 = smul.addr %s198, 4
      %s200 = scalar_lea.vmem %s1, %s199
      %p201 = pneg %p84
      %p202 = pneg %p81
      %p203 = pneg %p105
      %p204 = pneg %p102
      %p205 = pneg %p133
      %p206 = pneg %p130
      %p207 = scmp.lt.s32.totalorder %s19, 1
      %s208 = scalar_select %p207, %s19, 1
      %p209 = scmp.lt.s32.totalorder %s20, 3
      %s210 = scalar_select %p209, %s20, 3
      %s211 = smul.addr %s210, 8
      %s212 = smul.addr %s208, 32
      %s213 = sadd.s32 %s211, %s212
      %s214 = smul.addr %s213, 8
      %s215 = scalar_lea.vmem %s3, %s214
      %s216 = sadd.s32 %s20, %s21
      %p217 = scmp.lt.s32.totalorder %s19, 1
      %s218 = scalar_select %p217, %s19, 1
      %p219 = scmp.lt.s32.totalorder %s216, 5
      %s220 = scalar_select %p219, %s216, 5
      %s221 = smul.addr %s220, 20
      %s222 = smul.addr %s218, 120
      %s223 = sadd.s32 %s221, %s222
      %s224 = smul.addr %s223, 4
      %s225 = scalar_lea.vmem %s0, %s224
      %s226 = sadd.s32 %s20, %s21
      %p227 = scmp.lt.s32.totalorder %s21, 2
      %s228 = scalar_select %p227, %s21, 2
      %s229 = smul.addr %s228, 144
      %s230 = smul.addr %s229, 4
      %s231 = scalar_lea.vmem %s1, %s230
      %p232 = scmp.lt.s32.totalorder %s19, 1
      %s233 = scalar_select %p232, %s19, 1
      %p234 = scmp.lt.s32.totalorder %s20, 3
      %s235 = scalar_select %p234, %s20, 3
      %s236 = smul.addr %s235, 8
      %s237 = smul.addr %s233, 32
      %s238 = sadd.s32 %s236, %s237
      %s239 = smul.addr %s238, 8
      %s240 = scalar_lea.vmem %s3, %s239
      %p242 = scmp.eq.s32.totalorder %s21, 0
      // Predicated region
      $region33: #{meta_block_forward.4} parent=31 // pred_check
        %p243 = pneg %p242
      $region34: #{meta_block_forward.4} parent=31 // pred_check_branch
        %245 = sbr.rel (%p243) target = $region36
      $region35: #{meta_block_forward.4} parent=31 // pred_region
        %246 = vst [vmem:[#allocation2] sm:$0xff] 0.0
        %247 = vst [vmem:[#allocation2 + $0x8] sm:$0xff] 0.0
        %248 = vst [vmem:[#allocation2 + $0x10] sm:$0xff] 0.0
        %249 = vst [vmem:[#allocation2 + $0x18] sm:$0xff] 0.0
        %250 = vst [vmem:[#allocation2 + $0x20] sm:$0xff] 0.0
        %251 = vst [vmem:[#allocation2 + $0x28] sm:$0xff] 0.0
        %252 = vst [vmem:[#allocation2 + $0x30] sm:$0xff] 0.0
        %253 = vst [vmem:[#allocation2 + $0x38] sm:$0xff] 0.0
      $region36: #{meta_block_forward.4} parent=31 // pred_fallthru
        _
      %v254 = vld [vmem:[%s225] sm:$0xf]
      %v255 = vld [vmem:[%s225 + $0x4] sm:$0x1]
      %v256 = vld [vmem:[%s225 + $0x8] sm:$0xf]
      %v257 = vld [vmem:[%s225 + $0xc] sm:$0x1]
      %v258 = vld [vmem:[%s225 + $0x10] sm:$0xf]
      %v259 = vld [vmem:[%s225 + $0x14] sm:$0x1]
      %v260 = vld [vmem:[%s225 + $0x18] sm:$0xf]
      %v261 = vld [vmem:[%s225 + $0x1c] sm:$0x1]
      %v262 = vld [vmem:[%s225 + $0x20] sm:$0xf]
      %v263 = vld [vmem:[%s225 + $0x24] sm:$0x1]
      %v264 = vld [vmem:[%s225 + $0x28] sm:$0xf]
      %v265 = vld [vmem:[%s225 + $0x2c] sm:$0x1]
      %v266 = vld [vmem:[%s225 + $0x30] sm:$0xf]
      %v267 = vld [vmem:[%s225 + $0x34] sm:$0x1]
      %v268 = vld [vmem:[%s225 + $0x38] sm:$0xf]
      %v269 = vld [vmem:[%s225 + $0x3c] sm:$0x1]
      %v270 = vld [vmem:[%s225 + $0x40] sm:$0xf]
      %v271 = vld [vmem:[%s225 + $0x44] sm:$0x1]
      %v272 = vld [vmem:[%s225 + $0x48] sm:$0xf]
      %v273 = vld [vmem:[%s225 + $0x4c] sm:$0x1]
      %v274 = vld [vmem:[%s231] sm:$0xf]
      %v275 = vld [vmem:[%s231 + $0x4] sm:$0xf]
      %v276 = vld [vmem:[%s231 + $0x8] sm:$0xf]
      %v277 = vld [vmem:[%s231 + $0xc] sm:$0xf]
      %v278 = vld [vmem:[%s231 + $0x10] sm:$0xf]
      %v279 = vld [vmem:[%s231 + $0x14] sm:$0xf]
      %v280 = vld [vmem:[%s231 + $0x18] sm:$0xf]
      %v281 = vld [vmem:[%s231 + $0x1c] sm:$0xf]
      %v282 = vld [vmem:[%s231 + $0x20] sm:$0xf]
      %v283 = vld [vmem:[%s231 + $0x24] sm:$0xf]
      %v284 = vld [vmem:[%s231 + $0x28] sm:$0xf]
      %v285 = vld [vmem:[%s231 + $0x2c] sm:$0xf]
      %v286 = vld [vmem:[%s231 + $0x30] sm:$0xf]
      %v287 = vld [vmem:[%s231 + $0x34] sm:$0xf]
      %v288 = vld [vmem:[%s231 + $0x38] sm:$0xf]
      %v289 = vld [vmem:[%s231 + $0x3c] sm:$0xf]
      %vm290 = vsmask.f32 3328
      %vm291 = vsmask.f32 7440
      %vm292 = vmor %vm290, %vm291
      %v294 = vshrl.u32 %v254, 16
      %v296 = vrot.slane %v294, 4
      %v297 = vshll.u32 %v254, 16
      %v299 = vrot.slane %v297, 5
      %v300 = vor.u32 %v296, %v299
      %v301 = vrot.slane %v300, 4
      %v303 = vshll.u32 %v255, 16
      %v305 = vrot.slane %v303, 5
      %v306 = vsel %vm292, %v301, %v305
      %v308 = vshrl.u32 %v256, 16
      %v310 = vrot.slane %v308, 4
      %v311 = vshll.u32 %v256, 16
      %v313 = vrot.slane %v311, 5
      %v314 = vor.u32 %v310, %v313
      %v315 = vrot.slane %v314, 4
      %v317 = vshll.u32 %v257, 16
      %v319 = vrot.slane %v317, 5
      %v320 = vsel %vm292, %v315, %v319
      %v322 = vshrl.u32 %v258, 16
      %v324 = vrot.slane %v322, 4
      %v325 = vshll.u32 %v258, 16
      %v327 = vrot.slane %v325, 5
      %v328 = vor.u32 %v324, %v327
      %v329 = vrot.slane %v328, 4
      %v331 = vshll.u32 %v259, 16
      %v333 = vrot.slane %v331, 5
      %v334 = vsel %vm292, %v329, %v333
      %v336 = vshrl.u32 %v260, 16
      %v338 = vrot.slane %v336, 4
      %v339 = vshll.u32 %v260, 16
      %v341 = vrot.slane %v339, 5
      %v342 = vor.u32 %v338, %v341
      %v343 = vrot.slane %v342, 4
      %v345 = vshll.u32 %v261, 16
      %v347 = vrot.slane %v345, 5
      %v348 = vsel %vm292, %v343, %v347
      %v350 = vshrl.u32 %v262, 16
      %v352 = vrot.slane %v350, 4
      %v353 = vshll.u32 %v262, 16
      %v355 = vrot.slane %v353, 5
      %v356 = vor.u32 %v352, %v355
      %v357 = vrot.slane %v356, 4
      %v359 = vshll.u32 %v263, 16
      %v361 = vrot.slane %v359, 5
      %v362 = vsel %vm292, %v357, %v361
      %v364 = vshrl.u32 %v264, 16
      %v366 = vrot.slane %v364, 4
      %v367 = vshll.u32 %v264, 16
      %v369 = vrot.slane %v367, 5
      %v370 = vor.u32 %v366, %v369
      %v371 = vrot.slane %v370, 4
      %v373 = vshll.u32 %v265, 16
      %v375 = vrot.slane %v373, 5
      %v376 = vsel %vm292, %v371, %v375
      %v378 = vshrl.u32 %v266, 16
      %v380 = vrot.slane %v378, 4
      %v381 = vshll.u32 %v266, 16
      %v383 = vrot.slane %v381, 5
      %v384 = vor.u32 %v380, %v383
      %v385 = vrot.slane %v384, 4
      %v387 = vshll.u32 %v267, 16
      %v389 = vrot.slane %v387, 5
      %v390 = vsel %vm292, %v385, %v389
      %v392 = vshrl.u32 %v268, 16
      %v394 = vrot.slane %v392, 4
      %v395 = vshll.u32 %v268, 16
      %v397 = vrot.slane %v395, 5
      %v398 = vor.u32 %v394, %v397
      %v399 = vrot.slane %v398, 4
      %v401 = vshll.u32 %v269, 16
      %v403 = vrot.slane %v401, 5
      %v404 = vsel %vm292, %v399, %v403
      %v405 = vld [vmem:[%s231 + $0x40] sm:$0xf]
      %v406 = vld [vmem:[%s231 + $0x44] sm:$0xf]
      %v407 = vld [vmem:[%s231 + $0x48] sm:$0xf]
      %v408 = vld [vmem:[%s231 + $0x4c] sm:$0xf]
      %v409 = vld [vmem:[%s231 + $0x50] sm:$0xf]
      %v410 = vld [vmem:[%s231 + $0x54] sm:$0xf]
      %v411 = vld [vmem:[%s231 + $0x58] sm:$0xf]
      %v412 = vld [vmem:[%s231 + $0x5c] sm:$0xf]
      %v413 = vld [vmem:[%s231 + $0x60] sm:$0xf]
      %v414 = vld [vmem:[%s231 + $0x64] sm:$0xf]
      %v415 = vld [vmem:[%s231 + $0x68] sm:$0xf]
      %v416 = vld [vmem:[%s231 + $0x6c] sm:$0xf]
      %v417 = vld [vmem:[%s231 + $0x70] sm:$0xf]
      %v418 = vld [vmem:[%s231 + $0x74] sm:$0xf]
      %v419 = vld [vmem:[%s231 + $0x78] sm:$0xf]
      %v420 = vld [vmem:[%s231 + $0x7c] sm:$0xf]
      %v421 = vunpack.c.l.b16 %v306
      %v422 = vunpack.c.l.b16 %v320
      %v423 = vunpack.c.l.b16 %v334
      %v424 = vunpack.c.l.b16 %v348
      %v425 = vunpack.c.l.b16 %v362
      %v426 = vunpack.c.l.b16 %v376
      %v427 = vunpack.c.l.b16 %v390
      %v428 = vunpack.c.l.b16 %v404
      %v429 = vpack.c.b16 %v422, %v421
      %v430 = vpack.c.b16 %v424, %v423
      %v431 = vpack.c.b16 %v426, %v425
      %v432 = vpack.c.b16 %v428, %v427
      %v453 = vunpack.c.l.b16 %v405
      %v454 = vunpack.c.l.b16 %v406
      %v455 = vunpack.c.l.b16 %v407
      %v456 = vunpack.c.l.b16 %v408
      %v457 = vunpack.c.l.b16 %v409
      %v458 = vunpack.c.l.b16 %v410
      %v459 = vunpack.c.l.b16 %v411
      %v460 = vunpack.c.l.b16 %v412
      %v461 = vunpack.c.l.b16 %v413
      %v462 = vunpack.c.l.b16 %v414
      %v463 = vunpack.c.l.b16 %v415
      %v464 = vunpack.c.l.b16 %v416
      %v465 = vunpack.c.l.b16 %v417
      %v466 = vunpack.c.l.b16 %v418
      %v467 = vunpack.c.l.b16 %v419
      %v468 = vunpack.c.l.b16 %v420
      %v469 = vpack.c.b16 %v454, %v453
      %v470 = vpack.c.b16 %v456, %v455
      %v471 = vpack.c.b16 %v458, %v457
      %v472 = vpack.c.b16 %v460, %v459
      %v473 = vpack.c.b16 %v462, %v461
      %v474 = vpack.c.b16 %v464, %v463
      %v475 = vpack.c.b16 %v466, %v465
      %v476 = vpack.c.b16 %v468, %v467
      %485 = vmatprep.subr.bf16.mxu0 0
      %486 = vmatpush1.bf16.msra.mxu0 %v469
      %487 = vmatprep.subr.bf16.mxu0 0
      %488 = vmatpush1.bf16.msra.mxu0 %v470
      %489 = vmatprep.subr.bf16.mxu0 0
      %490 = vmatpush1.bf16.msra.mxu0 %v471
      %491 = vmatprep.subr.bf16.mxu0 0
      %492 = vmatpush1.bf16.msra.mxu0 %v472
      %493 = vmatprep.subr.bf16.mxu0 0
      %494 = vmatpush1.bf16.msra.mxu0 %v473
      %495 = vmatprep.subr.bf16.mxu0 0
      %496 = vmatpush1.bf16.msra.mxu0 %v474
      %497 = vmatprep.subr.bf16.mxu0 0
      %498 = vmatpush1.bf16.msra.mxu0 %v475
      %499 = vmatprep.subr.bf16.mxu0 0
      %500 = vmatpush1.bf16.msra.mxu0 %v476
      %501 = vmatprep.subr.bf16.mxu0 0
      %502 = vmatpush1.bf16.msra.mxu0 0
      %503 = vmatprep.subr.bf16.mxu0 0
      %504 = vmatpush1.bf16.msra.mxu0 0
      %505 = vmatprep.subr.bf16.mxu0 0
      %506 = vmatpush1.bf16.msra.mxu0 0
      %507 = vmatprep.subr.bf16.mxu0 0
      %508 = vmatpush1.bf16.msra.mxu0 0
      %509 = vmatprep.subr.bf16.mxu0 0
      %510 = vmatpush1.bf16.msra.mxu0 0
      %511 = vmatprep.subr.bf16.mxu0 0
      %512 = vmatpush1.bf16.msra.mxu0 0
      %513 = vmatprep.subr.bf16.mxu0 0
      %514 = vmatpush1.bf16.msra.mxu0 0
      %515 = vmatprep.subr.bf16.mxu0 0
      %516 = vmatpush1.bf16.msra.mxu0 0
      %517 = vmatprep.mubr.bf16.mxu0 0
      %518 = vmatmul.mubr.bf16.gmra.mrb[0].mxu0 %v429
      %v519 = vpop.f32.mrb[0].mxu0
      %v520 = vadd.f32 0.0, %v519
      %v521 = vpop.f32.mrb[0].mxu0
      %v522 = vpop.f32.mrb[0].mxu0
      %v523 = vadd.f32 0.0, %v522
      %v524 = vpop.f32.mrb[0].mxu0
      %525 = vmatprep.mubr.bf16.mxu0 0
      %526 = vmatmul.mubr.bf16.gmra.mrb[0].mxu0 %v430
      %v527 = vpop.f32.mrb[0].mxu0
      %v528 = vadd.f32 0.0, %v527
      %v529 = vpop.f32.mrb[0].mxu0
      %v530 = vpop.f32.mrb[0].mxu0
      %v531 = vadd.f32 0.0, %v530
      %v532 = vpop.f32.mrb[0].mxu0
      %533 = vmatprep.mubr.bf16.mxu0 0
      %534 = vmatmul.mubr.bf16.gmra.mrb[0].mxu0 %v431
      %v535 = vpop.f32.mrb[0].mxu0
      %v536 = vadd.f32 0.0, %v535
      %v537 = vpop.f32.mrb[0].mxu0
      %v538 = vpop.f32.mrb[0].mxu0
      %v539 = vadd.f32 0.0, %v538
      %v540 = vpop.f32.mrb[0].mxu0
      %541 = vmatprep.mubr.bf16.mxu0 0
      %542 = vmatmul.mubr.bf16.gmra.mrb[0].mxu0 %v432
      %v543 = vpop.f32.mrb[0].mxu0
      %v544 = vadd.f32 0.0, %v543
      %v545 = vpop.f32.mrb[0].mxu0
      %v546 = vpop.f32.mrb[0].mxu0
      %v547 = vadd.f32 0.0, %v546
      %v548 = vpop.f32.mrb[0].mxu0
      %549 = vdwg.mxu0
      %v558 = vunpack.c.l.b16 %v254
      %v559 = vunpack.c.l.b16 %v256
      %v560 = vunpack.c.l.b16 %v258
      %v561 = vunpack.c.l.b16 %v260
      %v562 = vunpack.c.l.b16 %v262
      %v563 = vunpack.c.l.b16 %v264
      %v564 = vunpack.c.l.b16 %v266
      %v565 = vunpack.c.l.b16 %v268
      %v566 = vpack.c.b16 %v559, %v558
      %v567 = vpack.c.b16 %v561, %v560
      %v568 = vpack.c.b16 %v563, %v562
      %v569 = vpack.c.b16 %v565, %v564
      %v590 = vunpack.c.l.b16 %v274
      %v591 = vunpack.c.l.b16 %v275
      %v592 = vunpack.c.l.b16 %v276
      %v593 = vunpack.c.l.b16 %v277
      %v594 = vunpack.c.l.b16 %v278
      %v595 = vunpack.c.l.b16 %v279
      %v596 = vunpack.c.l.b16 %v280
      %v597 = vunpack.c.l.b16 %v281
      %v598 = vunpack.c.l.b16 %v282
      %v599 = vunpack.c.l.b16 %v283
      %v600 = vunpack.c.l.b16 %v284
      %v601 = vunpack.c.l.b16 %v285
      %v602 = vunpack.c.l.b16 %v286
      %v603 = vunpack.c.l.b16 %v287
      %v604 = vunpack.c.l.b16 %v288
      %v605 = vunpack.c.l.b16 %v289
      %v606 = vpack.c.b16 %v591, %v590
      %v607 = vpack.c.b16 %v593, %v592
      %v608 = vpack.c.b16 %v595, %v594
      %v609 = vpack.c.b16 %v597, %v596
      %v610 = vpack.c.b16 %v599, %v598
      %v611 = vpack.c.b16 %v601, %v600
      %v612 = vpack.c.b16 %v603, %v602
      %v613 = vpack.c.b16 %v605, %v604
      %622 = vmatprep.subr.bf16.mxu0 0
      %623 = vmatpush1.bf16.msra.mxu0 %v606
      %624 = vmatprep.subr.bf16.mxu0 0
      %625 = vmatpush1.bf16.msra.mxu0 %v607
      %626 = vmatprep.subr.bf16.mxu0 0
      %627 = vmatpush1.bf16.msra.mxu0 %v608
      %628 = vmatprep.subr.bf16.mxu0 0
      %629 = vmatpush1.bf16.msra.mxu0 %v609
      %630 = vmatprep.subr.bf16.mxu0 0
      %631 = vmatpush1.bf16.msra.mxu0 %v610
      %632 = vmatprep.subr.bf16.mxu0 0
      %633 = vmatpush1.bf16.msra.mxu0 %v611
      %634 = vmatprep.subr.bf16.mxu0 0
      %635 = vmatpush1.bf16.msra.mxu0 %v612
      %636 = vmatprep.subr.bf16.mxu0 0
      %637 = vmatpush1.bf16.msra.mxu0 %v613
      %638 = vmatprep.subr.bf16.mxu0 0
      %639 = vmatpush1.bf16.msra.mxu0 0
      %640 = vmatprep.subr.bf16.mxu0 0
      %641 = vmatpush1.bf16.msra.mxu0 0
      %642 = vmatprep.subr.bf16.mxu0 0
      %643 = vmatpush1.bf16.msra.mxu0 0
      %644 = vmatprep.subr.bf16.mxu0 0
      %645 = vmatpush1.bf16.msra.mxu0 0
      %646 = vmatprep.subr.bf16.mxu0 0
      %647 = vmatpush1.bf16.msra.mxu0 0
      %648 = vmatprep.subr.bf16.mxu0 0
      %649 = vmatpush1.bf16.msra.mxu0 0
      %650 = vmatprep.subr.bf16.mxu0 0
      %651 = vmatpush1.bf16.msra.mxu0 0
      %652 = vmatprep.subr.bf16.mxu0 0
      %653 = vmatpush1.bf16.msra.mxu0 0
      %654 = vmatprep.mubr.bf16.mxu0 0
      %655 = vmatmul.mubr.bf16.gmra.mrb[0].mxu0 %v566
      %v656 = vpop.f32.mrb[0].mxu0
      %v657 = vadd.f32 %v520, %v656
      %v658 = vpop.f32.mrb[0].mxu0
      %v659 = vpop.f32.mrb[0].mxu0
      %v660 = vadd.f32 %v523, %v659
      %v661 = vpop.f32.mrb[0].mxu0
      %662 = vmatprep.mubr.bf16.mxu0 0
      %663 = vmatmul.mubr.bf16.gmra.mrb[0].mxu0 %v567
      %v664 = vpop.f32.mrb[0].mxu0
      %v665 = vadd.f32 %v528, %v664
      %v666 = vpop.f32.mrb[0].mxu0
      %v667 = vpop.f32.mrb[0].mxu0
      %v668 = vadd.f32 %v531, %v667
      %v669 = vpop.f32.mrb[0].mxu0
      %670 = vmatprep.mubr.bf16.mxu0 0
      %671 = vmatmul.mubr.bf16.gmra.mrb[0].mxu0 %v568
      %v672 = vpop.f32.mrb[0].mxu0
      %v673 = vadd.f32 %v536, %v672
      %v674 = vpop.f32.mrb[0].mxu0
      %v675 = vpop.f32.mrb[0].mxu0
      %v676 = vadd.f32 %v539, %v675
      %v677 = vpop.f32.mrb[0].mxu0
      %678 = vmatprep.mubr.bf16.mxu0 0
      %679 = vmatmul.mubr.bf16.gmra.mrb[0].mxu0 %v569
      %v680 = vpop.f32.mrb[0].mxu0
      %v681 = vadd.f32 %v544, %v680
      %v682 = vpop.f32.mrb[0].mxu0
      %v683 = vpop.f32.mrb[0].mxu0
      %v684 = vadd.f32 %v547, %v683
      %v685 = vpop.f32.mrb[0].mxu0
      %686 = vdwg.mxu0
      %vm695 = vcmask 1042432
      %vm696 = vcmask 1046532
      %vm697 = vmor %vm695, %vm696
      %v698 = vrot.slane %v254, 5
      %v699 = vrot.slane %v698, 4
      %v700 = vrot.slane %v255, 5
      %v701 = vsel %vm697, %v699, %v700
      %v702 = vrot.slane %v256, 5
      %v703 = vrot.slane %v702, 4
      %v704 = vrot.slane %v257, 5
      %v705 = vsel %vm697, %v703, %v704
      %v706 = vrot.slane %v258, 5
      %v707 = vrot.slane %v706, 4
      %v708 = vrot.slane %v259, 5
      %v709 = vsel %vm697, %v707, %v708
      %v710 = vrot.slane %v260, 5
      %v711 = vrot.slane %v710, 4
      %v712 = vrot.slane %v261, 5
      %v713 = vsel %vm697, %v711, %v712
      %v714 = vrot.slane %v262, 5
      %v715 = vrot.slane %v714, 4
      %v716 = vrot.slane %v263, 5
      %v717 = vsel %vm697, %v715, %v716
      %v718 = vrot.slane %v264, 5
      %v719 = vrot.slane %v718, 4
      %v720 = vrot.slane %v265, 5
      %v721 = vsel %vm697, %v719, %v720
      %v722 = vrot.slane %v266, 5
      %v723 = vrot.slane %v722, 4
      %v724 = vrot.slane %v267, 5
      %v725 = vsel %vm697, %v723, %v724
      %v726 = vrot.slane %v268, 5
      %v727 = vrot.slane %v726, 4
      %v728 = vrot.slane %v269, 5
      %v729 = vsel %vm697, %v727, %v728
      %v730 = vld [vmem:[%s231 + $0x80] sm:$0xf]
      %v731 = vld [vmem:[%s231 + $0x84] sm:$0xf]
      %v732 = vld [vmem:[%s231 + $0x88] sm:$0xf]
      %v733 = vld [vmem:[%s231 + $0x8c] sm:$0xf]
      %v734 = vld [vmem:[%s231 + $0x90] sm:$0xf]
      %v735 = vld [vmem:[%s231 + $0x94] sm:$0xf]
      %v736 = vld [vmem:[%s231 + $0x98] sm:$0xf]
      %v737 = vld [vmem:[%s231 + $0x9c] sm:$0xf]
      %v738 = vld [vmem:[%s231 + $0xa0] sm:$0xf]
      %v739 = vld [vmem:[%s231 + $0xa4] sm:$0xf]
      %v740 = vld [vmem:[%s231 + $0xa8] sm:$0xf]
      %v741 = vld [vmem:[%s231 + $0xac] sm:$0xf]
      %v742 = vld [vmem:[%s231 + $0xb0] sm:$0xf]
      %v743 = vld [vmem:[%s231 + $0xb4] sm:$0xf]
      %v744 = vld [vmem:[%s231 + $0xb8] sm:$0xf]
      %v745 = vld [vmem:[%s231 + $0xbc] sm:$0xf]
      %v746 = vunpack.c.l.b16 %v701
      %v747 = vunpack.c.l.b16 %v705
      %v748 = vunpack.c.l.b16 %v709
      %v749 = vunpack.c.l.b16 %v713
      %v750 = vunpack.c.l.b16 %v717
      %v751 = vunpack.c.l.b16 %v721
      %v752 = vunpack.c.l.b16 %v725
      %v753 = vunpack.c.l.b16 %v729
      %v754 = vpack.c.b16 %v747, %v746
      %v755 = vpack.c.b16 %v749, %v748
      %v756 = vpack.c.b16 %v751, %v750
      %v757 = vpack.c.b16 %v753, %v752
      %v778 = vunpack.c.l.b16 %v730
      %v779 = vunpack.c.l.b16 %v731
      %v780 = vunpack.c.l.b16 %v732
      %v781 = vunpack.c.l.b16 %v733
      %v782 = vunpack.c.l.b16 %v734
      %v783 = vunpack.c.l.b16 %v735
      %v784 = vunpack.c.l.b16 %v736
      %v785 = vunpack.c.l.b16 %v737
      %v786 = vunpack.c.l.b16 %v738
      %v787 = vunpack.c.l.b16 %v739
      %v788 = vunpack.c.l.b16 %v740
      %v789 = vunpack.c.l.b16 %v741
      %v790 = vunpack.c.l.b16 %v742
      %v791 = vunpack.c.l.b16 %v743
      %v792 = vunpack.c.l.b16 %v744
      %v793 = vunpack.c.l.b16 %v745
      %v794 = vpack.c.b16 %v779, %v778
      %v795 = vpack.c.b16 %v781, %v780
      %v796 = vpack.c.b16 %v783, %v782
      %v797 = vpack.c.b16 %v785, %v784
      %v798 = vpack.c.b16 %v787, %v786
      %v799 = vpack.c.b16 %v789, %v788
      %v800 = vpack.c.b16 %v791, %v790
      %v801 = vpack.c.b16 %v793, %v792
      %810 = vmatprep.subr.bf16.mxu0 0
      %811 = vmatpush1.bf16.msra.mxu0 %v794
      %812 = vmatprep.subr.bf16.mxu0 0
      %813 = vmatpush1.bf16.msra.mxu0 %v795
      %814 = vmatprep.subr.bf16.mxu0 0
      %815 = vmatpush1.bf16.msra.mxu0 %v796
      %816 = vmatprep.subr.bf16.mxu0 0
      %817 = vmatpush1.bf16.msra.mxu0 %v797
      %818 = vmatprep.subr.bf16.mxu0 0
      %819 = vmatpush1.bf16.msra.mxu0 %v798
      %820 = vmatprep.subr.bf16.mxu0 0
      %821 = vmatpush1.bf16.msra.mxu0 %v799
      %822 = vmatprep.subr.bf16.mxu0 0
      %823 = vmatpush1.bf16.msra.mxu0 %v800
      %824 = vmatprep.subr.bf16.mxu0 0
      %825 = vmatpush1.bf16.msra.mxu0 %v801
      %826 = vmatprep.subr.bf16.mxu0 0
      %827 = vmatpush1.bf16.msra.mxu0 0
      %828 = vmatprep.subr.bf16.mxu0 0
      %829 = vmatpush1.bf16.msra.mxu0 0
      %830 = vmatprep.subr.bf16.mxu0 0
      %831 = vmatpush1.bf16.msra.mxu0 0
      %832 = vmatprep.subr.bf16.mxu0 0
      %833 = vmatpush1.bf16.msra.mxu0 0
      %834 = vmatprep.subr.bf16.mxu0 0
      %835 = vmatpush1.bf16.msra.mxu0 0
      %836 = vmatprep.subr.bf16.mxu0 0
      %837 = vmatpush1.bf16.msra.mxu0 0
      %838 = vmatprep.subr.bf16.mxu0 0
      %839 = vmatpush1.bf16.msra.mxu0 0
      %840 = vmatprep.subr.bf16.mxu0 0
      %841 = vmatpush1.bf16.msra.mxu0 0
      %842 = vmatprep.mubr.bf16.mxu0 0
      %843 = vmatmul.mubr.bf16.gmra.mrb[0].mxu0 %v754
      %v844 = vpop.f32.mrb[0].mxu0
      %v845 = vadd.f32 0.0, %v844
      %v846 = vpop.f32.mrb[0].mxu0
      %v847 = vpop.f32.mrb[0].mxu0
      %v848 = vadd.f32 0.0, %v847
      %v849 = vpop.f32.mrb[0].mxu0
      %850 = vmatprep.mubr.bf16.mxu0 0
      %851 = vmatmul.mubr.bf16.gmra.mrb[0].mxu0 %v755
      %v852 = vpop.f32.mrb[0].mxu0
      %v853 = vadd.f32 0.0, %v852
      %v854 = vpop.f32.mrb[0].mxu0
      %v855 = vpop.f32.mrb[0].mxu0
      %v856 = vadd.f32 0.0, %v855
      %v857 = vpop.f32.mrb[0].mxu0
      %858 = vmatprep.mubr.bf16.mxu0 0
      %859 = vmatmul.mubr.bf16.gmra.mrb[0].mxu0 %v756
      %v860 = vpop.f32.mrb[0].mxu0
      %v861 = vadd.f32 0.0, %v860
      %v862 = vpop.f32.mrb[0].mxu0
      %v863 = vpop.f32.mrb[0].mxu0
      %v864 = vadd.f32 0.0, %v863
      %v865 = vpop.f32.mrb[0].mxu0
      %866 = vmatprep.mubr.bf16.mxu0 0
      %867 = vmatmul.mubr.bf16.gmra.mrb[0].mxu0 %v757
      %v868 = vpop.f32.mrb[0].mxu0
      %v869 = vadd.f32 0.0, %v868
      %v870 = vpop.f32.mrb[0].mxu0
      %v871 = vpop.f32.mrb[0].mxu0
      %v872 = vadd.f32 0.0, %v871
      %v873 = vpop.f32.mrb[0].mxu0
      %874 = vdwg.mxu0
      %v875 = vadd.f32 %v657, %v845
      %v876 = vadd.f32 %v660, %v848
      %v877 = vadd.f32 %v665, %v853
      %v878 = vadd.f32 %v668, %v856
      %v879 = vadd.f32 %v673, %v861
      %v880 = vadd.f32 %v676, %v864
      %v881 = vadd.f32 %v681, %v869
      %v882 = vadd.f32 %v684, %v872
      %v883 = vld [vmem:[%s231 + $0xc0] sm:$0xf]
      %v884 = vld [vmem:[%s231 + $0xc4] sm:$0xf]
      %v885 = vld [vmem:[%s231 + $0xc8] sm:$0xf]
      %v886 = vld [vmem:[%s231 + $0xcc] sm:$0xf]
      %v887 = vld [vmem:[%s231 + $0xd0] sm:$0xf]
      %v888 = vld [vmem:[%s231 + $0xd4] sm:$0xf]
      %v889 = vld [vmem:[%s231 + $0xd8] sm:$0xf]
      %v890 = vld [vmem:[%s231 + $0xdc] sm:$0xf]
      %v891 = vld [vmem:[%s231 + $0xe0] sm:$0xf]
      %v892 = vld [vmem:[%s231 + $0xe4] sm:$0xf]
      %v893 = vld [vmem:[%s231 + $0xe8] sm:$0xf]
      %v894 = vld [vmem:[%s231 + $0xec] sm:$0xf]
      %v895 = vld [vmem:[%s231 + $0xf0] sm:$0xf]
      %v896 = vld [vmem:[%s231 + $0xf4] sm:$0xf]
      %v897 = vld [vmem:[%s231 + $0xf8] sm:$0xf]
      %v898 = vld [vmem:[%s231 + $0xfc] sm:$0xf]
      %v900 = vunpack.c.l.b16 %v270
      %v901 = vpack.c.b16 %v560, %v559
      %v902 = vpack.c.b16 %v562, %v561
      %v903 = vpack.c.b16 %v564, %v563
      %v904 = vpack.c.b16 %v900, %v565
      %v925 = vunpack.c.l.b16 %v883
      %v926 = vunpack.c.l.b16 %v884
      %v927 = vunpack.c.l.b16 %v885
      %v928 = vunpack.c.l.b16 %v886
      %v929 = vunpack.c.l.b16 %v887
      %v930 = vunpack.c.l.b16 %v888
      %v931 = vunpack.c.l.b16 %v889
      %v932 = vunpack.c.l.b16 %v890
      %v933 = vunpack.c.l.b16 %v891
      %v934 = vunpack.c.l.b16 %v892
      %v935 = vunpack.c.l.b16 %v893
      %v936 = vunpack.c.l.b16 %v894
      %v937 = vunpack.c.l.b16 %v895
      %v938 = vunpack.c.l.b16 %v896
      %v939 = vunpack.c.l.b16 %v897
      %v940 = vunpack.c.l.b16 %v898
      %v941 = vpack.c.b16 %v926, %v925
      %v942 = vpack.c.b16 %v928, %v927
      %v943 = vpack.c.b16 %v930, %v929
      %v944 = vpack.c.b16 %v932, %v931
      %v945 = vpack.c.b16 %v934, %v933
      %v946 = vpack.c.b16 %v936, %v935
      %v947 = vpack.c.b16 %v938, %v937
      %v948 = vpack.c.b16 %v940, %v939
      %957 = vmatprep.subr.bf16.mxu0 0
      %958 = vmatpush1.bf16.msra.mxu0 %v941
      %959 = vmatprep.subr.bf16.mxu0 0
      %960 = vmatpush1.bf16.msra.mxu0 %v942
      %961 = vmatprep.subr.bf16.mxu0 0
      %962 = vmatpush1.bf16.msra.mxu0 %v943
      %963 = vmatprep.subr.bf16.mxu0 0
      %964 = vmatpush1.bf16.msra.mxu0 %v944
      %965 = vmatprep.subr.bf16.mxu0 0
      %966 = vmatpush1.bf16.msra.mxu0 %v945
      %967 = vmatprep.subr.bf16.mxu0 0
      %968 = vmatpush1.bf16.msra.mxu0 %v946
      %969 = vmatprep.subr.bf16.mxu0 0
      %970 = vmatpush1.bf16.msra.mxu0 %v947
      %971 = vmatprep.subr.bf16.mxu0 0
      %972 = vmatpush1.bf16.msra.mxu0 %v948
      %973 = vmatprep.subr.bf16.mxu0 0
      %974 = vmatpush1.bf16.msra.mxu0 0
      %975 = vmatprep.subr.bf16.mxu0 0
      %976 = vmatpush1.bf16.msra.mxu0 0
      %977 = vmatprep.subr.bf16.mxu0 0
      %978 = vmatpush1.bf16.msra.mxu0 0
      %979 = vmatprep.subr.bf16.mxu0 0
      %980 = vmatpush1.bf16.msra.mxu0 0
      %981 = vmatprep.subr.bf16.mxu0 0
      %982 = vmatpush1.bf16.msra.mxu0 0
      %983 = vmatprep.subr.bf16.mxu0 0
      %984 = vmatpush1.bf16.msra.mxu0 0
      %985 = vmatprep.subr.bf16.mxu0 0
      %986 = vmatpush1.bf16.msra.mxu0 0
      %987 = vmatprep.subr.bf16.mxu0 0
      %988 = vmatpush1.bf16.msra.mxu0 0
      %989 = vmatprep.mubr.bf16.mxu0 0
      %990 = vmatmul.mubr.bf16.gmra.mrb[0].mxu0 %v901
      %v991 = vpop.f32.mrb[0].mxu0
      %v992 = vadd.f32 0.0, %v991
      %v993 = vpop.f32.mrb[0].mxu0
      %v994 = vpop.f32.mrb[0].mxu0
      %v995 = vadd.f32 0.0, %v994
      %v996 = vpop.f32.mrb[0].mxu0
      %997 = vmatprep.mubr.bf16.mxu0 0
      %998 = vmatmul.mubr.bf16.gmra.mrb[0].mxu0 %v902
      %v999 = vpop.f32.mrb[0].mxu0
      %v1000 = vadd.f32 0.0, %v999
      %v1001 = vpop.f32.mrb[0].mxu0
      %v1002 = vpop.f32.mrb[0].mxu0
      %v1003 = vadd.f32 0.0, %v1002
      %v1004 = vpop.f32.mrb[0].mxu0
      %1005 = vmatprep.mubr.bf16.mxu0 0
      %1006 = vmatmul.mubr.bf16.gmra.mrb[0].mxu0 %v903
      %v1007 = vpop.f32.mrb[0].mxu0
      %v1008 = vadd.f32 0.0, %v1007
      %v1009 = vpop.f32.mrb[0].mxu0
      %v1010 = vpop.f32.mrb[0].mxu0
      %v1011 = vadd.f32 0.0, %v1010
      %v1012 = vpop.f32.mrb[0].mxu0
      %1013 = vmatprep.mubr.bf16.mxu0 0
      %1014 = vmatmul.mubr.bf16.gmra.mrb[0].mxu0 %v904
      %v1015 = vpop.f32.mrb[0].mxu0
      %v1016 = vadd.f32 0.0, %v1015
      %v1017 = vpop.f32.mrb[0].mxu0
      %v1018 = vpop.f32.mrb[0].mxu0
      %v1019 = vadd.f32 0.0, %v1018
      %v1020 = vpop.f32.mrb[0].mxu0
      %1021 = vdwg.mxu0
      %v1022 = vadd.f32 %v875, %v992
      %v1023 = vadd.f32 %v876, %v995
      %v1024 = vadd.f32 %v877, %v1000
      %v1025 = vadd.f32 %v878, %v1003
      %v1026 = vadd.f32 %v879, %v1008
      %v1027 = vadd.f32 %v880, %v1011
      %v1028 = vadd.f32 %v881, %v1016
      %v1029 = vadd.f32 %v882, %v1019
      %v1031 = vshrl.u32 %v270, 16
      %v1033 = vrot.slane %v1031, 4
      %v1034 = vshll.u32 %v270, 16
      %v1036 = vrot.slane %v1034, 5
      %v1037 = vor.u32 %v1033, %v1036
      %v1038 = vrot.slane %v1037, 4
      %v1040 = vshll.u32 %v271, 16
      %v1042 = vrot.slane %v1040, 5
      %v1043 = vsel %vm292, %v1038, %v1042
      %v1044 = vld [vmem:[%s231 + $0x100] sm:$0xf]
      %v1045 = vld [vmem:[%s231 + $0x104] sm:$0xf]
      %v1046 = vld [vmem:[%s231 + $0x108] sm:$0xf]
      %v1047 = vld [vmem:[%s231 + $0x10c] sm:$0xf]
      %v1048 = vld [vmem:[%s231 + $0x110] sm:$0xf]
      %v1049 = vld [vmem:[%s231 + $0x114] sm:$0xf]
      %v1050 = vld [vmem:[%s231 + $0x118] sm:$0xf]
      %v1051 = vld [vmem:[%s231 + $0x11c] sm:$0xf]
      %v1052 = vld [vmem:[%s231 + $0x120] sm:$0xf]
      %v1053 = vld [vmem:[%s231 + $0x124] sm:$0xf]
      %v1054 = vld [vmem:[%s231 + $0x128] sm:$0xf]
      %v1055 = vld [vmem:[%s231 + $0x12c] sm:$0xf]
      %v1056 = vld [vmem:[%s231 + $0x130] sm:$0xf]
      %v1057 = vld [vmem:[%s231 + $0x134] sm:$0xf]
      %v1058 = vld [vmem:[%s231 + $0x138] sm:$0xf]
      %v1059 = vld [vmem:[%s231 + $0x13c] sm:$0xf]
      %v1060 = vunpack.c.l.b16 %v1043
      %v1061 = vpack.c.b16 %v423, %v422
      %v1062 = vpack.c.b16 %v425, %v424
      %v1063 = vpack.c.b16 %v427, %v426
      %v1064 = vpack.c.b16 %v1060, %v428
      %v1085 = vunpack.c.l.b16 %v1044
      %v1086 = vunpack.c.l.b16 %v1045
      %v1087 = vunpack.c.l.b16 %v1046
      %v1088 = vunpack.c.l.b16 %v1047
      %v1089 = vunpack.c.l.b16 %v1048
      %v1090 = vunpack.c.l.b16 %v1049
      %v1091 = vunpack.c.l.b16 %v1050
      %v1092 = vunpack.c.l.b16 %v1051
      %v1093 = vunpack.c.l.b16 %v1052
      %v1094 = vunpack.c.l.b16 %v1053
      %v1095 = vunpack.c.l.b16 %v1054
      %v1096 = vunpack.c.l.b16 %v1055
      %v1097 = vunpack.c.l.b16 %v1056
      %v1098 = vunpack.c.l.b16 %v1057
      %v1099 = vunpack.c.l.b16 %v1058
      %v1100 = vunpack.c.l.b16 %v1059
      %v1101 = vpack.c.b16 %v1086, %v1085
      %v1102 = vpack.c.b16 %v1088, %v1087
      %v1103 = vpack.c.b16 %v1090, %v1089
      %v1104 = vpack.c.b16 %v1092, %v1091
      %v1105 = vpack.c.b16 %v1094, %v1093
      %v1106 = vpack.c.b16 %v1096, %v1095
      %v1107 = vpack.c.b16 %v1098, %v1097
      %v1108 = vpack.c.b16 %v1100, %v1099
      %1117 = vmatprep.subr.bf16.mxu0 0
      %1118 = vmatpush1.bf16.msra.mxu0 %v1101
      %1119 = vmatprep.subr.bf16.mxu0 0
      %1120 = vmatpush1.bf16.msra.mxu0 %v1102
      %1121 = vmatprep.subr.bf16.mxu0 0
      %1122 = vmatpush1.bf16.msra.mxu0 %v1103
      %1123 = vmatprep.subr.bf16.mxu0 0
      %1124 = vmatpush1.bf16.msra.mxu0 %v1104
      %1125 = vmatprep.subr.bf16.mxu0 0
      %1126 = vmatpush1.bf16.msra.mxu0 %v1105
      %1127 = vmatprep.subr.bf16.mxu0 0
      %1128 = vmatpush1.bf16.msra.mxu0 %v1106
      %1129 = vmatprep.subr.bf16.mxu0 0
      %1130 = vmatpush1.bf16.msra.mxu0 %v1107
      %1131 = vmatprep.subr.bf16.mxu0 0
      %1132 = vmatpush1.bf16.msra.mxu0 %v1108
      %1133 = vmatprep.subr.bf16.mxu0 0
      %1134 = vmatpush1.bf16.msra.mxu0 0
      %1135 = vmatprep.subr.bf16.mxu0 0
      %1136 = vmatpush1.bf16.msra.mxu0 0
      %1137 = vmatprep.subr.bf16.mxu0 0
      %1138 = vmatpush1.bf16.msra.mxu0 0
      %1139 = vmatprep.subr.bf16.mxu0 0
      %1140 = vmatpush1.bf16.msra.mxu0 0
      %1141 = vmatprep.subr.bf16.mxu0 0
      %1142 = vmatpush1.bf16.msra.mxu0 0
      %1143 = vmatprep.subr.bf16.mxu0 0
      %1144 = vmatpush1.bf16.msra.mxu0 0
      %1145 = vmatprep.subr.bf16.mxu0 0
      %1146 = vmatpush1.bf16.msra.mxu0 0
      %1147 = vmatprep.subr.bf16.mxu0 0
      %1148 = vmatpush1.bf16.msra.mxu0 0
      %1149 = vmatprep.mubr.bf16.mxu0 0
      %1150 = vmatmul.mubr.bf16.gmra.mrb[0].mxu0 %v1061
      %v1151 = vpop.f32.mrb[0].mxu0
      %v1152 = vadd.f32 0.0, %v1151
      %v1153 = vpop.f32.mrb[0].mxu0
      %v1154 = vpop.f32.mrb[0].mxu0
      %v1155 = vadd.f32 0.0, %v1154
      %v1156 = vpop.f32.mrb[0].mxu0
      %1157 = vmatprep.mubr.bf16.mxu0 0
      %1158 = vmatmul.mubr.bf16.gmra.mrb[0].mxu0 %v1062
      %v1159 = vpop.f32.mrb[0].mxu0
      %v1160 = vadd.f32 0.0, %v1159
      %v1161 = vpop.f32.mrb[0].mxu0
      %v1162 = vpop.f32.mrb[0].mxu0
      %v1163 = vadd.f32 0.0, %v1162
      %v1164 = vpop.f32.mrb[0].mxu0
      %1165 = vmatprep.mubr.bf16.mxu0 0
      %1166 = vmatmul.mubr.bf16.gmra.mrb[0].mxu0 %v1063
      %v1167 = vpop.f32.mrb[0].mxu0
      %v1168 = vadd.f32 0.0, %v1167
      %v1169 = vpop.f32.mrb[0].mxu0
      %v1170 = vpop.f32.mrb[0].mxu0
      %v1171 = vadd.f32 0.0, %v1170
      %v1172 = vpop.f32.mrb[0].mxu0
      %1173 = vmatprep.mubr.bf16.mxu0 0
      %1174 = vmatmul.mubr.bf16.gmra.mrb[0].mxu0 %v1064
      %v1175 = vpop.f32.mrb[0].mxu0
      %v1176 = vadd.f32 0.0, %v1175
      %v1177 = vpop.f32.mrb[0].mxu0
      %v1178 = vpop.f32.mrb[0].mxu0
      %v1179 = vadd.f32 0.0, %v1178
      %v1180 = vpop.f32.mrb[0].mxu0
      %1181 = vdwg.mxu0
      %v1182 = vadd.f32 %v1022, %v1152
      %v1183 = vadd.f32 %v1023, %v1155
      %v1184 = vadd.f32 %v1024, %v1160
      %v1185 = vadd.f32 %v1025, %v1163
      %v1186 = vadd.f32 %v1026, %v1168
      %v1187 = vadd.f32 %v1027, %v1171
      %v1188 = vadd.f32 %v1028, %v1176
      %v1189 = vadd.f32 %v1029, %v1179
      %v1191 = vrot.slane %v270, 5
      %v1192 = vrot.slane %v1191, 4
      %v1193 = vrot.slane %v271, 5
      %v1194 = vsel %vm697, %v1192, %v1193
      %v1195 = vld [vmem:[%s231 + $0x140] sm:$0xf]
      %v1196 = vld [vmem:[%s231 + $0x144] sm:$0xf]
      %v1197 = vld [vmem:[%s231 + $0x148] sm:$0xf]
      %v1198 = vld [vmem:[%s231 + $0x14c] sm:$0xf]
      %v1199 = vld [vmem:[%s231 + $0x150] sm:$0xf]
      %v1200 = vld [vmem:[%s231 + $0x154] sm:$0xf]
      %v1201 = vld [vmem:[%s231 + $0x158] sm:$0xf]
      %v1202 = vld [vmem:[%s231 + $0x15c] sm:$0xf]
      %v1203 = vld [vmem:[%s231 + $0x160] sm:$0xf]
      %v1204 = vld [vmem:[%s231 + $0x164] sm:$0xf]
      %v1205 = vld [vmem:[%s231 + $0x168] sm:$0xf]
      %v1206 = vld [vmem:[%s231 + $0x16c] sm:$0xf]
      %v1207 = vld [vmem:[%s231 + $0x170] sm:$0xf]
      %v1208 = vld [vmem:[%s231 + $0x174] sm:$0xf]
      %v1209 = vld [vmem:[%s231 + $0x178] sm:$0xf]
      %v1210 = vld [vmem:[%s231 + $0x17c] sm:$0xf]
      %v1211 = vunpack.c.l.b16 %v1194
      %v1212 = vpack.c.b16 %v748, %v747
      %v1213 = vpack.c.b16 %v750, %v749
      %v1214 = vpack.c.b16 %v752, %v751
      %v1215 = vpack.c.b16 %v1211, %v753
      %v1236 = vunpack.c.l.b16 %v1195
      %v1237 = vunpack.c.l.b16 %v1196
      %v1238 = vunpack.c.l.b16 %v1197
      %v1239 = vunpack.c.l.b16 %v1198
      %v1240 = vunpack.c.l.b16 %v1199
      %v1241 = vunpack.c.l.b16 %v1200
      %v1242 = vunpack.c.l.b16 %v1201
      %v1243 = vunpack.c.l.b16 %v1202
      %v1244 = vunpack.c.l.b16 %v1203
      %v1245 = vunpack.c.l.b16 %v1204
      %v1246 = vunpack.c.l.b16 %v1205
      %v1247 = vunpack.c.l.b16 %v1206
      %v1248 = vunpack.c.l.b16 %v1207
      %v1249 = vunpack.c.l.b16 %v1208
      %v1250 = vunpack.c.l.b16 %v1209
      %v1251 = vunpack.c.l.b16 %v1210
      %v1252 = vpack.c.b16 %v1237, %v1236
      %v1253 = vpack.c.b16 %v1239, %v1238
      %v1254 = vpack.c.b16 %v1241, %v1240
      %v1255 = vpack.c.b16 %v1243, %v1242
      %v1256 = vpack.c.b16 %v1245, %v1244
      %v1257 = vpack.c.b16 %v1247, %v1246
      %v1258 = vpack.c.b16 %v1249, %v1248
      %v1259 = vpack.c.b16 %v1251, %v1250
      %1268 = vmatprep.subr.bf16.mxu0 0
      %1269 = vmatpush1.bf16.msra.mxu0 %v1252
      %1270 = vmatprep.subr.bf16.mxu0 0
      %1271 = vmatpush1.bf16.msra.mxu0 %v1253
      %1272 = vmatprep.subr.bf16.mxu0 0
      %1273 = vmatpush1.bf16.msra.mxu0 %v1254
      %1274 = vmatprep.subr.bf16.mxu0 0
      %1275 = vmatpush1.bf16.msra.mxu0 %v1255
      %1276 = vmatprep.subr.bf16.mxu0 0
      %1277 = vmatpush1.bf16.msra.mxu0 %v1256
      %1278 = vmatprep.subr.bf16.mxu0 0
      %1279 = vmatpush1.bf16.msra.mxu0 %v1257
      %1280 = vmatprep.subr.bf16.mxu0 0
      %1281 = vmatpush1.bf16.msra.mxu0 %v1258
      %1282 = vmatprep.subr.bf16.mxu0 0
      %1283 = vmatpush1.bf16.msra.mxu0 %v1259
      %1284 = vmatprep.subr.bf16.mxu0 0
      %1285 = vmatpush1.bf16.msra.mxu0 0
      %1286 = vmatprep.subr.bf16.mxu0 0
      %1287 = vmatpush1.bf16.msra.mxu0 0
      %1288 = vmatprep.subr.bf16.mxu0 0
      %1289 = vmatpush1.bf16.msra.mxu0 0
      %1290 = vmatprep.subr.bf16.mxu0 0
      %1291 = vmatpush1.bf16.msra.mxu0 0
      %1292 = vmatprep.subr.bf16.mxu0 0
      %1293 = vmatpush1.bf16.msra.mxu0 0
      %1294 = vmatprep.subr.bf16.mxu0 0
      %1295 = vmatpush1.bf16.msra.mxu0 0
      %1296 = vmatprep.subr.bf16.mxu0 0
      %1297 = vmatpush1.bf16.msra.mxu0 0
      %1298 = vmatprep.subr.bf16.mxu0 0
      %1299 = vmatpush1.bf16.msra.mxu0 0
      %1300 = vmatprep.mubr.bf16.mxu0 0
      %1301 = vmatmul.mubr.bf16.gmra.mrb[0].mxu0 %v1212
      %v1302 = vpop.f32.mrb[0].mxu0
      %v1303 = vadd.f32 0.0, %v1302
      %v1304 = vpop.f32.mrb[0].mxu0
      %v1305 = vpop.f32.mrb[0].mxu0
      %v1306 = vadd.f32 0.0, %v1305
      %v1307 = vpop.f32.mrb[0].mxu0
      %1308 = vmatprep.mubr.bf16.mxu0 0
      %1309 = vmatmul.mubr.bf16.gmra.mrb[0].mxu0 %v1213
      %v1310 = vpop.f32.mrb[0].mxu0
      %v1311 = vadd.f32 0.0, %v1310
      %v1312 = vpop.f32.mrb[0].mxu0
      %v1313 = vpop.f32.mrb[0].mxu0
      %v1314 = vadd.f32 0.0, %v1313
      %v1315 = vpop.f32.mrb[0].mxu0
      %1316 = vmatprep.mubr.bf16.mxu0 0
      %1317 = vmatmul.mubr.bf16.gmra.mrb[0].mxu0 %v1214
      %v1318 = vpop.f32.mrb[0].mxu0
      %v1319 = vadd.f32 0.0, %v1318
      %v1320 = vpop.f32.mrb[0].mxu0
      %v1321 = vpop.f32.mrb[0].mxu0
      %v1322 = vadd.f32 0.0, %v1321
      %v1323 = vpop.f32.mrb[0].mxu0
      %1324 = vmatprep.mubr.bf16.mxu0 0
      %1325 = vmatmul.mubr.bf16.gmra.mrb[0].mxu0 %v1215
      %v1326 = vpop.f32.mrb[0].mxu0
      %v1327 = vadd.f32 0.0, %v1326
      %v1328 = vpop.f32.mrb[0].mxu0
      %v1329 = vpop.f32.mrb[0].mxu0
      %v1330 = vadd.f32 0.0, %v1329
      %v1331 = vpop.f32.mrb[0].mxu0
      %1332 = vdwg.mxu0
      %v1333 = vadd.f32 %v1182, %v1303
      %v1334 = vadd.f32 %v1183, %v1306
      %v1335 = vadd.f32 %v1184, %v1311
      %v1336 = vadd.f32 %v1185, %v1314
      %v1337 = vadd.f32 %v1186, %v1319
      %v1338 = vadd.f32 %v1187, %v1322
      %v1339 = vadd.f32 %v1188, %v1327
      %v1340 = vadd.f32 %v1189, %v1330
      %v1341 = vld [vmem:[%s231 + $0x180] sm:$0xf]
      %v1342 = vld [vmem:[%s231 + $0x184] sm:$0xf]
      %v1343 = vld [vmem:[%s231 + $0x188] sm:$0xf]
      %v1344 = vld [vmem:[%s231 + $0x18c] sm:$0xf]
      %v1345 = vld [vmem:[%s231 + $0x190] sm:$0xf]
      %v1346 = vld [vmem:[%s231 + $0x194] sm:$0xf]
      %v1347 = vld [vmem:[%s231 + $0x198] sm:$0xf]
      %v1348 = vld [vmem:[%s231 + $0x19c] sm:$0xf]
      %v1349 = vld [vmem:[%s231 + $0x1a0] sm:$0xf]
      %v1350 = vld [vmem:[%s231 + $0x1a4] sm:$0xf]
      %v1351 = vld [vmem:[%s231 + $0x1a8] sm:$0xf]
      %v1352 = vld [vmem:[%s231 + $0x1ac] sm:$0xf]
      %v1353 = vld [vmem:[%s231 + $0x1b0] sm:$0xf]
      %v1354 = vld [vmem:[%s231 + $0x1b4] sm:$0xf]
      %v1355 = vld [vmem:[%s231 + $0x1b8] sm:$0xf]
      %v1356 = vld [vmem:[%s231 + $0x1bc] sm:$0xf]
      %v1358 = vunpack.c.l.b16 %v272
      %v1359 = vpack.c.b16 %v1358, %v900
      %v1377 = vunpack.c.l.b16 %v1341
      %v1378 = vunpack.c.l.b16 %v1342
      %v1379 = vunpack.c.l.b16 %v1343
      %v1380 = vunpack.c.l.b16 %v1344
      %v1381 = vunpack.c.l.b16 %v1345
      %v1382 = vunpack.c.l.b16 %v1346
      %v1383 = vunpack.c.l.b16 %v1347
      %v1384 = vunpack.c.l.b16 %v1348
      %v1385 = vunpack.c.l.b16 %v1349
      %v1386 = vunpack.c.l.b16 %v1350
      %v1387 = vunpack.c.l.b16 %v1351
      %v1388 = vunpack.c.l.b16 %v1352
      %v1389 = vunpack.c.l.b16 %v1353
      %v1390 = vunpack.c.l.b16 %v1354
      %v1391 = vunpack.c.l.b16 %v1355
      %v1392 = vunpack.c.l.b16 %v1356
      %v1393 = vpack.c.b16 %v1378, %v1377
      %v1394 = vpack.c.b16 %v1380, %v1379
      %v1395 = vpack.c.b16 %v1382, %v1381
      %v1396 = vpack.c.b16 %v1384, %v1383
      %v1397 = vpack.c.b16 %v1386, %v1385
      %v1398 = vpack.c.b16 %v1388, %v1387
      %v1399 = vpack.c.b16 %v1390, %v1389
      %v1400 = vpack.c.b16 %v1392, %v1391
      %1409 = vmatprep.subr.bf16.mxu0 0
      %1410 = vmatpush1.bf16.msra.mxu0 %v1393
      %1411 = vmatprep.subr.bf16.mxu0 0
      %1412 = vmatpush1.bf16.msra.mxu0 %v1394
      %1413 = vmatprep.subr.bf16.mxu0 0
      %1414 = vmatpush1.bf16.msra.mxu0 %v1395
      %1415 = vmatprep.subr.bf16.mxu0 0
      %1416 = vmatpush1.bf16.msra.mxu0 %v1396
      %1417 = vmatprep.subr.bf16.mxu0 0
      %1418 = vmatpush1.bf16.msra.mxu0 %v1397
      %1419 = vmatprep.subr.bf16.mxu0 0
      %1420 = vmatpush1.bf16.msra.mxu0 %v1398
      %1421 = vmatprep.subr.bf16.mxu0 0
      %1422 = vmatpush1.bf16.msra.mxu0 %v1399
      %1423 = vmatprep.subr.bf16.mxu0 0
      %1424 = vmatpush1.bf16.msra.mxu0 %v1400
      %1425 = vmatprep.subr.bf16.mxu0 0
      %1426 = vmatpush1.bf16.msra.mxu0 0
      %1427 = vmatprep.subr.bf16.mxu0 0
      %1428 = vmatpush1.bf16.msra.mxu0 0
      %1429 = vmatprep.subr.bf16.mxu0 0
      %1430 = vmatpush1.bf16.msra.mxu0 0
      %1431 = vmatprep.subr.bf16.mxu0 0
      %1432 = vmatpush1.bf16.msra.mxu0 0
      %1433 = vmatprep.subr.bf16.mxu0 0
      %1434 = vmatpush1.bf16.msra.mxu0 0
      %1435 = vmatprep.subr.bf16.mxu0 0
      %1436 = vmatpush1.bf16.msra.mxu0 0
      %1437 = vmatprep.subr.bf16.mxu0 0
      %1438 = vmatpush1.bf16.msra.mxu0 0
      %1439 = vmatprep.subr.bf16.mxu0 0
      %1440 = vmatpush1.bf16.msra.mxu0 0
      %1441 = vmatprep.mubr.bf16.mxu0 0
      %1442 = vmatmul.mubr.bf16.gmra.mrb[0].mxu0 %v567
      %v1443 = vpop.f32.mrb[0].mxu0
      %v1444 = vadd.f32 0.0, %v1443
      %v1445 = vpop.f32.mrb[0].mxu0
      %v1446 = vpop.f32.mrb[0].mxu0
      %v1447 = vadd.f32 0.0, %v1446
      %v1448 = vpop.f32.mrb[0].mxu0
      %1449 = vmatprep.mubr.bf16.mxu0 0
      %1450 = vmatmul.mubr.bf16.gmra.mrb[0].mxu0 %v568
      %v1451 = vpop.f32.mrb[0].mxu0
      %v1452 = vadd.f32 0.0, %v1451
      %v1453 = vpop.f32.mrb[0].mxu0
      %v1454 = vpop.f32.mrb[0].mxu0
      %v1455 = vadd.f32 0.0, %v1454
      %v1456 = vpop.f32.mrb[0].mxu0
      %1457 = vmatprep.mubr.bf16.mxu0 0
      %1458 = vmatmul.mubr.bf16.gmra.mrb[0].mxu0 %v569
      %v1459 = vpop.f32.mrb[0].mxu0
      %v1460 = vadd.f32 0.0, %v1459
      %v1461 = vpop.f32.mrb[0].mxu0
      %v1462 = vpop.f32.mrb[0].mxu0
      %v1463 = vadd.f32 0.0, %v1462
      %v1464 = vpop.f32.mrb[0].mxu0
      %1465 = vmatprep.mubr.bf16.mxu0 0
      %1466 = vmatmul.mubr.bf16.gmra.mrb[0].mxu0 %v1359
      %v1467 = vpop.f32.mrb[0].mxu0
      %v1468 = vadd.f32 0.0, %v1467
      %v1469 = vpop.f32.mrb[0].mxu0
      %v1470 = vpop.f32.mrb[0].mxu0
      %v1471 = vadd.f32 0.0, %v1470
      %v1472 = vpop.f32.mrb[0].mxu0
      %1473 = vdwg.mxu0
      %v1474 = vadd.f32 %v1333, %v1444
      %v1475 = vadd.f32 %v1334, %v1447
      %v1476 = vadd.f32 %v1335, %v1452
      %v1477 = vadd.f32 %v1336, %v1455
      %v1478 = vadd.f32 %v1337, %v1460
      %v1479 = vadd.f32 %v1338, %v1463
      %v1480 = vadd.f32 %v1339, %v1468
      %v1481 = vadd.f32 %v1340, %v1471
      %v1483 = vshrl.u32 %v272, 16
      %v1485 = vrot.slane %v1483, 4
      %v1486 = vshll.u32 %v272, 16
      %v1488 = vrot.slane %v1486, 5
      %v1489 = vor.u32 %v1485, %v1488
      %v1490 = vrot.slane %v1489, 4
      %v1492 = vshll.u32 %v273, 16
      %v1494 = vrot.slane %v1492, 5
      %v1495 = vsel %vm292, %v1490, %v1494
      %v1496 = vld [vmem:[%s231 + $0x1c0] sm:$0xf]
      %v1497 = vld [vmem:[%s231 + $0x1c4] sm:$0xf]
      %v1498 = vld [vmem:[%s231 + $0x1c8] sm:$0xf]
      %v1499 = vld [vmem:[%s231 + $0x1cc] sm:$0xf]
      %v1500 = vld [vmem:[%s231 + $0x1d0] sm:$0xf]
      %v1501 = vld [vmem:[%s231 + $0x1d4] sm:$0xf]
      %v1502 = vld [vmem:[%s231 + $0x1d8] sm:$0xf]
      %v1503 = vld [vmem:[%s231 + $0x1dc] sm:$0xf]
      %v1504 = vld [vmem:[%s231 + $0x1e0] sm:$0xf]
      %v1505 = vld [vmem:[%s231 + $0x1e4] sm:$0xf]
      %v1506 = vld [vmem:[%s231 + $0x1e8] sm:$0xf]
      %v1507 = vld [vmem:[%s231 + $0x1ec] sm:$0xf]
      %v1508 = vld [vmem:[%s231 + $0x1f0] sm:$0xf]
      %v1509 = vld [vmem:[%s231 + $0x1f4] sm:$0xf]
      %v1510 = vld [vmem:[%s231 + $0x1f8] sm:$0xf]
      %v1511 = vld [vmem:[%s231 + $0x1fc] sm:$0xf]
      %v1512 = vunpack.c.l.b16 %v1495
      %v1513 = vpack.c.b16 %v1512, %v1060
      %v1531 = vunpack.c.l.b16 %v1496
      %v1532 = vunpack.c.l.b16 %v1497
      %v1533 = vunpack.c.l.b16 %v1498
      %v1534 = vunpack.c.l.b16 %v1499
      %v1535 = vunpack.c.l.b16 %v1500
      %v1536 = vunpack.c.l.b16 %v1501
      %v1537 = vunpack.c.l.b16 %v1502
      %v1538 = vunpack.c.l.b16 %v1503
      %v1539 = vunpack.c.l.b16 %v1504
      %v1540 = vunpack.c.l.b16 %v1505
      %v1541 = vunpack.c.l.b16 %v1506
      %v1542 = vunpack.c.l.b16 %v1507
      %v1543 = vunpack.c.l.b16 %v1508
      %v1544 = vunpack.c.l.b16 %v1509
      %v1545 = vunpack.c.l.b16 %v1510
      %v1546 = vunpack.c.l.b16 %v1511
      %v1547 = vpack.c.b16 %v1532, %v1531
      %v1548 = vpack.c.b16 %v1534, %v1533
      %v1549 = vpack.c.b16 %v1536, %v1535
      %v1550 = vpack.c.b16 %v1538, %v1537
      %v1551 = vpack.c.b16 %v1540, %v1539
      %v1552 = vpack.c.b16 %v1542, %v1541
      %v1553 = vpack.c.b16 %v1544, %v1543
      %v1554 = vpack.c.b16 %v1546, %v1545
      %1563 = vmatprep.subr.bf16.mxu0 0
      %1564 = vmatpush1.bf16.msra.mxu0 %v1547
      %1565 = vmatprep.subr.bf16.mxu0 0
      %1566 = vmatpush1.bf16.msra.mxu0 %v1548
      %1567 = vmatprep.subr.bf16.mxu0 0
      %1568 = vmatpush1.bf16.msra.mxu0 %v1549
      %1569 = vmatprep.subr.bf16.mxu0 0
      %1570 = vmatpush1.bf16.msra.mxu0 %v1550
      %1571 = vmatprep.subr.bf16.mxu0 0
      %1572 = vmatpush1.bf16.msra.mxu0 %v1551
      %1573 = vmatprep.subr.bf16.mxu0 0
      %1574 = vmatpush1.bf16.msra.mxu0 %v1552
      %1575 = vmatprep.subr.bf16.mxu0 0
      %1576 = vmatpush1.bf16.msra.mxu0 %v1553
      %1577 = vmatprep.subr.bf16.mxu0 0
      %1578 = vmatpush1.bf16.msra.mxu0 %v1554
      %1579 = vmatprep.subr.bf16.mxu0 0
      %1580 = vmatpush1.bf16.msra.mxu0 0
      %1581 = vmatprep.subr.bf16.mxu0 0
      %1582 = vmatpush1.bf16.msra.mxu0 0
      %1583 = vmatprep.subr.bf16.mxu0 0
      %1584 = vmatpush1.bf16.msra.mxu0 0
      %1585 = vmatprep.subr.bf16.mxu0 0
      %1586 = vmatpush1.bf16.msra.mxu0 0
      %1587 = vmatprep.subr.bf16.mxu0 0
      %1588 = vmatpush1.bf16.msra.mxu0 0
      %1589 = vmatprep.subr.bf16.mxu0 0
      %1590 = vmatpush1.bf16.msra.mxu0 0
      %1591 = vmatprep.subr.bf16.mxu0 0
      %1592 = vmatpush1.bf16.msra.mxu0 0
      %1593 = vmatprep.subr.bf16.mxu0 0
      %1594 = vmatpush1.bf16.msra.mxu0 0
      %1595 = vmatprep.mubr.bf16.mxu0 0
      %1596 = vmatmul.mubr.bf16.gmra.mrb[0].mxu0 %v430
      %v1597 = vpop.f32.mrb[0].mxu0
      %v1598 = vadd.f32 0.0, %v1597
      %v1599 = vpop.f32.mrb[0].mxu0
      %v1600 = vpop.f32.mrb[0].mxu0
      %v1601 = vadd.f32 0.0, %v1600
      %v1602 = vpop.f32.mrb[0].mxu0
      %1603 = vmatprep.mubr.bf16.mxu0 0
      %1604 = vmatmul.mubr.bf16.gmra.mrb[0].mxu0 %v431
      %v1605 = vpop.f32.mrb[0].mxu0
      %v1606 = vadd.f32 0.0, %v1605
      %v1607 = vpop.f32.mrb[0].mxu0
      %v1608 = vpop.f32.mrb[0].mxu0
      %v1609 = vadd.f32 0.0, %v1608
      %v1610 = vpop.f32.mrb[0].mxu0
      %1611 = vmatprep.mubr.bf16.mxu0 0
      %1612 = vmatmul.mubr.bf16.gmra.mrb[0].mxu0 %v432
      %v1613 = vpop.f32.mrb[0].mxu0
      %v1614 = vadd.f32 0.0, %v1613
      %v1615 = vpop.f32.mrb[0].mxu0
      %v1616 = vpop.f32.mrb[0].mxu0
      %v1617 = vadd.f32 0.0, %v1616
      %v1618 = vpop.f32.mrb[0].mxu0
      %1619 = vmatprep.mubr.bf16.mxu0 0
      %1620 = vmatmul.mubr.bf16.gmra.mrb[0].mxu0 %v1513
      %v1621 = vpop.f32.mrb[0].mxu0
      %v1622 = vadd.f32 0.0, %v1621
      %v1623 = vpop.f32.mrb[0].mxu0
      %v1624 = vpop.f32.mrb[0].mxu0
      %v1625 = vadd.f32 0.0, %v1624
      %v1626 = vpop.f32.mrb[0].mxu0
      %1627 = vdwg.mxu0
      %v1628 = vadd.f32 %v1474, %v1598
      %v1629 = vadd.f32 %v1475, %v1601
      %v1630 = vadd.f32 %v1476, %v1606
      %v1631 = vadd.f32 %v1477, %v1609
      %v1632 = vadd.f32 %v1478, %v1614
      %v1633 = vadd.f32 %v1479, %v1617
      %v1634 = vadd.f32 %v1480, %v1622
      %v1635 = vadd.f32 %v1481, %v1625
      %v1637 = vrot.slane %v272, 5
      %v1638 = vrot.slane %v1637, 4
      %v1639 = vrot.slane %v273, 5
      %v1640 = vsel %vm697, %v1638, %v1639
      %v1641 = vld [vmem:[%s231 + $0x200] sm:$0xf]
      %v1642 = vld [vmem:[%s231 + $0x204] sm:$0xf]
      %v1643 = vld [vmem:[%s231 + $0x208] sm:$0xf]
      %v1644 = vld [vmem:[%s231 + $0x20c] sm:$0xf]
      %v1645 = vld [vmem:[%s231 + $0x210] sm:$0xf]
      %v1646 = vld [vmem:[%s231 + $0x214] sm:$0xf]
      %v1647 = vld [vmem:[%s231 + $0x218] sm:$0xf]
      %v1648 = vld [vmem:[%s231 + $0x21c] sm:$0xf]
      %v1649 = vld [vmem:[%s231 + $0x220] sm:$0xf]
      %v1650 = vld [vmem:[%s231 + $0x224] sm:$0xf]
      %v1651 = vld [vmem:[%s231 + $0x228] sm:$0xf]
      %v1652 = vld [vmem:[%s231 + $0x22c] sm:$0xf]
      %v1653 = vld [vmem:[%s231 + $0x230] sm:$0xf]
      %v1654 = vld [vmem:[%s231 + $0x234] sm:$0xf]
      %v1655 = vld [vmem:[%s231 + $0x238] sm:$0xf]
      %v1656 = vld [vmem:[%s231 + $0x23c] sm:$0xf]
      %v1657 = vunpack.c.l.b16 %v1640
      %v1658 = vpack.c.b16 %v1657, %v1211
      %v1676 = vunpack.c.l.b16 %v1641
      %v1677 = vunpack.c.l.b16 %v1642
      %v1678 = vunpack.c.l.b16 %v1643
      %v1679 = vunpack.c.l.b16 %v1644
      %v1680 = vunpack.c.l.b16 %v1645
      %v1681 = vunpack.c.l.b16 %v1646
      %v1682 = vunpack.c.l.b16 %v1647
      %v1683 = vunpack.c.l.b16 %v1648
      %v1684 = vunpack.c.l.b16 %v1649
      %v1685 = vunpack.c.l.b16 %v1650
      %v1686 = vunpack.c.l.b16 %v1651
      %v1687 = vunpack.c.l.b16 %v1652
      %v1688 = vunpack.c.l.b16 %v1653
      %v1689 = vunpack.c.l.b16 %v1654
      %v1690 = vunpack.c.l.b16 %v1655
      %v1691 = vunpack.c.l.b16 %v1656
      %v1692 = vpack.c.b16 %v1677, %v1676
      %v1693 = vpack.c.b16 %v1679, %v1678
      %v1694 = vpack.c.b16 %v1681, %v1680
      %v1695 = vpack.c.b16 %v1683, %v1682
      %v1696 = vpack.c.b16 %v1685, %v1684
      %v1697 = vpack.c.b16 %v1687, %v1686
      %v1698 = vpack.c.b16 %v1689, %v1688
      %v1699 = vpack.c.b16 %v1691, %v1690
      %1708 = vmatprep.subr.bf16.mxu0 0
      %1709 = vmatpush1.bf16.msra.mxu0 %v1692
      %1710 = vmatprep.subr.bf16.mxu0 0
      %1711 = vmatpush1.bf16.msra.mxu0 %v1693
      %1712 = vmatprep.subr.bf16.mxu0 0
      %1713 = vmatpush1.bf16.msra.mxu0 %v1694
      %1714 = vmatprep.subr.bf16.mxu0 0
      %1715 = vmatpush1.bf16.msra.mxu0 %v1695
      %1716 = vmatprep.subr.bf16.mxu0 0
      %1717 = vmatpush1.bf16.msra.mxu0 %v1696
      %1718 = vmatprep.subr.bf16.mxu0 0
      %1719 = vmatpush1.bf16.msra.mxu0 %v1697
      %1720 = vmatprep.subr.bf16.mxu0 0
      %1721 = vmatpush1.bf16.msra.mxu0 %v1698
      %1722 = vmatprep.subr.bf16.mxu0 0
      %1723 = vmatpush1.bf16.msra.mxu0 %v1699
      %1724 = vmatprep.subr.bf16.mxu0 0
      %1725 = vmatpush1.bf16.msra.mxu0 0
      %1726 = vmatprep.subr.bf16.mxu0 0
      %1727 = vmatpush1.bf16.msra.mxu0 0
      %1728 = vmatprep.subr.bf16.mxu0 0
      %1729 = vmatpush1.bf16.msra.mxu0 0
      %1730 = vmatprep.subr.bf16.mxu0 0
      %1731 = vmatpush1.bf16.msra.mxu0 0
      %1732 = vmatprep.subr.bf16.mxu0 0
      %1733 = vmatpush1.bf16.msra.mxu0 0
      %1734 = vmatprep.subr.bf16.mxu0 0
      %1735 = vmatpush1.bf16.msra.mxu0 0
      %1736 = vmatprep.subr.bf16.mxu0 0
      %1737 = vmatpush1.bf16.msra.mxu0 0
      %1738 = vmatprep.subr.bf16.mxu0 0
      %1739 = vmatpush1.bf16.msra.mxu0 0
      %1740 = vmatprep.mubr.bf16.mxu0 0
      %1741 = vmatmul.mubr.bf16.gmra.mrb[0].mxu0 %v755
      %v1742 = vpop.f32.mrb[0].mxu0
      %v1743 = vadd.f32 0.0, %v1742
      %v1744 = vpop.f32.mrb[0].mxu0
      %v1745 = vpop.f32.mrb[0].mxu0
      %v1746 = vadd.f32 0.0, %v1745
      %v1747 = vpop.f32.mrb[0].mxu0
      %1748 = vmatprep.mubr.bf16.mxu0 0
      %1749 = vmatmul.mubr.bf16.gmra.mrb[0].mxu0 %v756
      %v1750 = vpop.f32.mrb[0].mxu0
      %v1751 = vadd.f32 0.0, %v1750
      %v1752 = vpop.f32.mrb[0].mxu0
      %v1753 = vpop.f32.mrb[0].mxu0
      %v1754 = vadd.f32 0.0, %v1753
      %v1755 = vpop.f32.mrb[0].mxu0
      %1756 = vmatprep.mubr.bf16.mxu0 0
      %1757 = vmatmul.mubr.bf16.gmra.mrb[0].mxu0 %v757
      %v1758 = vpop.f32.mrb[0].mxu0
      %v1759 = vadd.f32 0.0, %v1758
      %v1760 = vpop.f32.mrb[0].mxu0
      %v1761 = vpop.f32.mrb[0].mxu0
      %v1762 = vadd.f32 0.0, %v1761
      %v1763 = vpop.f32.mrb[0].mxu0
      %1764 = vmatprep.mubr.bf16.mxu0 0
      %1765 = vmatmul.mubr.bf16.gmra.mrb[0].mxu0 %v1658
      %v1766 = vpop.f32.mrb[0].mxu0
      %v1767 = vadd.f32 0.0, %v1766
      %v1768 = vpop.f32.mrb[0].mxu0
      %v1769 = vpop.f32.mrb[0].mxu0
      %v1770 = vadd.f32 0.0, %v1769
      %v1771 = vpop.f32.mrb[0].mxu0
      %1772 = vdwg.mxu0
      %v1773 = vadd.f32 %v1628, %v1743
      %v1774 = vadd.f32 %v1629, %v1746
      %v1775 = vadd.f32 %v1630, %v1751
      %v1776 = vadd.f32 %v1631, %v1754
      %v1777 = vadd.f32 %v1632, %v1759
      %v1778 = vadd.f32 %v1633, %v1762
      %v1779 = vadd.f32 %v1634, %v1767
      %v1780 = vadd.f32 %v1635, %v1770
      %v1781 = vld [vmem:[#allocation2] sm:$0xff]
      %v1782 = vld [vmem:[#allocation2 + $0x8] sm:$0xff]
      %v1783 = vld [vmem:[#allocation2 + $0x10] sm:$0xff]
      %v1784 = vld [vmem:[#allocation2 + $0x18] sm:$0xff]
      %v1785 = vld [vmem:[#allocation2 + $0x20] sm:$0xff]
      %v1786 = vld [vmem:[#allocation2 + $0x28] sm:$0xff]
      %v1787 = vld [vmem:[#allocation2 + $0x30] sm:$0xff]
      %v1788 = vld [vmem:[#allocation2 + $0x38] sm:$0xff]
      %v1789 = vadd.f32 %v1781, %v1773
      %v1790 = vadd.f32 %v1782, %v1774
      %v1791 = vadd.f32 %v1783, %v1775
      %v1792 = vadd.f32 %v1784, %v1776
      %v1793 = vadd.f32 %v1785, %v1777
      %v1794 = vadd.f32 %v1786, %v1778
      %v1795 = vadd.f32 %v1787, %v1779
      %v1796 = vadd.f32 %v1788, %v1780
      %1797 = vst [vmem:[#allocation2] sm:$0xff] %v1789
      %1798 = vst [vmem:[#allocation2 + $0x8] sm:$0xff] %v1790
      %1799 = vst [vmem:[#allocation2 + $0x10] sm:$0xff] %v1791
      %1800 = vst [vmem:[#allocation2 + $0x18] sm:$0xff] %v1792
      %1801 = vst [vmem:[#allocation2 + $0x20] sm:$0xff] %v1793
      %1802 = vst [vmem:[#allocation2 + $0x28] sm:$0xff] %v1794
      %1803 = vst [vmem:[#allocation2 + $0x30] sm:$0xff] %v1795
      %1804 = vst [vmem:[#allocation2 + $0x38] sm:$0xff] %v1796
      %p1805 = scmp.eq.s32.totalorder %s21, 2
      // Predicated region
      $region37: #{meta_block_forward.4} parent=31 // pred_check
        %p1806 = pneg %p1805
      $region38: #{meta_block_forward.4} parent=31 // pred_check_branch
        %1808 = sbr.rel (%p1806) target = $region40
      $region39: #{meta_block_forward.4} parent=31 // pred_region
        %v1809 = vld [vmem:[#allocation2] sm:$0xff]
        %v1810 = vld [vmem:[#allocation2 + $0x8] sm:$0xff]
        %v1811 = vld [vmem:[#allocation2 + $0x10] sm:$0xff]
        %v1812 = vld [vmem:[#allocation2 + $0x18] sm:$0xff]
        %v1813 = vld [vmem:[#allocation2 + $0x20] sm:$0xff]
        %v1814 = vld [vmem:[#allocation2 + $0x28] sm:$0xff]
        %v1815 = vld [vmem:[#allocation2 + $0x30] sm:$0xff]
        %v1816 = vld [vmem:[#allocation2 + $0x38] sm:$0xff]
        %v1817 = vld [vmem:[%s2] sm:$0x1]
        %v1819 = vlaneseq
        %v1820 = vshrl.u32 %v1819, 7
        %v1821 = vsub.s32 0, %v1820
        %v1822 = vrot.slane %v1817, %v1821
        %v1824 = vadd.f32 %v1809, %v1822
        %v1825 = vadd.f32 %v1810, %v1822
        %v1826 = vadd.f32 %v1811, %v1822
        %v1827 = vadd.f32 %v1812, %v1822
        %v1828 = vadd.f32 %v1813, %v1822
        %v1829 = vadd.f32 %v1814, %v1822
        %v1830 = vadd.f32 %v1815, %v1822
        %v1831 = vadd.f32 %v1816, %v1822
        %1832 = vst [vmem:[%s240] sm:$0xff] %v1824
        %1833 = vst [vmem:[%s240 + $0x8] sm:$0xff] %v1825
        %1834 = vst [vmem:[%s240 + $0x10] sm:$0xff] %v1826
        %1835 = vst [vmem:[%s240 + $0x18] sm:$0xff] %v1827
        %1836 = vst [vmem:[%s240 + $0x20] sm:$0xff] %v1828
        %1837 = vst [vmem:[%s240 + $0x28] sm:$0xff] %v1829
        %1838 = vst [vmem:[%s240 + $0x30] sm:$0xff] %v1830
        %1839 = vst [vmem:[%s240 + $0x38] sm:$0xff] %v1831
      $region40: #{meta_block_forward.4} parent=31 // pred_fallthru
        _
      %p1840 = scmp.lt.s32.totalorder %s19, 1
      %s1841 = scalar_select %p1840, %s19, 1
      %p1842 = scmp.lt.s32.totalorder %s20, 3
      %s1843 = scalar_select %p1842, %s20, 3
      %s1844 = smul.addr %s1843, 8
      %s1845 = smul.addr %s1841, 32
      %s1846 = sadd.s32 %s1844, %s1845
      %s1847 = smul.addr %s1846, 8
      %s1848 = scalar_lea.vmem %s3, %s1847
      // Predicated region
      $region41: #{meta_block_forward.4} parent=31 // pred_check
        %p1849 = pneg %p130
      $region42: #{meta_block_forward.4} parent=31 // pred_check_branch
        %1851 = sbr.rel (%p1849) target = $region44
      $region43: #{meta_block_forward.4} parent=31 // pred_region
        _
      $region44: #{meta_block_forward.4} parent=31 // pred_fallthru
        _
    $region32: #{meta_block_forward.4} parent=5 // pred_fallthru
      _
    %p1852 = scmp.le.s32.totalorder 2, %s9
    // Predicated region
    $region45: #{meta_block_forward.4} parent=5 // pred_check
      %p1853 = pneg %p1852
    $region46: #{meta_block_forward.4} parent=5 // pred_check_branch
      %1855 = sbr.rel (%p1853) target = $region48
    $region47: #{meta_block_forward.4} parent=5 // pred_region
      %s1856 = ssub.s32 %s9, 2
      // Predicated region
      $region49: #{meta_block_forward.4} parent=47 // pred_check
        %p1857 = pneg %p136
      $region50: #{meta_block_forward.4} parent=47 // pred_check_branch
        %1859 = sbr.rel (%p1857) target = $region52
      $region51: #{meta_block_forward.4} parent=47 // pred_region
        %p1860 = scmp.lt.s32.totalorder %s22, 1
        %s1861 = scalar_select %p1860, %s22, 1
        %p1862 = scmp.lt.s32.totalorder %s23, 3
        %s1863 = scalar_select %p1862, %s23, 3
        %s1864 = smul.addr %s1863, 8
        %s1865 = smul.addr %s1861, 32
        %s1866 = sadd.s32 %s1864, %s1865
        %s1867 = smul.addr %s1866, 8
        %s1868 = scalar_lea.vmem %s3, %s1867
      $region52: #{meta_block_forward.4} parent=47 // pred_fallthru
        _
    $region48: #{meta_block_forward.4} parent=5 // pred_fallthru
      _
  $region6: #{meta_block_forward.4} parent=0 // loop_footer
    %s13 = sadd.s32 1, %s9
  $region7: #{meta_block_forward.4} parent=0 // loop_footer_branch
    %8 = sbr.rel target = $region3
  $region8: #{meta_block_forward.4} parent=0 // loop_exit
    _

// kernel: meta_block_forward.3
$region0: #{meta_block_forward.3}
  #allocation0 [shape = 'u32[]', space=smem, size = 0x4, offset = 0x4, fixed_abs, tag = 'smem constant byte address 0x4 - core index']
  #allocation1 [shape = 'u32[144,128]{1,0:T(1,128)}', space=vmem, size = 0x12000, scoped, tag = 'internal scratch']
  #allocation2 [shape = 'f32[64,128]{1,0:T(8,128)}', space=vmem, size = 0x8000, scoped, tag = 'scratch operand']
  %s0 = inlined_call_operand.vmem [shape: bf16[2,6,10,10,128], index: 0, kind: input, shape index: {}]
  %s1 = inlined_call_operand.vmem [shape: bf16[3,1152,128], index: 1, kind: input, shape index: {}]
  %s2 = inlined_call_operand.vmem [shape: f32[1,128], index: 2, kind: input, shape index: {}]
  %s3 = inlined_call_operand.vmem [shape: bf16[2,4,64,128], index: 3, kind: output, shape index: {}]
  %s4 = sld [smem:[#allocation0]]
  $region53: #{meta_block_forward.3} parent=0
    _
  %s6 = ssub.s32 1, %s4
  %s7 = scalar_select 0, %s6, %s4
  loop: start=0, step=1, limit=26
  $region2: #{meta_block_forward.3} parent=0 // loop_pre_header
    _
  $region3: #{meta_block_forward.3} parent=0 // loop_header
    %s9 = sphi 0, %s13
    %p10 = scmp.ge.s32.totalorder %s9, 26
    %s16 = sphi 0, %s35
    %s17 = sphi 0, %s31
    %s18 = sphi 0, %s27
    %s19 = sphi 0, %s16
    %s20 = sphi 0, %s17
    %s21 = sphi 0, %s18
    %s22 = sphi 0, %s19
    %s23 = sphi 0, %s20
    %s24 = sphi 0, %s21
    %s42 = sphi 0, %s44
    %s45 = sphi 0, %s42
    %s46 = sphi 0, %s45
    %s62 = sphi 0, %s46
    %s68 = sphi 0, %s70
    %s71 = sphi 0, %s68
    %s72 = sphi 0, %s71
    %s88 = sphi 0, %s72
    %s92 = sphi 0, %s92
    %s94 = sphi 0, %s92
    %s95 = sphi 0, %s94
    %s109 = sphi 0, %s95
    %s117 = sphi 0, %s119
    %s120 = sphi 0, %s117
    %s121 = sphi 0, %s120
    %s137 = sphi 0, %s121
  $region4: #{meta_block_forward.3} parent=0 // loop_header_branch
    %12 = sbr.rel (%p10) target = $region8
  $region5: #{meta_block_forward.3} parent=0 // loop_body
    %s14 = ssub.s32 %s9, 1
    %s15 = ssub.s32 %s9, 2
    %s25 = sadd.s32 1, %s18
    %p26 = scmp.ge.s32.totalorder %s25, 3
    %s27 = scalar_select %p26, 0, %s25
    %s28 = sadd.s32 1, %s17
    %s29 = scalar_select %p26, %s28, %s17
    %p30 = scmp.ge.s32.totalorder %s29, 4
    %s31 = scalar_select %p30, 0, %s29
    %s32 = sadd.s32 1, %s16
    %s33 = scalar_select %p30, %s32, %s16
    %p34 = scmp.ge.s32.totalorder %s33, 2
    %s35 = scalar_select %p34, 0, %s33
    %s36 = sadd.s32 %s17, %s18
    %s37 = sadd.s32 %s31, %s27
    %s38 = ssub.s32 %s16, %s35
    %s39 = ssub.s32 %s36, %s37
    %s40 = sor.u32 %s38, %s39
    %p41 = scmp.eq.s32.totalorder %s40, 0
    %s43 = sadd.s32 %s42, 1
    %s44 = scalar_select %p41, %s42, %s43
    %p47 = pneg %p41
    %p48 = scmp.eq.s32.totalorder %s9, 23
    %p49 = por %p47, %p48
    %p50 = scmp.ne.s32.totalorder %s42, %s45
    %p51 = scmp.eq.s32.totalorder %s9, 0
    %p52 = por %p50, %p51
    %p53 = scmp.ne.s32.totalorder %s42, %s45
    %p54 = scmp.eq.s32.totalorder %s14, 23
    %p55 = por %p53, %p54
    %p56 = scmp.ne.s32.totalorder %s45, %s46
    %p57 = scmp.eq.s32.totalorder %s14, 0
    %p58 = por %p56, %p57
    %p59 = scmp.ne.s32.totalorder %s45, %s46
    %p60 = scmp.eq.s32.totalorder %s15, 23
    %p61 = por %p59, %p60
    %p63 = scmp.ne.s32.totalorder %s46, %s62
    %p64 = scmp.eq.s32.totalorder %s15, 0
    %p65 = por %p63, %p64
    %s66 = ssub.s32 %s18, %s27
    %p67 = scmp.eq.s32.totalorder %s66, 0
    %s69 = sadd.s32 %s68, 1
    %s70 = scalar_select %p67, %s68, %s69
    %p73 = pneg %p67
    %p74 = scmp.eq.s32.totalorder %s9, 23
    %p75 = por %p73, %p74
    %p76 = scmp.ne.s32.totalorder %s68, %s71
    %p77 = scmp.eq.s32.totalorder %s9, 0
    %p78 = por %p76, %p77
    %p79 = scmp.ne.s32.totalorder %s68, %s71
    %p80 = scmp.eq.s32.totalorder %s14, 23
    %p81 = por %p79, %p80
    %p82 = scmp.ne.s32.totalorder %s71, %s72
    %p83 = scmp.eq.s32.totalorder %s14, 0
    %p84 = por %p82, %p83
    %p85 = scmp.ne.s32.totalorder %s71, %s72
    %p86 = scmp.eq.s32.totalorder %s15, 23
    %p87 = por %p85, %p86
    %p89 = scmp.ne.s32.totalorder %s72, %s88
    %p90 = scmp.eq.s32.totalorder %s15, 0
    %p91 = por %p89, %p90
    %s93 = sadd.s32 %s92, 1
    %p96 = scmp.eq.s32.totalorder %s9, 23
    %p97 = scmp.ne.s32.totalorder %s92, %s94
    %p98 = scmp.eq.s32.totalorder %s9, 0
    %p99 = por %p97, %p98
    %p100 = scmp.ne.s32.totalorder %s92, %s94
    %p101 = scmp.eq.s32.totalorder %s14, 23
    %p102 = por %p100, %p101
    %p103 = scmp.ne.s32.totalorder %s94, %s95
    %p104 = scmp.eq.s32.totalorder %s14, 0
    %p105 = por %p103, %p104
    %p106 = scmp.ne.s32.totalorder %s94, %s95
    %p107 = scmp.eq.s32.totalorder %s15, 23
    %p108 = por %p106, %p107
    %p110 = scmp.ne.s32.totalorder %s95, %s109
    %p111 = scmp.eq.s32.totalorder %s15, 0
    %p112 = por %p110, %p111
    %s113 = ssub.s32 %s16, %s35
    %s114 = ssub.s32 %s17, %s31
    %s115 = sor.u32 %s113, %s114
    %p116 = scmp.eq.s32.totalorder %s115, 0
    %s118 = sadd.s32 %s117, 1
    %s119 = scalar_select %p116, %s117, %s118
    %p122 = pneg %p116
    %p123 = scmp.eq.s32.totalorder %s9, 23
    %p124 = por %p122, %p123
    %p125 = scmp.ne.s32.totalorder %s117, %s120
    %p126 = scmp.eq.s32.totalorder %s9, 0
    %p127 = por %p125, %p126
    %p128 = scmp.ne.s32.totalorder %s117, %s120
    %p129 = scmp.eq.s32.totalorder %s14, 23
    %p130 = por %p128, %p129
    %p131 = scmp.ne.s32.totalorder %s120, %s121
    %p132 = scmp.eq.s32.totalorder %s14, 0
    %p133 = por %p131, %p132
    %p134 = scmp.ne.s32.totalorder %s120, %s121
    %p135 = scmp.eq.s32.totalorder %s15, 23
    %p136 = por %p134, %p135
    %p138 = scmp.ne.s32.totalorder %s121, %s137
    %p139 = scmp.eq.s32.totalorder %s15, 0
    %p140 = por %p138, %p139
    %p141 = scmp.le.s32.totalorder 1, %s9
    %p142 = scmp.lt.s32.totalorder %s9, 25
    %p143 = pnand %p141, %p142
    %p144 = pneg %p143
    // Predicated region
    $region9: #{meta_block_forward.3} parent=5 // pred_check
      _
    $region10: #{meta_block_forward.3} parent=5 // pred_check_branch
      %146 = sbr.rel (%p143) target = $region12
    $region11: #{meta_block_forward.3} parent=5 // pred_region
      %s147 = ssub.s32 %s9, 1
      // Predicated region
      $region13: #{meta_block_forward.3} parent=11 // pred_check
        %p148 = pneg %p105
      $region14: #{meta_block_forward.3} parent=11 // pred_check_branch
        %150 = sbr.rel (%p148) target = $region16
      $region15: #{meta_block_forward.3} parent=11 // pred_region
        _
      $region16: #{meta_block_forward.3} parent=11 // pred_fallthru
        _
    $region12: #{meta_block_forward.3} parent=5 // pred_fallthru
      _
    %p151 = scmp.lt.s32.totalorder %s9, 24
    // Predicated region
    $region17: #{meta_block_forward.3} parent=5 // pred_check
      %p152 = pneg %p151
    $region18: #{meta_block_forward.3} parent=5 // pred_check_branch
      %154 = sbr.rel (%p152) target = $region20
    $region19: #{meta_block_forward.3} parent=5 // pred_region
      // Predicated region
      $region21: #{meta_block_forward.3} parent=19 // pred_check
        %p155 = pneg %p52
      $region22: #{meta_block_forward.3} parent=19 // pred_check_branch
        %157 = sbr.rel (%p155) target = $region24
      $region23: #{meta_block_forward.3} parent=19 // pred_region
        %s158 = sadd.s32 %s17, %s18
        %p159 = scmp.lt.s32.totalorder %s16, 1
        %s160 = scalar_select %p159, %s16, 1
        %p161 = scmp.lt.s32.totalorder %s158, 5
        %s162 = scalar_select %p161, %s158, 5
        %s163 = smul.addr %s162, 20
        %s164 = smul.addr %s160, 120
        %s165 = sadd.s32 %s163, %s164
        %s166 = smul.addr %s165, 4
        %s167 = scalar_lea.vmem %s0, %s166
        %s168 = sadd.s32 %s17, %s18
      $region24: #{meta_block_forward.3} parent=19 // pred_fallthru
        _
      // Predicated region
      $region25: #{meta_block_forward.3} parent=19 // pred_check
        %p169 = pneg %p78
      $region26: #{meta_block_forward.3} parent=19 // pred_check_branch
        %171 = sbr.rel (%p169) target = $region28
      $region27: #{meta_block_forward.3} parent=19 // pred_region
        %p172 = scmp.lt.s32.totalorder %s18, 2
        %s173 = scalar_select %p172, %s18, 2
        %s174 = smul.addr %s173, 144
        %s175 = smul.addr %s174, 4
        %s176 = scalar_lea.vmem %s1, %s175
      $region28: #{meta_block_forward.3} parent=19 // pred_fallthru
        _
    $region20: #{meta_block_forward.3} parent=5 // pred_fallthru
      _
    %p177 = scmp.le.s32.totalorder 1, %s9
    %p178 = scmp.lt.s32.totalorder %s9, 25
    %p179 = pnand %p177, %p178
    %p180 = pneg %p179
    // Predicated region
    $region29: #{meta_block_forward.3} parent=5 // pred_check
      _
    $region30: #{meta_block_forward.3} parent=5 // pred_check_branch
      %182 = sbr.rel (%p179) target = $region32
    $region31: #{meta_block_forward.3} parent=5 // pred_region
      %s183 = ssub.s32 %s9, 1
      %s184 = sadd.s32 %s20, %s21
      %p185 = scmp.lt.s32.totalorder %s19, 1
      %s186 = scalar_select %p185, %s19, 1
      %p187 = scmp.lt.s32.totalorder %s184, 5
      %s188 = scalar_select %p187, %s184, 5
      %s189 = smul.addr %s188, 20
      %s190 = smul.addr %s186, 120
      %s191 = sadd.s32 %s189, %s190
      %s192 = smul.addr %s191, 4
      %s193 = scalar_lea.vmem %s0, %s192
      %p194 = pneg %p58
      %p195 = pneg %p55
      %p196 = scmp.lt.s32.totalorder %s21, 2
      %s197 = scalar_select %p196, %s21, 2
      %s198 = smul.addr %s197, 144
      %s199 = smul.addr %s198, 4
      %s200 = scalar_lea.vmem %s1, %s199
      %p201 = pneg %p84
      %p202 = pneg %p81
      %p203 = pneg %p105
      %p204 = pneg %p102
      %p205 = pneg %p133
      %p206 = pneg %p130
      %p207 = scmp.lt.s32.totalorder %s19, 1
      %s208 = scalar_select %p207, %s19, 1
      %p209 = scmp.lt.s32.totalorder %s20, 3
      %s210 = scalar_select %p209, %s20, 3
      %s211 = smul.addr %s210, 8
      %s212 = smul.addr %s208, 32
      %s213 = sadd.s32 %s211, %s212
      %s214 = smul.addr %s213, 4
      %s215 = scalar_lea.vmem %s3, %s214
      %s216 = sadd.s32 %s20, %s21
      %p217 = scmp.lt.s32.totalorder %s19, 1
      %s218 = scalar_select %p217, %s19, 1
      %p219 = scmp.lt.s32.totalorder %s216, 5
      %s220 = scalar_select %p219, %s216, 5
      %s221 = smul.addr %s220, 20
      %s222 = smul.addr %s218, 120
      %s223 = sadd.s32 %s221, %s222
      %s224 = smul.addr %s223, 4
      %s225 = scalar_lea.vmem %s0, %s224
      %s226 = sadd.s32 %s20, %s21
      %p227 = scmp.lt.s32.totalorder %s21, 2
      %s228 = scalar_select %p227, %s21, 2
      %s229 = smul.addr %s228, 144
      %s230 = smul.addr %s229, 4
      %s231 = scalar_lea.vmem %s1, %s230
      %p232 = scmp.lt.s32.totalorder %s19, 1
      %s233 = scalar_select %p232, %s19, 1
      %p234 = scmp.lt.s32.totalorder %s20, 3
      %s235 = scalar_select %p234, %s20, 3
      %s236 = smul.addr %s235, 8
      %s237 = smul.addr %s233, 32
      %s238 = sadd.s32 %s236, %s237
      %s239 = smul.addr %s238, 4
      %s240 = scalar_lea.vmem %s3, %s239
      %p242 = scmp.eq.s32.totalorder %s21, 0
      // Predicated region
      $region33: #{meta_block_forward.3} parent=31 // pred_check
        %p243 = pneg %p242
      $region34: #{meta_block_forward.3} parent=31 // pred_check_branch
        %245 = sbr.rel (%p243) target = $region36
      $region35: #{meta_block_forward.3} parent=31 // pred_region
        %246 = vst [vmem:[#allocation2] sm:$0xff] 0.0
        %247 = vst [vmem:[#allocation2 + $0x8] sm:$0xff] 0.0
        %248 = vst [vmem:[#allocation2 + $0x10] sm:$0xff] 0.0
        %249 = vst [vmem:[#allocation2 + $0x18] sm:$0xff] 0.0
        %250 = vst [vmem:[#allocation2 + $0x20] sm:$0xff] 0.0
        %251 = vst [vmem:[#allocation2 + $0x28] sm:$0xff] 0.0
        %252 = vst [vmem:[#allocation2 + $0x30] sm:$0xff] 0.0
        %253 = vst [vmem:[#allocation2 + $0x38] sm:$0xff] 0.0
      $region36: #{meta_block_forward.3} parent=31 // pred_fallthru
        _
      %v254 = vld [vmem:[%s225] sm:$0xf]
      %v255 = vld [vmem:[%s225 + $0x4] sm:$0x1]
      %v256 = vld [vmem:[%s225 + $0x8] sm:$0xf]
      %v257 = vld [vmem:[%s225 + $0xc] sm:$0x1]
      %v258 = vld [vmem:[%s225 + $0x10] sm:$0xf]
      %v259 = vld [vmem:[%s225 + $0x14] sm:$0x1]
      %v260 = vld [vmem:[%s225 + $0x18] sm:$0xf]
      %v261 = vld [vmem:[%s225 + $0x1c] sm:$0x1]
      %v262 = vld [vmem:[%s225 + $0x20] sm:$0xf]
      %v263 = vld [vmem:[%s225 + $0x24] sm:$0x1]
      %v264 = vld [vmem:[%s225 + $0x28] sm:$0xf]
      %v265 = vld [vmem:[%s225 + $0x2c] sm:$0x1]
      %v266 = vld [vmem:[%s225 + $0x30] sm:$0xf]
      %v267 = vld [vmem:[%s225 + $0x34] sm:$0x1]
      %v268 = vld [vmem:[%s225 + $0x38] sm:$0xf]
      %v269 = vld [vmem:[%s225 + $0x3c] sm:$0x1]
      %v270 = vld [vmem:[%s225 + $0x40] sm:$0xf]
      %v271 = vld [vmem:[%s225 + $0x44] sm:$0x1]
      %v272 = vld [vmem:[%s225 + $0x48] sm:$0xf]
      %v273 = vld [vmem:[%s225 + $0x4c] sm:$0x1]
      %v274 = vld [vmem:[%s231] sm:$0xf]
      %v275 = vld [vmem:[%s231 + $0x4] sm:$0xf]
      %v276 = vld [vmem:[%s231 + $0x8] sm:$0xf]
      %v277 = vld [vmem:[%s231 + $0xc] sm:$0xf]
      %v278 = vld [vmem:[%s231 + $0x10] sm:$0xf]
      %v279 = vld [vmem:[%s231 + $0x14] sm:$0xf]
      %v280 = vld [vmem:[%s231 + $0x18] sm:$0xf]
      %v281 = vld [vmem:[%s231 + $0x1c] sm:$0xf]
      %v282 = vld [vmem:[%s231 + $0x20] sm:$0xf]
      %v283 = vld [vmem:[%s231 + $0x24] sm:$0xf]
      %v284 = vld [vmem:[%s231 + $0x28] sm:$0xf]
      %v285 = vld [vmem:[%s231 + $0x2c] sm:$0xf]
      %v286 = vld [vmem:[%s231 + $0x30] sm:$0xf]
      %v287 = vld [vmem:[%s231 + $0x34] sm:$0xf]
      %v288 = vld [vmem:[%s231 + $0x38] sm:$0xf]
      %v289 = vld [vmem:[%s231 + $0x3c] sm:$0xf]
      %vm290 = vsmask.f32 3328
      %vm291 = vsmask.f32 7440
      %vm292 = vmor %vm290, %vm291
      %v294 = vshrl.u32 %v254, 16
      %v296 = vrot.slane %v294, 4
      %v297 = vshll.u32 %v254, 16
      %v299 = vrot.slane %v297, 5
      %v300 = vor.u32 %v296, %v299
      %v301 = vrot.slane %v300, 4
      %v303 = vshll.u32 %v255, 16
      %v305 = vrot.slane %v303, 5
      %v306 = vsel %vm292, %v301, %v305
      %v308 = vshrl.u32 %v256, 16
      %v310 = vrot.slane %v308, 4
      %v311 = vshll.u32 %v256, 16
      %v313 = vrot.slane %v311, 5
      %v314 = vor.u32 %v310, %v313
      %v315 = vrot.slane %v314, 4
      %v317 = vshll.u32 %v257, 16
      %v319 = vrot.slane %v317, 5
      %v320 = vsel %vm292, %v315, %v319
      %v322 = vshrl.u32 %v258, 16
      %v324 = vrot.slane %v322, 4
      %v325 = vshll.u32 %v258, 16
      %v327 = vrot.slane %v325, 5
      %v328 = vor.u32 %v324, %v327
      %v329 = vrot.slane %v328, 4
      %v331 = vshll.u32 %v259, 16
      %v333 = vrot.slane %v331, 5
      %v334 = vsel %vm292, %v329, %v333
      %v336 = vshrl.u32 %v260, 16
      %v338 = vrot.slane %v336, 4
      %v339 = vshll.u32 %v260, 16
      %v341 = vrot.slane %v339, 5
      %v342 = vor.u32 %v338, %v341
      %v343 = vrot.slane %v342, 4
      %v345 = vshll.u32 %v261, 16
      %v347 = vrot.slane %v345, 5
      %v348 = vsel %vm292, %v343, %v347
      %v350 = vshrl.u32 %v262, 16
      %v352 = vrot.slane %v350, 4
      %v353 = vshll.u32 %v262, 16
      %v355 = vrot.slane %v353, 5
      %v356 = vor.u32 %v352, %v355
      %v357 = vrot.slane %v356, 4
      %v359 = vshll.u32 %v263, 16
      %v361 = vrot.slane %v359, 5
      %v362 = vsel %vm292, %v357, %v361
      %v364 = vshrl.u32 %v264, 16
      %v366 = vrot.slane %v364, 4
      %v367 = vshll.u32 %v264, 16
      %v369 = vrot.slane %v367, 5
      %v370 = vor.u32 %v366, %v369
      %v371 = vrot.slane %v370, 4
      %v373 = vshll.u32 %v265, 16
      %v375 = vrot.slane %v373, 5
      %v376 = vsel %vm292, %v371, %v375
      %v378 = vshrl.u32 %v266, 16
      %v380 = vrot.slane %v378, 4
      %v381 = vshll.u32 %v266, 16
      %v383 = vrot.slane %v381, 5
      %v384 = vor.u32 %v380, %v383
      %v385 = vrot.slane %v384, 4
      %v387 = vshll.u32 %v267, 16
      %v389 = vrot.slane %v387, 5
      %v390 = vsel %vm292, %v385, %v389
      %v392 = vshrl.u32 %v268, 16
      %v394 = vrot.slane %v392, 4
      %v395 = vshll.u32 %v268, 16
      %v397 = vrot.slane %v395, 5
      %v398 = vor.u32 %v394, %v397
      %v399 = vrot.slane %v398, 4
      %v401 = vshll.u32 %v269, 16
      %v403 = vrot.slane %v401, 5
      %v404 = vsel %vm292, %v399, %v403
      %v405 = vld [vmem:[%s231 + $0x40] sm:$0xf]
      %v406 = vld [vmem:[%s231 + $0x44] sm:$0xf]
      %v407 = vld [vmem:[%s231 + $0x48] sm:$0xf]
      %v408 = vld [vmem:[%s231 + $0x4c] sm:$0xf]
      %v409 = vld [vmem:[%s231 + $0x50] sm:$0xf]
      %v410 = vld [vmem:[%s231 + $0x54] sm:$0xf]
      %v411 = vld [vmem:[%s231 + $0x58] sm:$0xf]
      %v412 = vld [vmem:[%s231 + $0x5c] sm:$0xf]
      %v413 = vld [vmem:[%s231 + $0x60] sm:$0xf]
      %v414 = vld [vmem:[%s231 + $0x64] sm:$0xf]
      %v415 = vld [vmem:[%s231 + $0x68] sm:$0xf]
      %v416 = vld [vmem:[%s231 + $0x6c] sm:$0xf]
      %v417 = vld [vmem:[%s231 + $0x70] sm:$0xf]
      %v418 = vld [vmem:[%s231 + $0x74] sm:$0xf]
      %v419 = vld [vmem:[%s231 + $0x78] sm:$0xf]
      %v420 = vld [vmem:[%s231 + $0x7c] sm:$0xf]
      %v421 = vunpack.c.l.b16 %v306
      %v422 = vunpack.c.l.b16 %v320
      %v423 = vunpack.c.l.b16 %v334
      %v424 = vunpack.c.l.b16 %v348
      %v425 = vunpack.c.l.b16 %v362
      %v426 = vunpack.c.l.b16 %v376
      %v427 = vunpack.c.l.b16 %v390
      %v428 = vunpack.c.l.b16 %v404
      %v429 = vpack.c.b16 %v422, %v421
      %v430 = vpack.c.b16 %v424, %v423
      %v431 = vpack.c.b16 %v426, %v425
      %v432 = vpack.c.b16 %v428, %v427
      %v453 = vunpack.c.l.b16 %v405
      %v454 = vunpack.c.l.b16 %v406
      %v455 = vunpack.c.l.b16 %v407
      %v456 = vunpack.c.l.b16 %v408
      %v457 = vunpack.c.l.b16 %v409
      %v458 = vunpack.c.l.b16 %v410
      %v459 = vunpack.c.l.b16 %v411
      %v460 = vunpack.c.l.b16 %v412
      %v461 = vunpack.c.l.b16 %v413
      %v462 = vunpack.c.l.b16 %v414
      %v463 = vunpack.c.l.b16 %v415
      %v464 = vunpack.c.l.b16 %v416
      %v465 = vunpack.c.l.b16 %v417
      %v466 = vunpack.c.l.b16 %v418
      %v467 = vunpack.c.l.b16 %v419
      %v468 = vunpack.c.l.b16 %v420
      %v469 = vpack.c.b16 %v454, %v453
      %v470 = vpack.c.b16 %v456, %v455
      %v471 = vpack.c.b16 %v458, %v457
      %v472 = vpack.c.b16 %v460, %v459
      %v473 = vpack.c.b16 %v462, %v461
      %v474 = vpack.c.b16 %v464, %v463
      %v475 = vpack.c.b16 %v466, %v465
      %v476 = vpack.c.b16 %v468, %v467
      %485 = vmatprep.subr.bf16.mxu0 0
      %486 = vmatpush1.bf16.msra.mxu0 %v469
      %487 = vmatprep.subr.bf16.mxu0 0
      %488 = vmatpush1.bf16.msra.mxu0 %v470
      %489 = vmatprep.subr.bf16.mxu0 0
      %490 = vmatpush1.bf16.msra.mxu0 %v471
      %491 = vmatprep.subr.bf16.mxu0 0
      %492 = vmatpush1.bf16.msra.mxu0 %v472
      %493 = vmatprep.subr.bf16.mxu0 0
      %494 = vmatpush1.bf16.msra.mxu0 %v473
      %495 = vmatprep.subr.bf16.mxu0 0
      %496 = vmatpush1.bf16.msra.mxu0 %v474
      %497 = vmatprep.subr.bf16.mxu0 0
      %498 = vmatpush1.bf16.msra.mxu0 %v475
      %499 = vmatprep.subr.bf16.mxu0 0
      %500 = vmatpush1.bf16.msra.mxu0 %v476
      %501 = vmatprep.subr.bf16.mxu0 0
      %502 = vmatpush1.bf16.msra.mxu0 0
      %503 = vmatprep.subr.bf16.mxu0 0
      %504 = vmatpush1.bf16.msra.mxu0 0
      %505 = vmatprep.subr.bf16.mxu0 0
      %506 = vmatpush1.bf16.msra.mxu0 0
      %507 = vmatprep.subr.bf16.mxu0 0
      %508 = vmatpush1.bf16.msra.mxu0 0
      %509 = vmatprep.subr.bf16.mxu0 0
      %510 = vmatpush1.bf16.msra.mxu0 0
      %511 = vmatprep.subr.bf16.mxu0 0
      %512 = vmatpush1.bf16.msra.mxu0 0
      %513 = vmatprep.subr.bf16.mxu0 0
      %514 = vmatpush1.bf16.msra.mxu0 0
      %515 = vmatprep.subr.bf16.mxu0 0
      %516 = vmatpush1.bf16.msra.mxu0 0
      %517 = vmatprep.mubr.bf16.mxu0 0
      %518 = vmatmul.mubr.bf16.gmra.mrb[0].mxu0 %v429
      %v519 = vpop.f32.mrb[0].mxu0
      %v520 = vadd.f32 0.0, %v519
      %v521 = vpop.f32.mrb[0].mxu0
      %v522 = vpop.f32.mrb[0].mxu0
      %v523 = vadd.f32 0.0, %v522
      %v524 = vpop.f32.mrb[0].mxu0
      %525 = vmatprep.mubr.bf16.mxu0 0
      %526 = vmatmul.mubr.bf16.gmra.mrb[0].mxu0 %v430
      %v527 = vpop.f32.mrb[0].mxu0
      %v528 = vadd.f32 0.0, %v527
      %v529 = vpop.f32.mrb[0].mxu0
      %v530 = vpop.f32.mrb[0].mxu0
      %v531 = vadd.f32 0.0, %v530
      %v532 = vpop.f32.mrb[0].mxu0
      %533 = vmatprep.mubr.bf16.mxu0 0
      %534 = vmatmul.mubr.bf16.gmra.mrb[0].mxu0 %v431
      %v535 = vpop.f32.mrb[0].mxu0
      %v536 = vadd.f32 0.0, %v535
      %v537 = vpop.f32.mrb[0].mxu0
      %v538 = vpop.f32.mrb[0].mxu0
      %v539 = vadd.f32 0.0, %v538
      %v540 = vpop.f32.mrb[0].mxu0
      %541 = vmatprep.mubr.bf16.mxu0 0
      %542 = vmatmul.mubr.bf16.gmra.mrb[0].mxu0 %v432
      %v543 = vpop.f32.mrb[0].mxu0
      %v544 = vadd.f32 0.0, %v543
      %v545 = vpop.f32.mrb[0].mxu0
      %v546 = vpop.f32.mrb[0].mxu0
      %v547 = vadd.f32 0.0, %v546
      %v548 = vpop.f32.mrb[0].mxu0
      %549 = vdwg.mxu0
      %v558 = vunpack.c.l.b16 %v254
      %v559 = vunpack.c.l.b16 %v256
      %v560 = vunpack.c.l.b16 %v258
      %v561 = vunpack.c.l.b16 %v260
      %v562 = vunpack.c.l.b16 %v262
      %v563 = vunpack.c.l.b16 %v264
      %v564 = vunpack.c.l.b16 %v266
      %v565 = vunpack.c.l.b16 %v268
      %v566 = vpack.c.b16 %v559, %v558
      %v567 = vpack.c.b16 %v561, %v560
      %v568 = vpack.c.b16 %v563, %v562
      %v569 = vpack.c.b16 %v565, %v564
      %v590 = vunpack.c.l.b16 %v274
      %v591 = vunpack.c.l.b16 %v275
      %v592 = vunpack.c.l.b16 %v276
      %v593 = vunpack.c.l.b16 %v277
      %v594 = vunpack.c.l.b16 %v278
      %v595 = vunpack.c.l.b16 %v279
      %v596 = vunpack.c.l.b16 %v280
      %v597 = vunpack.c.l.b16 %v281
      %v598 = vunpack.c.l.b16 %v282
      %v599 = vunpack.c.l.b16 %v283
      %v600 = vunpack.c.l.b16 %v284
      %v601 = vunpack.c.l.b16 %v285
      %v602 = vunpack.c.l.b16 %v286
      %v603 = vunpack.c.l.b16 %v287
      %v604 = vunpack.c.l.b16 %v288
      %v605 = vunpack.c.l.b16 %v289
      %v606 = vpack.c.b16 %v591, %v590
      %v607 = vpack.c.b16 %v593, %v592
      %v608 = vpack.c.b16 %v595, %v594
      %v609 = vpack.c.b16 %v597, %v596
      %v610 = vpack.c.b16 %v599, %v598
      %v611 = vpack.c.b16 %v601, %v600
      %v612 = vpack.c.b16 %v603, %v602
      %v613 = vpack.c.b16 %v605, %v604
      %622 = vmatprep.subr.bf16.mxu0 0
      %623 = vmatpush1.bf16.msra.mxu0 %v606
      %624 = vmatprep.subr.bf16.mxu0 0
      %625 = vmatpush1.bf16.msra.mxu0 %v607
      %626 = vmatprep.subr.bf16.mxu0 0
      %627 = vmatpush1.bf16.msra.mxu0 %v608
      %628 = vmatprep.subr.bf16.mxu0 0
      %629 = vmatpush1.bf16.msra.mxu0 %v609
      %630 = vmatprep.subr.bf16.mxu0 0
      %631 = vmatpush1.bf16.msra.mxu0 %v610
      %632 = vmatprep.subr.bf16.mxu0 0
      %633 = vmatpush1.bf16.msra.mxu0 %v611
      %634 = vmatprep.subr.bf16.mxu0 0
      %635 = vmatpush1.bf16.msra.mxu0 %v612
      %636 = vmatprep.subr.bf16.mxu0 0
      %637 = vmatpush1.bf16.msra.mxu0 %v613
      %638 = vmatprep.subr.bf16.mxu0 0
      %639 = vmatpush1.bf16.msra.mxu0 0
      %640 = vmatprep.subr.bf16.mxu0 0
      %641 = vmatpush1.bf16.msra.mxu0 0
      %642 = vmatprep.subr.bf16.mxu0 0
      %643 = vmatpush1.bf16.msra.mxu0 0
      %644 = vmatprep.subr.bf16.mxu0 0
      %645 = vmatpush1.bf16.msra.mxu0 0
      %646 = vmatprep.subr.bf16.mxu0 0
      %647 = vmatpush1.bf16.msra.mxu0 0
      %648 = vmatprep.subr.bf16.mxu0 0
      %649 = vmatpush1.bf16.msra.mxu0 0
      %650 = vmatprep.subr.bf16.mxu0 0
      %651 = vmatpush1.bf16.msra.mxu0 0
      %652 = vmatprep.subr.bf16.mxu0 0
      %653 = vmatpush1.bf16.msra.mxu0 0
      %654 = vmatprep.mubr.bf16.mxu0 0
      %655 = vmatmul.mubr.bf16.gmra.mrb[0].mxu0 %v566
      %v656 = vpop.f32.mrb[0].mxu0
      %v657 = vadd.f32 %v520, %v656
      %v658 = vpop.f32.mrb[0].mxu0
      %v659 = vpop.f32.mrb[0].mxu0
      %v660 = vadd.f32 %v523, %v659
      %v661 = vpop.f32.mrb[0].mxu0
      %662 = vmatprep.mubr.bf16.mxu0 0
      %663 = vmatmul.mubr.bf16.gmra.mrb[0].mxu0 %v567
      %v664 = vpop.f32.mrb[0].mxu0
      %v665 = vadd.f32 %v528, %v664
      %v666 = vpop.f32.mrb[0].mxu0
      %v667 = vpop.f32.mrb[0].mxu0
      %v668 = vadd.f32 %v531, %v667
      %v669 = vpop.f32.mrb[0].mxu0
      %670 = vmatprep.mubr.bf16.mxu0 0
      %671 = vmatmul.mubr.bf16.gmra.mrb[0].mxu0 %v568
      %v672 = vpop.f32.mrb[0].mxu0
      %v673 = vadd.f32 %v536, %v672
      %v674 = vpop.f32.mrb[0].mxu0
      %v675 = vpop.f32.mrb[0].mxu0
      %v676 = vadd.f32 %v539, %v675
      %v677 = vpop.f32.mrb[0].mxu0
      %678 = vmatprep.mubr.bf16.mxu0 0
      %679 = vmatmul.mubr.bf16.gmra.mrb[0].mxu0 %v569
      %v680 = vpop.f32.mrb[0].mxu0
      %v681 = vadd.f32 %v544, %v680
      %v682 = vpop.f32.mrb[0].mxu0
      %v683 = vpop.f32.mrb[0].mxu0
      %v684 = vadd.f32 %v547, %v683
      %v685 = vpop.f32.mrb[0].mxu0
      %686 = vdwg.mxu0
      %vm695 = vcmask 1042432
      %vm696 = vcmask 1046532
      %vm697 = vmor %vm695, %vm696
      %v698 = vrot.slane %v254, 5
      %v699 = vrot.slane %v698, 4
      %v700 = vrot.slane %v255, 5
      %v701 = vsel %vm697, %v699, %v700
      %v702 = vrot.slane %v256, 5
      %v703 = vrot.slane %v702, 4
      %v704 = vrot.slane %v257, 5
      %v705 = vsel %vm697, %v703, %v704
      %v706 = vrot.slane %v258, 5
      %v707 = vrot.slane %v706, 4
      %v708 = vrot.slane %v259, 5
      %v709 = vsel %vm697, %v707, %v708
      %v710 = vrot.slane %v260, 5
      %v711 = vrot.slane %v710, 4
      %v712 = vrot.slane %v261, 5
      %v713 = vsel %vm697, %v711, %v712
      %v714 = vrot.slane %v262, 5
      %v715 = vrot.slane %v714, 4
      %v716 = vrot.slane %v263, 5
      %v717 = vsel %vm697, %v715, %v716
      %v718 = vrot.slane %v264, 5
      %v719 = vrot.slane %v718, 4
      %v720 = vrot.slane %v265, 5
      %v721 = vsel %vm697, %v719, %v720
      %v722 = vrot.slane %v266, 5
      %v723 = vrot.slane %v722, 4
      %v724 = vrot.slane %v267, 5
      %v725 = vsel %vm697, %v723, %v724
      %v726 = vrot.slane %v268, 5
      %v727 = vrot.slane %v726, 4
      %v728 = vrot.slane %v269, 5
      %v729 = vsel %vm697, %v727, %v728
      %v730 = vld [vmem:[%s231 + $0x80] sm:$0xf]
      %v731 = vld [vmem:[%s231 + $0x84] sm:$0xf]
      %v732 = vld [vmem:[%s231 + $0x88] sm:$0xf]
      %v733 = vld [vmem:[%s231 + $0x8c] sm:$0xf]
      %v734 = vld [vmem:[%s231 + $0x90] sm:$0xf]
      %v735 = vld [vmem:[%s231 + $0x94] sm:$0xf]
      %v736 = vld [vmem:[%s231 + $0x98] sm:$0xf]
      %v737 = vld [vmem:[%s231 + $0x9c] sm:$0xf]
      %v738 = vld [vmem:[%s231 + $0xa0] sm:$0xf]
      %v739 = vld [vmem:[%s231 + $0xa4] sm:$0xf]
      %v740 = vld [vmem:[%s231 + $0xa8] sm:$0xf]
      %v741 = vld [vmem:[%s231 + $0xac] sm:$0xf]
      %v742 = vld [vmem:[%s231 + $0xb0] sm:$0xf]
      %v743 = vld [vmem:[%s231 + $0xb4] sm:$0xf]
      %v744 = vld [vmem:[%s231 + $0xb8] sm:$0xf]
      %v745 = vld [vmem:[%s231 + $0xbc] sm:$0xf]
      %v746 = vunpack.c.l.b16 %v701
      %v747 = vunpack.c.l.b16 %v705
      %v748 = vunpack.c.l.b16 %v709
      %v749 = vunpack.c.l.b16 %v713
      %v750 = vunpack.c.l.b16 %v717
      %v751 = vunpack.c.l.b16 %v721
      %v752 = vunpack.c.l.b16 %v725
      %v753 = vunpack.c.l.b16 %v729
      %v754 = vpack.c.b16 %v747, %v746
      %v755 = vpack.c.b16 %v749, %v748
      %v756 = vpack.c.b16 %v751, %v750
      %v757 = vpack.c.b16 %v753, %v752
      %v778 = vunpack.c.l.b16 %v730
      %v779 = vunpack.c.l.b16 %v731
      %v780 = vunpack.c.l.b16 %v732
      %v781 = vunpack.c.l.b16 %v733
      %v782 = vunpack.c.l.b16 %v734
      %v783 = vunpack.c.l.b16 %v735
      %v784 = vunpack.c.l.b16 %v736
      %v785 = vunpack.c.l.b16 %v737
      %v786 = vunpack.c.l.b16 %v738
      %v787 = vunpack.c.l.b16 %v739
      %v788 = vunpack.c.l.b16 %v740
      %v789 = vunpack.c.l.b16 %v741
      %v790 = vunpack.c.l.b16 %v742
      %v791 = vunpack.c.l.b16 %v743
      %v792 = vunpack.c.l.b16 %v744
      %v793 = vunpack.c.l.b16 %v745
      %v794 = vpack.c.b16 %v779, %v778
      %v795 = vpack.c.b16 %v781, %v780
      %v796 = vpack.c.b16 %v783, %v782
      %v797 = vpack.c.b16 %v785, %v784
      %v798 = vpack.c.b16 %v787, %v786
      %v799 = vpack.c.b16 %v789, %v788
      %v800 = vpack.c.b16 %v791, %v790
      %v801 = vpack.c.b16 %v793, %v792
      %810 = vmatprep.subr.bf16.mxu0 0
      %811 = vmatpush1.bf16.msra.mxu0 %v794
      %812 = vmatprep.subr.bf16.mxu0 0
      %813 = vmatpush1.bf16.msra.mxu0 %v795
      %814 = vmatprep.subr.bf16.mxu0 0
      %815 = vmatpush1.bf16.msra.mxu0 %v796
      %816 = vmatprep.subr.bf16.mxu0 0
      %817 = vmatpush1.bf16.msra.mxu0 %v797
      %818 = vmatprep.subr.bf16.mxu0 0
      %819 = vmatpush1.bf16.msra.mxu0 %v798
      %820 = vmatprep.subr.bf16.mxu0 0
      %821 = vmatpush1.bf16.msra.mxu0 %v799
      %822 = vmatprep.subr.bf16.mxu0 0
      %823 = vmatpush1.bf16.msra.mxu0 %v800
      %824 = vmatprep.subr.bf16.mxu0 0
      %825 = vmatpush1.bf16.msra.mxu0 %v801
      %826 = vmatprep.subr.bf16.mxu0 0
      %827 = vmatpush1.bf16.msra.mxu0 0
      %828 = vmatprep.subr.bf16.mxu0 0
      %829 = vmatpush1.bf16.msra.mxu0 0
      %830 = vmatprep.subr.bf16.mxu0 0
      %831 = vmatpush1.bf16.msra.mxu0 0
      %832 = vmatprep.subr.bf16.mxu0 0
      %833 = vmatpush1.bf16.msra.mxu0 0
      %834 = vmatprep.subr.bf16.mxu0 0
      %835 = vmatpush1.bf16.msra.mxu0 0
      %836 = vmatprep.subr.bf16.mxu0 0
      %837 = vmatpush1.bf16.msra.mxu0 0
      %838 = vmatprep.subr.bf16.mxu0 0
      %839 = vmatpush1.bf16.msra.mxu0 0
      %840 = vmatprep.subr.bf16.mxu0 0
      %841 = vmatpush1.bf16.msra.mxu0 0
      %842 = vmatprep.mubr.bf16.mxu0 0
      %843 = vmatmul.mubr.bf16.gmra.mrb[0].mxu0 %v754
      %v844 = vpop.f32.mrb[0].mxu0
      %v845 = vadd.f32 0.0, %v844
      %v846 = vpop.f32.mrb[0].mxu0
      %v847 = vpop.f32.mrb[0].mxu0
      %v848 = vadd.f32 0.0, %v847
      %v849 = vpop.f32.mrb[0].mxu0
      %850 = vmatprep.mubr.bf16.mxu0 0
      %851 = vmatmul.mubr.bf16.gmra.mrb[0].mxu0 %v755
      %v852 = vpop.f32.mrb[0].mxu0
      %v853 = vadd.f32 0.0, %v852
      %v854 = vpop.f32.mrb[0].mxu0
      %v855 = vpop.f32.mrb[0].mxu0
      %v856 = vadd.f32 0.0, %v855
      %v857 = vpop.f32.mrb[0].mxu0
      %858 = vmatprep.mubr.bf16.mxu0 0
      %859 = vmatmul.mubr.bf16.gmra.mrb[0].mxu0 %v756
      %v860 = vpop.f32.mrb[0].mxu0
      %v861 = vadd.f32 0.0, %v860
      %v862 = vpop.f32.mrb[0].mxu0
      %v863 = vpop.f32.mrb[0].mxu0
      %v864 = vadd.f32 0.0, %v863
      %v865 = vpop.f32.mrb[0].mxu0
      %866 = vmatprep.mubr.bf16.mxu0 0
      %867 = vmatmul.mubr.bf16.gmra.mrb[0].mxu0 %v757
      %v868 = vpop.f32.mrb[0].mxu0
      %v869 = vadd.f32 0.0, %v868
      %v870 = vpop.f32.mrb[0].mxu0
      %v871 = vpop.f32.mrb[0].mxu0
      %v872 = vadd.f32 0.0, %v871
      %v873 = vpop.f32.mrb[0].mxu0
      %874 = vdwg.mxu0
      %v875 = vadd.f32 %v657, %v845
      %v876 = vadd.f32 %v660, %v848
      %v877 = vadd.f32 %v665, %v853
      %v878 = vadd.f32 %v668, %v856
      %v879 = vadd.f32 %v673, %v861
      %v880 = vadd.f32 %v676, %v864
      %v881 = vadd.f32 %v681, %v869
      %v882 = vadd.f32 %v684, %v872
      %v883 = vld [vmem:[%s231 + $0xc0] sm:$0xf]
      %v884 = vld [vmem:[%s231 + $0xc4] sm:$0xf]
      %v885 = vld [vmem:[%s231 + $0xc8] sm:$0xf]
      %v886 = vld [vmem:[%s231 + $0xcc] sm:$0xf]
      %v887 = vld [vmem:[%s231 + $0xd0] sm:$0xf]
      %v888 = vld [vmem:[%s231 + $0xd4] sm:$0xf]
      %v889 = vld [vmem:[%s231 + $0xd8] sm:$0xf]
      %v890 = vld [vmem:[%s231 + $0xdc] sm:$0xf]
      %v891 = vld [vmem:[%s231 + $0xe0] sm:$0xf]
      %v892 = vld [vmem:[%s231 + $0xe4] sm:$0xf]
      %v893 = vld [vmem:[%s231 + $0xe8] sm:$0xf]
      %v894 = vld [vmem:[%s231 + $0xec] sm:$0xf]
      %v895 = vld [vmem:[%s231 + $0xf0] sm:$0xf]
      %v896 = vld [vmem:[%s231 + $0xf4] sm:$0xf]
      %v897 = vld [vmem:[%s231 + $0xf8] sm:$0xf]
      %v898 = vld [vmem:[%s231 + $0xfc] sm:$0xf]
      %v900 = vunpack.c.l.b16 %v270
      %v901 = vpack.c.b16 %v560, %v559
      %v902 = vpack.c.b16 %v562, %v561
      %v903 = vpack.c.b16 %v564, %v563
      %v904 = vpack.c.b16 %v900, %v565
      %v925 = vunpack.c.l.b16 %v883
      %v926 = vunpack.c.l.b16 %v884
      %v927 = vunpack.c.l.b16 %v885
      %v928 = vunpack.c.l.b16 %v886
      %v929 = vunpack.c.l.b16 %v887
      %v930 = vunpack.c.l.b16 %v888
      %v931 = vunpack.c.l.b16 %v889
      %v932 = vunpack.c.l.b16 %v890
      %v933 = vunpack.c.l.b16 %v891
      %v934 = vunpack.c.l.b16 %v892
      %v935 = vunpack.c.l.b16 %v893
      %v936 = vunpack.c.l.b16 %v894
      %v937 = vunpack.c.l.b16 %v895
      %v938 = vunpack.c.l.b16 %v896
      %v939 = vunpack.c.l.b16 %v897
      %v940 = vunpack.c.l.b16 %v898
      %v941 = vpack.c.b16 %v926, %v925
      %v942 = vpack.c.b16 %v928, %v927
      %v943 = vpack.c.b16 %v930, %v929
      %v944 = vpack.c.b16 %v932, %v931
      %v945 = vpack.c.b16 %v934, %v933
      %v946 = vpack.c.b16 %v936, %v935
      %v947 = vpack.c.b16 %v938, %v937
      %v948 = vpack.c.b16 %v940, %v939
      %957 = vmatprep.subr.bf16.mxu0 0
      %958 = vmatpush1.bf16.msra.mxu0 %v941
      %959 = vmatprep.subr.bf16.mxu0 0
      %960 = vmatpush1.bf16.msra.mxu0 %v942
      %961 = vmatprep.subr.bf16.mxu0 0
      %962 = vmatpush1.bf16.msra.mxu0 %v943
      %963 = vmatprep.subr.bf16.mxu0 0
      %964 = vmatpush1.bf16.msra.mxu0 %v944
      %965 = vmatprep.subr.bf16.mxu0 0
      %966 = vmatpush1.bf16.msra.mxu0 %v945
      %967 = vmatprep.subr.bf16.mxu0 0
      %968 = vmatpush1.bf16.msra.mxu0 %v946
      %969 = vmatprep.subr.bf16.mxu0 0
      %970 = vmatpush1.bf16.msra.mxu0 %v947
      %971 = vmatprep.subr.bf16.mxu0 0
      %972 = vmatpush1.bf16.msra.mxu0 %v948
      %973 = vmatprep.subr.bf16.mxu0 0
      %974 = vmatpush1.bf16.msra.mxu0 0
      %975 = vmatprep.subr.bf16.mxu0 0
      %976 = vmatpush1.bf16.msra.mxu0 0
      %977 = vmatprep.subr.bf16.mxu0 0
      %978 = vmatpush1.bf16.msra.mxu0 0
      %979 = vmatprep.subr.bf16.mxu0 0
      %980 = vmatpush1.bf16.msra.mxu0 0
      %981 = vmatprep.subr.bf16.mxu0 0
      %982 = vmatpush1.bf16.msra.mxu0 0
      %983 = vmatprep.subr.bf16.mxu0 0
      %984 = vmatpush1.bf16.msra.mxu0 0
      %985 = vmatprep.subr.bf16.mxu0 0
      %986 = vmatpush1.bf16.msra.mxu0 0
      %987 = vmatprep.subr.bf16.mxu0 0
      %988 = vmatpush1.bf16.msra.mxu0 0
      %989 = vmatprep.mubr.bf16.mxu0 0
      %990 = vmatmul.mubr.bf16.gmra.mrb[0].mxu0 %v901
      %v991 = vpop.f32.mrb[0].mxu0
      %v992 = vadd.f32 0.0, %v991
      %v993 = vpop.f32.mrb[0].mxu0
      %v994 = vpop.f32.mrb[0].mxu0
      %v995 = vadd.f32 0.0, %v994
      %v996 = vpop.f32.mrb[0].mxu0
      %997 = vmatprep.mubr.bf16.mxu0 0
      %998 = vmatmul.mubr.bf16.gmra.mrb[0].mxu0 %v902
      %v999 = vpop.f32.mrb[0].mxu0
      %v1000 = vadd.f32 0.0, %v999
      %v1001 = vpop.f32.mrb[0].mxu0
      %v1002 = vpop.f32.mrb[0].mxu0
      %v1003 = vadd.f32 0.0, %v1002
      %v1004 = vpop.f32.mrb[0].mxu0
      %1005 = vmatprep.mubr.bf16.mxu0 0
      %1006 = vmatmul.mubr.bf16.gmra.mrb[0].mxu0 %v903
      %v1007 = vpop.f32.mrb[0].mxu0
      %v1008 = vadd.f32 0.0, %v1007
      %v1009 = vpop.f32.mrb[0].mxu0
      %v1010 = vpop.f32.mrb[0].mxu0
      %v1011 = vadd.f32 0.0, %v1010
      %v1012 = vpop.f32.mrb[0].mxu0
      %1013 = vmatprep.mubr.bf16.mxu0 0
      %1014 = vmatmul.mubr.bf16.gmra.mrb[0].mxu0 %v904
      %v1015 = vpop.f32.mrb[0].mxu0
      %v1016 = vadd.f32 0.0, %v1015
      %v1017 = vpop.f32.mrb[0].mxu0
      %v1018 = vpop.f32.mrb[0].mxu0
      %v1019 = vadd.f32 0.0, %v1018
      %v1020 = vpop.f32.mrb[0].mxu0
      %1021 = vdwg.mxu0
      %v1022 = vadd.f32 %v875, %v992
      %v1023 = vadd.f32 %v876, %v995
      %v1024 = vadd.f32 %v877, %v1000
      %v1025 = vadd.f32 %v878, %v1003
      %v1026 = vadd.f32 %v879, %v1008
      %v1027 = vadd.f32 %v880, %v1011
      %v1028 = vadd.f32 %v881, %v1016
      %v1029 = vadd.f32 %v882, %v1019
      %v1031 = vshrl.u32 %v270, 16
      %v1033 = vrot.slane %v1031, 4
      %v1034 = vshll.u32 %v270, 16
      %v1036 = vrot.slane %v1034, 5
      %v1037 = vor.u32 %v1033, %v1036
      %v1038 = vrot.slane %v1037, 4
      %v1040 = vshll.u32 %v271, 16
      %v1042 = vrot.slane %v1040, 5
      %v1043 = vsel %vm292, %v1038, %v1042
      %v1044 = vld [vmem:[%s231 + $0x100] sm:$0xf]
      %v1045 = vld [vmem:[%s231 + $0x104] sm:$0xf]
      %v1046 = vld [vmem:[%s231 + $0x108] sm:$0xf]
      %v1047 = vld [vmem:[%s231 + $0x10c] sm:$0xf]
      %v1048 = vld [vmem:[%s231 + $0x110] sm:$0xf]
      %v1049 = vld [vmem:[%s231 + $0x114] sm:$0xf]
      %v1050 = vld [vmem:[%s231 + $0x118] sm:$0xf]
      %v1051 = vld [vmem:[%s231 + $0x11c] sm:$0xf]
      %v1052 = vld [vmem:[%s231 + $0x120] sm:$0xf]
      %v1053 = vld [vmem:[%s231 + $0x124] sm:$0xf]
      %v1054 = vld [vmem:[%s231 + $0x128] sm:$0xf]
      %v1055 = vld [vmem:[%s231 + $0x12c] sm:$0xf]
      %v1056 = vld [vmem:[%s231 + $0x130] sm:$0xf]
      %v1057 = vld [vmem:[%s231 + $0x134] sm:$0xf]
      %v1058 = vld [vmem:[%s231 + $0x138] sm:$0xf]
      %v1059 = vld [vmem:[%s231 + $0x13c] sm:$0xf]
      %v1060 = vunpack.c.l.b16 %v1043
      %v1061 = vpack.c.b16 %v423, %v422
      %v1062 = vpack.c.b16 %v425, %v424
      %v1063 = vpack.c.b16 %v427, %v426
      %v1064 = vpack.c.b16 %v1060, %v428
      %v1085 = vunpack.c.l.b16 %v1044
      %v1086 = vunpack.c.l.b16 %v1045
      %v1087 = vunpack.c.l.b16 %v1046
      %v1088 = vunpack.c.l.b16 %v1047
      %v1089 = vunpack.c.l.b16 %v1048
      %v1090 = vunpack.c.l.b16 %v1049
      %v1091 = vunpack.c.l.b16 %v1050
      %v1092 = vunpack.c.l.b16 %v1051
      %v1093 = vunpack.c.l.b16 %v1052
      %v1094 = vunpack.c.l.b16 %v1053
      %v1095 = vunpack.c.l.b16 %v1054
      %v1096 = vunpack.c.l.b16 %v1055
      %v1097 = vunpack.c.l.b16 %v1056
      %v1098 = vunpack.c.l.b16 %v1057
      %v1099 = vunpack.c.l.b16 %v1058
      %v1100 = vunpack.c.l.b16 %v1059
      %v1101 = vpack.c.b16 %v1086, %v1085
      %v1102 = vpack.c.b16 %v1088, %v1087
      %v1103 = vpack.c.b16 %v1090, %v1089
      %v1104 = vpack.c.b16 %v1092, %v1091
      %v1105 = vpack.c.b16 %v1094, %v1093
      %v1106 = vpack.c.b16 %v1096, %v1095
      %v1107 = vpack.c.b16 %v1098, %v1097
      %v1108 = vpack.c.b16 %v1100, %v1099
      %1117 = vmatprep.subr.bf16.mxu0 0
      %1118 = vmatpush1.bf16.msra.mxu0 %v1101
      %1119 = vmatprep.subr.bf16.mxu0 0
      %1120 = vmatpush1.bf16.msra.mxu0 %v1102
      %1121 = vmatprep.subr.bf16.mxu0 0
      %1122 = vmatpush1.bf16.msra.mxu0 %v1103
      %1123 = vmatprep.subr.bf16.mxu0 0
      %1124 = vmatpush1.bf16.msra.mxu0 %v1104
      %1125 = vmatprep.subr.bf16.mxu0 0
      %1126 = vmatpush1.bf16.msra.mxu0 %v1105
      %1127 = vmatprep.subr.bf16.mxu0 0
      %1128 = vmatpush1.bf16.msra.mxu0 %v1106
      %1129 = vmatprep.subr.bf16.mxu0 0
      %1130 = vmatpush1.bf16.msra.mxu0 %v1107
      %1131 = vmatprep.subr.bf16.mxu0 0
      %1132 = vmatpush1.bf16.msra.mxu0 %v1108
      %1133 = vmatprep.subr.bf16.mxu0 0
      %1134 = vmatpush1.bf16.msra.mxu0 0
      %1135 = vmatprep.subr.bf16.mxu0 0
      %1136 = vmatpush1.bf16.msra.mxu0 0
      %1137 = vmatprep.subr.bf16.mxu0 0
      %1138 = vmatpush1.bf16.msra.mxu0 0
      %1139 = vmatprep.subr.bf16.mxu0 0
      %1140 = vmatpush1.bf16.msra.mxu0 0
      %1141 = vmatprep.subr.bf16.mxu0 0
      %1142 = vmatpush1.bf16.msra.mxu0 0
      %1143 = vmatprep.subr.bf16.mxu0 0
      %1144 = vmatpush1.bf16.msra.mxu0 0
      %1145 = vmatprep.subr.bf16.mxu0 0
      %1146 = vmatpush1.bf16.msra.mxu0 0
      %1147 = vmatprep.subr.bf16.mxu0 0
      %1148 = vmatpush1.bf16.msra.mxu0 0
      %1149 = vmatprep.mubr.bf16.mxu0 0
      %1150 = vmatmul.mubr.bf16.gmra.mrb[0].mxu0 %v1061
      %v1151 = vpop.f32.mrb[0].mxu0
      %v1152 = vadd.f32 0.0, %v1151
      %v1153 = vpop.f32.mrb[0].mxu0
      %v1154 = vpop.f32.mrb[0].mxu0
      %v1155 = vadd.f32 0.0, %v1154
      %v1156 = vpop.f32.mrb[0].mxu0
      %1157 = vmatprep.mubr.bf16.mxu0 0
      %1158 = vmatmul.mubr.bf16.gmra.mrb[0].mxu0 %v1062
      %v1159 = vpop.f32.mrb[0].mxu0
      %v1160 = vadd.f32 0.0, %v1159
      %v1161 = vpop.f32.mrb[0].mxu0
      %v1162 = vpop.f32.mrb[0].mxu0
      %v1163 = vadd.f32 0.0, %v1162
      %v1164 = vpop.f32.mrb[0].mxu0
      %1165 = vmatprep.mubr.bf16.mxu0 0
      %1166 = vmatmul.mubr.bf16.gmra.mrb[0].mxu0 %v1063
      %v1167 = vpop.f32.mrb[0].mxu0
      %v1168 = vadd.f32 0.0, %v1167
      %v1169 = vpop.f32.mrb[0].mxu0
      %v1170 = vpop.f32.mrb[0].mxu0
      %v1171 = vadd.f32 0.0, %v1170
      %v1172 = vpop.f32.mrb[0].mxu0
      %1173 = vmatprep.mubr.bf16.mxu0 0
      %1174 = vmatmul.mubr.bf16.gmra.mrb[0].mxu0 %v1064
      %v1175 = vpop.f32.mrb[0].mxu0
      %v1176 = vadd.f32 0.0, %v1175
      %v1177 = vpop.f32.mrb[0].mxu0
      %v1178 = vpop.f32.mrb[0].mxu0
      %v1179 = vadd.f32 0.0, %v1178
      %v1180 = vpop.f32.mrb[0].mxu0
      %1181 = vdwg.mxu0
      %v1182 = vadd.f32 %v1022, %v1152
      %v1183 = vadd.f32 %v1023, %v1155
      %v1184 = vadd.f32 %v1024, %v1160
      %v1185 = vadd.f32 %v1025, %v1163
      %v1186 = vadd.f32 %v1026, %v1168
      %v1187 = vadd.f32 %v1027, %v1171
      %v1188 = vadd.f32 %v1028, %v1176
      %v1189 = vadd.f32 %v1029, %v1179
      %v1191 = vrot.slane %v270, 5
      %v1192 = vrot.slane %v1191, 4
      %v1193 = vrot.slane %v271, 5
      %v1194 = vsel %vm697, %v1192, %v1193
      %v1195 = vld [vmem:[%s231 + $0x140] sm:$0xf]
      %v1196 = vld [vmem:[%s231 + $0x144] sm:$0xf]
      %v1197 = vld [vmem:[%s231 + $0x148] sm:$0xf]
      %v1198 = vld [vmem:[%s231 + $0x14c] sm:$0xf]
      %v1199 = vld [vmem:[%s231 + $0x150] sm:$0xf]
      %v1200 = vld [vmem:[%s231 + $0x154] sm:$0xf]
      %v1201 = vld [vmem:[%s231 + $0x158] sm:$0xf]
      %v1202 = vld [vmem:[%s231 + $0x15c] sm:$0xf]
      %v1203 = vld [vmem:[%s231 + $0x160] sm:$0xf]
      %v1204 = vld [vmem:[%s231 + $0x164] sm:$0xf]
      %v1205 = vld [vmem:[%s231 + $0x168] sm:$0xf]
      %v1206 = vld [vmem:[%s231 + $0x16c] sm:$0xf]
      %v1207 = vld [vmem:[%s231 + $0x170] sm:$0xf]
      %v1208 = vld [vmem:[%s231 + $0x174] sm:$0xf]
      %v1209 = vld [vmem:[%s231 + $0x178] sm:$0xf]
      %v1210 = vld [vmem:[%s231 + $0x17c] sm:$0xf]
      %v1211 = vunpack.c.l.b16 %v1194
      %v1212 = vpack.c.b16 %v748, %v747
      %v1213 = vpack.c.b16 %v750, %v749
      %v1214 = vpack.c.b16 %v752, %v751
      %v1215 = vpack.c.b16 %v1211, %v753
      %v1236 = vunpack.c.l.b16 %v1195
      %v1237 = vunpack.c.l.b16 %v1196
      %v1238 = vunpack.c.l.b16 %v1197
      %v1239 = vunpack.c.l.b16 %v1198
      %v1240 = vunpack.c.l.b16 %v1199
      %v1241 = vunpack.c.l.b16 %v1200
      %v1242 = vunpack.c.l.b16 %v1201
      %v1243 = vunpack.c.l.b16 %v1202
      %v1244 = vunpack.c.l.b16 %v1203
      %v1245 = vunpack.c.l.b16 %v1204
      %v1246 = vunpack.c.l.b16 %v1205
      %v1247 = vunpack.c.l.b16 %v1206
      %v1248 = vunpack.c.l.b16 %v1207
      %v1249 = vunpack.c.l.b16 %v1208
      %v1250 = vunpack.c.l.b16 %v1209
      %v1251 = vunpack.c.l.b16 %v1210
      %v1252 = vpack.c.b16 %v1237, %v1236
      %v1253 = vpack.c.b16 %v1239, %v1238
      %v1254 = vpack.c.b16 %v1241, %v1240
      %v1255 = vpack.c.b16 %v1243, %v1242
      %v1256 = vpack.c.b16 %v1245, %v1244
      %v1257 = vpack.c.b16 %v1247, %v1246
      %v1258 = vpack.c.b16 %v1249, %v1248
      %v1259 = vpack.c.b16 %v1251, %v1250
      %1268 = vmatprep.subr.bf16.mxu0 0
      %1269 = vmatpush1.bf16.msra.mxu0 %v1252
      %1270 = vmatprep.subr.bf16.mxu0 0
      %1271 = vmatpush1.bf16.msra.mxu0 %v1253
      %1272 = vmatprep.subr.bf16.mxu0 0
      %1273 = vmatpush1.bf16.msra.mxu0 %v1254
      %1274 = vmatprep.subr.bf16.mxu0 0
      %1275 = vmatpush1.bf16.msra.mxu0 %v1255
      %1276 = vmatprep.subr.bf16.mxu0 0
      %1277 = vmatpush1.bf16.msra.mxu0 %v1256
      %1278 = vmatprep.subr.bf16.mxu0 0
      %1279 = vmatpush1.bf16.msra.mxu0 %v1257
      %1280 = vmatprep.subr.bf16.mxu0 0
      %1281 = vmatpush1.bf16.msra.mxu0 %v1258
      %1282 = vmatprep.subr.bf16.mxu0 0
      %1283 = vmatpush1.bf16.msra.mxu0 %v1259
      %1284 = vmatprep.subr.bf16.mxu0 0
      %1285 = vmatpush1.bf16.msra.mxu0 0
      %1286 = vmatprep.subr.bf16.mxu0 0
      %1287 = vmatpush1.bf16.msra.mxu0 0
      %1288 = vmatprep.subr.bf16.mxu0 0
      %1289 = vmatpush1.bf16.msra.mxu0 0
      %1290 = vmatprep.subr.bf16.mxu0 0
      %1291 = vmatpush1.bf16.msra.mxu0 0
      %1292 = vmatprep.subr.bf16.mxu0 0
      %1293 = vmatpush1.bf16.msra.mxu0 0
      %1294 = vmatprep.subr.bf16.mxu0 0
      %1295 = vmatpush1.bf16.msra.mxu0 0
      %1296 = vmatprep.subr.bf16.mxu0 0
      %1297 = vmatpush1.bf16.msra.mxu0 0
      %1298 = vmatprep.subr.bf16.mxu0 0
      %1299 = vmatpush1.bf16.msra.mxu0 0
      %1300 = vmatprep.mubr.bf16.mxu0 0
      %1301 = vmatmul.mubr.bf16.gmra.mrb[0].mxu0 %v1212
      %v1302 = vpop.f32.mrb[0].mxu0
      %v1303 = vadd.f32 0.0, %v1302
      %v1304 = vpop.f32.mrb[0].mxu0
      %v1305 = vpop.f32.mrb[0].mxu0
      %v1306 = vadd.f32 0.0, %v1305
      %v1307 = vpop.f32.mrb[0].mxu0
      %1308 = vmatprep.mubr.bf16.mxu0 0
      %1309 = vmatmul.mubr.bf16.gmra.mrb[0].mxu0 %v1213
      %v1310 = vpop.f32.mrb[0].mxu0
      %v1311 = vadd.f32 0.0, %v1310
      %v1312 = vpop.f32.mrb[0].mxu0
      %v1313 = vpop.f32.mrb[0].mxu0
      %v1314 = vadd.f32 0.0, %v1313
      %v1315 = vpop.f32.mrb[0].mxu0
      %1316 = vmatprep.mubr.bf16.mxu0 0
      %1317 = vmatmul.mubr.bf16.gmra.mrb[0].mxu0 %v1214
      %v1318 = vpop.f32.mrb[0].mxu0
      %v1319 = vadd.f32 0.0, %v1318
      %v1320 = vpop.f32.mrb[0].mxu0
      %v1321 = vpop.f32.mrb[0].mxu0
      %v1322 = vadd.f32 0.0, %v1321
      %v1323 = vpop.f32.mrb[0].mxu0
      %1324 = vmatprep.mubr.bf16.mxu0 0
      %1325 = vmatmul.mubr.bf16.gmra.mrb[0].mxu0 %v1215
      %v1326 = vpop.f32.mrb[0].mxu0
      %v1327 = vadd.f32 0.0, %v1326
      %v1328 = vpop.f32.mrb[0].mxu0
      %v1329 = vpop.f32.mrb[0].mxu0
      %v1330 = vadd.f32 0.0, %v1329
      %v1331 = vpop.f32.mrb[0].mxu0
      %1332 = vdwg.mxu0
      %v1333 = vadd.f32 %v1182, %v1303
      %v1334 = vadd.f32 %v1183, %v1306
      %v1335 = vadd.f32 %v1184, %v1311
      %v1336 = vadd.f32 %v1185, %v1314
      %v1337 = vadd.f32 %v1186, %v1319
      %v1338 = vadd.f32 %v1187, %v1322
      %v1339 = vadd.f32 %v1188, %v1327
      %v1340 = vadd.f32 %v1189, %v1330
      %v1341 = vld [vmem:[%s231 + $0x180] sm:$0xf]
      %v1342 = vld [vmem:[%s231 + $0x184] sm:$0xf]
      %v1343 = vld [vmem:[%s231 + $0x188] sm:$0xf]
      %v1344 = vld [vmem:[%s231 + $0x18c] sm:$0xf]
      %v1345 = vld [vmem:[%s231 + $0x190] sm:$0xf]
      %v1346 = vld [vmem:[%s231 + $0x194] sm:$0xf]
      %v1347 = vld [vmem:[%s231 + $0x198] sm:$0xf]
      %v1348 = vld [vmem:[%s231 + $0x19c] sm:$0xf]
      %v1349 = vld [vmem:[%s231 + $0x1a0] sm:$0xf]
      %v1350 = vld [vmem:[%s231 + $0x1a4] sm:$0xf]
      %v1351 = vld [vmem:[%s231 + $0x1a8] sm:$0xf]
      %v1352 = vld [vmem:[%s231 + $0x1ac] sm:$0xf]
      %v1353 = vld [vmem:[%s231 + $0x1b0] sm:$0xf]
      %v1354 = vld [vmem:[%s231 + $0x1b4] sm:$0xf]
      %v1355 = vld [vmem:[%s231 + $0x1b8] sm:$0xf]
      %v1356 = vld [vmem:[%s231 + $0x1bc] sm:$0xf]
      %v1358 = vunpack.c.l.b16 %v272
      %v1359 = vpack.c.b16 %v1358, %v900
      %v1377 = vunpack.c.l.b16 %v1341
      %v1378 = vunpack.c.l.b16 %v1342
      %v1379 = vunpack.c.l.b16 %v1343
      %v1380 = vunpack.c.l.b16 %v1344
      %v1381 = vunpack.c.l.b16 %v1345
      %v1382 = vunpack.c.l.b16 %v1346
      %v1383 = vunpack.c.l.b16 %v1347
      %v1384 = vunpack.c.l.b16 %v1348
      %v1385 = vunpack.c.l.b16 %v1349
      %v1386 = vunpack.c.l.b16 %v1350
      %v1387 = vunpack.c.l.b16 %v1351
      %v1388 = vunpack.c.l.b16 %v1352
      %v1389 = vunpack.c.l.b16 %v1353
      %v1390 = vunpack.c.l.b16 %v1354
      %v1391 = vunpack.c.l.b16 %v1355
      %v1392 = vunpack.c.l.b16 %v1356
      %v1393 = vpack.c.b16 %v1378, %v1377
      %v1394 = vpack.c.b16 %v1380, %v1379
      %v1395 = vpack.c.b16 %v1382, %v1381
      %v1396 = vpack.c.b16 %v1384, %v1383
      %v1397 = vpack.c.b16 %v1386, %v1385
      %v1398 = vpack.c.b16 %v1388, %v1387
      %v1399 = vpack.c.b16 %v1390, %v1389
      %v1400 = vpack.c.b16 %v1392, %v1391
      %1409 = vmatprep.subr.bf16.mxu0 0
      %1410 = vmatpush1.bf16.msra.mxu0 %v1393
      %1411 = vmatprep.subr.bf16.mxu0 0
      %1412 = vmatpush1.bf16.msra.mxu0 %v1394
      %1413 = vmatprep.subr.bf16.mxu0 0
      %1414 = vmatpush1.bf16.msra.mxu0 %v1395
      %1415 = vmatprep.subr.bf16.mxu0 0
      %1416 = vmatpush1.bf16.msra.mxu0 %v1396
      %1417 = vmatprep.subr.bf16.mxu0 0
      %1418 = vmatpush1.bf16.msra.mxu0 %v1397
      %1419 = vmatprep.subr.bf16.mxu0 0
      %1420 = vmatpush1.bf16.msra.mxu0 %v1398
      %1421 = vmatprep.subr.bf16.mxu0 0
      %1422 = vmatpush1.bf16.msra.mxu0 %v1399
      %1423 = vmatprep.subr.bf16.mxu0 0
      %1424 = vmatpush1.bf16.msra.mxu0 %v1400
      %1425 = vmatprep.subr.bf16.mxu0 0
      %1426 = vmatpush1.bf16.msra.mxu0 0
      %1427 = vmatprep.subr.bf16.mxu0 0
      %1428 = vmatpush1.bf16.msra.mxu0 0
      %1429 = vmatprep.subr.bf16.mxu0 0
      %1430 = vmatpush1.bf16.msra.mxu0 0
      %1431 = vmatprep.subr.bf16.mxu0 0
      %1432 = vmatpush1.bf16.msra.mxu0 0
      %1433 = vmatprep.subr.bf16.mxu0 0
      %1434 = vmatpush1.bf16.msra.mxu0 0
      %1435 = vmatprep.subr.bf16.mxu0 0
      %1436 = vmatpush1.bf16.msra.mxu0 0
      %1437 = vmatprep.subr.bf16.mxu0 0
      %1438 = vmatpush1.bf16.msra.mxu0 0
      %1439 = vmatprep.subr.bf16.mxu0 0
      %1440 = vmatpush1.bf16.msra.mxu0 0
      %1441 = vmatprep.mubr.bf16.mxu0 0
      %1442 = vmatmul.mubr.bf16.gmra.mrb[0].mxu0 %v567
      %v1443 = vpop.f32.mrb[0].mxu0
      %v1444 = vadd.f32 0.0, %v1443
      %v1445 = vpop.f32.mrb[0].mxu0
      %v1446 = vpop.f32.mrb[0].mxu0
      %v1447 = vadd.f32 0.0, %v1446
      %v1448 = vpop.f32.mrb[0].mxu0
      %1449 = vmatprep.mubr.bf16.mxu0 0
      %1450 = vmatmul.mubr.bf16.gmra.mrb[0].mxu0 %v568
      %v1451 = vpop.f32.mrb[0].mxu0
      %v1452 = vadd.f32 0.0, %v1451
      %v1453 = vpop.f32.mrb[0].mxu0
      %v1454 = vpop.f32.mrb[0].mxu0
      %v1455 = vadd.f32 0.0, %v1454
      %v1456 = vpop.f32.mrb[0].mxu0
      %1457 = vmatprep.mubr.bf16.mxu0 0
      %1458 = vmatmul.mubr.bf16.gmra.mrb[0].mxu0 %v569
      %v1459 = vpop.f32.mrb[0].mxu0
      %v1460 = vadd.f32 0.0, %v1459
      %v1461 = vpop.f32.mrb[0].mxu0
      %v1462 = vpop.f32.mrb[0].mxu0
      %v1463 = vadd.f32 0.0, %v1462
      %v1464 = vpop.f32.mrb[0].mxu0
      %1465 = vmatprep.mubr.bf16.mxu0 0
      %1466 = vmatmul.mubr.bf16.gmra.mrb[0].mxu0 %v1359
      %v1467 = vpop.f32.mrb[0].mxu0
      %v1468 = vadd.f32 0.0, %v1467
      %v1469 = vpop.f32.mrb[0].mxu0
      %v1470 = vpop.f32.mrb[0].mxu0
      %v1471 = vadd.f32 0.0, %v1470
      %v1472 = vpop.f32.mrb[0].mxu0
      %1473 = vdwg.mxu0
      %v1474 = vadd.f32 %v1333, %v1444
      %v1475 = vadd.f32 %v1334, %v1447
      %v1476 = vadd.f32 %v1335, %v1452
      %v1477 = vadd.f32 %v1336, %v1455
      %v1478 = vadd.f32 %v1337, %v1460
      %v1479 = vadd.f32 %v1338, %v1463
      %v1480 = vadd.f32 %v1339, %v1468
      %v1481 = vadd.f32 %v1340, %v1471
      %v1483 = vshrl.u32 %v272, 16
      %v1485 = vrot.slane %v1483, 4
      %v1486 = vshll.u32 %v272, 16
      %v1488 = vrot.slane %v1486, 5
      %v1489 = vor.u32 %v1485, %v1488
      %v1490 = vrot.slane %v1489, 4
      %v1492 = vshll.u32 %v273, 16
      %v1494 = vrot.slane %v1492, 5
      %v1495 = vsel %vm292, %v1490, %v1494
      %v1496 = vld [vmem:[%s231 + $0x1c0] sm:$0xf]
      %v1497 = vld [vmem:[%s231 + $0x1c4] sm:$0xf]
      %v1498 = vld [vmem:[%s231 + $0x1c8] sm:$0xf]
      %v1499 = vld [vmem:[%s231 + $0x1cc] sm:$0xf]
      %v1500 = vld [vmem:[%s231 + $0x1d0] sm:$0xf]
      %v1501 = vld [vmem:[%s231 + $0x1d4] sm:$0xf]
      %v1502 = vld [vmem:[%s231 + $0x1d8] sm:$0xf]
      %v1503 = vld [vmem:[%s231 + $0x1dc] sm:$0xf]
      %v1504 = vld [vmem:[%s231 + $0x1e0] sm:$0xf]
      %v1505 = vld [vmem:[%s231 + $0x1e4] sm:$0xf]
      %v1506 = vld [vmem:[%s231 + $0x1e8] sm:$0xf]
      %v1507 = vld [vmem:[%s231 + $0x1ec] sm:$0xf]
      %v1508 = vld [vmem:[%s231 + $0x1f0] sm:$0xf]
      %v1509 = vld [vmem:[%s231 + $0x1f4] sm:$0xf]
      %v1510 = vld [vmem:[%s231 + $0x1f8] sm:$0xf]
      %v1511 = vld [vmem:[%s231 + $0x1fc] sm:$0xf]
      %v1512 = vunpack.c.l.b16 %v1495
      %v1513 = vpack.c.b16 %v1512, %v1060
      %v1531 = vunpack.c.l.b16 %v1496
      %v1532 = vunpack.c.l.b16 %v1497
      %v1533 = vunpack.c.l.b16 %v1498
      %v1534 = vunpack.c.l.b16 %v1499
      %v1535 = vunpack.c.l.b16 %v1500
      %v1536 = vunpack.c.l.b16 %v1501
      %v1537 = vunpack.c.l.b16 %v1502
      %v1538 = vunpack.c.l.b16 %v1503
      %v1539 = vunpack.c.l.b16 %v1504
      %v1540 = vunpack.c.l.b16 %v1505
      %v1541 = vunpack.c.l.b16 %v1506
      %v1542 = vunpack.c.l.b16 %v1507
      %v1543 = vunpack.c.l.b16 %v1508
      %v1544 = vunpack.c.l.b16 %v1509
      %v1545 = vunpack.c.l.b16 %v1510
      %v1546 = vunpack.c.l.b16 %v1511
      %v1547 = vpack.c.b16 %v1532, %v1531
      %v1548 = vpack.c.b16 %v1534, %v1533
      %v1549 = vpack.c.b16 %v1536, %v1535
      %v1550 = vpack.c.b16 %v1538, %v1537
      %v1551 = vpack.c.b16 %v1540, %v1539
      %v1552 = vpack.c.b16 %v1542, %v1541
      %v1553 = vpack.c.b16 %v1544, %v1543
      %v1554 = vpack.c.b16 %v1546, %v1545
      %1563 = vmatprep.subr.bf16.mxu0 0
      %1564 = vmatpush1.bf16.msra.mxu0 %v1547
      %1565 = vmatprep.subr.bf16.mxu0 0
      %1566 = vmatpush1.bf16.msra.mxu0 %v1548
      %1567 = vmatprep.subr.bf16.mxu0 0
      %1568 = vmatpush1.bf16.msra.mxu0 %v1549
      %1569 = vmatprep.subr.bf16.mxu0 0
      %1570 = vmatpush1.bf16.msra.mxu0 %v1550
      %1571 = vmatprep.subr.bf16.mxu0 0
      %1572 = vmatpush1.bf16.msra.mxu0 %v1551
      %1573 = vmatprep.subr.bf16.mxu0 0
      %1574 = vmatpush1.bf16.msra.mxu0 %v1552
      %1575 = vmatprep.subr.bf16.mxu0 0
      %1576 = vmatpush1.bf16.msra.mxu0 %v1553
      %1577 = vmatprep.subr.bf16.mxu0 0
      %1578 = vmatpush1.bf16.msra.mxu0 %v1554
      %1579 = vmatprep.subr.bf16.mxu0 0
      %1580 = vmatpush1.bf16.msra.mxu0 0
      %1581 = vmatprep.subr.bf16.mxu0 0
      %1582 = vmatpush1.bf16.msra.mxu0 0
      %1583 = vmatprep.subr.bf16.mxu0 0
      %1584 = vmatpush1.bf16.msra.mxu0 0
      %1585 = vmatprep.subr.bf16.mxu0 0
      %1586 = vmatpush1.bf16.msra.mxu0 0
      %1587 = vmatprep.subr.bf16.mxu0 0
      %1588 = vmatpush1.bf16.msra.mxu0 0
      %1589 = vmatprep.subr.bf16.mxu0 0
      %1590 = vmatpush1.bf16.msra.mxu0 0
      %1591 = vmatprep.subr.bf16.mxu0 0
      %1592 = vmatpush1.bf16.msra.mxu0 0
      %1593 = vmatprep.subr.bf16.mxu0 0
      %1594 = vmatpush1.bf16.msra.mxu0 0
      %1595 = vmatprep.mubr.bf16.mxu0 0
      %1596 = vmatmul.mubr.bf16.gmra.mrb[0].mxu0 %v430
      %v1597 = vpop.f32.mrb[0].mxu0
      %v1598 = vadd.f32 0.0, %v1597
      %v1599 = vpop.f32.mrb[0].mxu0
      %v1600 = vpop.f32.mrb[0].mxu0
      %v1601 = vadd.f32 0.0, %v1600
      %v1602 = vpop.f32.mrb[0].mxu0
      %1603 = vmatprep.mubr.bf16.mxu0 0
      %1604 = vmatmul.mubr.bf16.gmra.mrb[0].mxu0 %v431
      %v1605 = vpop.f32.mrb[0].mxu0
      %v1606 = vadd.f32 0.0, %v1605
      %v1607 = vpop.f32.mrb[0].mxu0
      %v1608 = vpop.f32.mrb[0].mxu0
      %v1609 = vadd.f32 0.0, %v1608
      %v1610 = vpop.f32.mrb[0].mxu0
      %1611 = vmatprep.mubr.bf16.mxu0 0
      %1612 = vmatmul.mubr.bf16.gmra.mrb[0].mxu0 %v432
      %v1613 = vpop.f32.mrb[0].mxu0
      %v1614 = vadd.f32 0.0, %v1613
      %v1615 = vpop.f32.mrb[0].mxu0
      %v1616 = vpop.f32.mrb[0].mxu0
      %v1617 = vadd.f32 0.0, %v1616
      %v1618 = vpop.f32.mrb[0].mxu0
      %1619 = vmatprep.mubr.bf16.mxu0 0
      %1620 = vmatmul.mubr.bf16.gmra.mrb[0].mxu0 %v1513
      %v1621 = vpop.f32.mrb[0].mxu0
      %v1622 = vadd.f32 0.0, %v1621
      %v1623 = vpop.f32.mrb[0].mxu0
      %v1624 = vpop.f32.mrb[0].mxu0
      %v1625 = vadd.f32 0.0, %v1624
      %v1626 = vpop.f32.mrb[0].mxu0
      %1627 = vdwg.mxu0
      %v1628 = vadd.f32 %v1474, %v1598
      %v1629 = vadd.f32 %v1475, %v1601
      %v1630 = vadd.f32 %v1476, %v1606
      %v1631 = vadd.f32 %v1477, %v1609
      %v1632 = vadd.f32 %v1478, %v1614
      %v1633 = vadd.f32 %v1479, %v1617
      %v1634 = vadd.f32 %v1480, %v1622
      %v1635 = vadd.f32 %v1481, %v1625
      %v1637 = vrot.slane %v272, 5
      %v1638 = vrot.slane %v1637, 4
      %v1639 = vrot.slane %v273, 5
      %v1640 = vsel %vm697, %v1638, %v1639
      %v1641 = vld [vmem:[%s231 + $0x200] sm:$0xf]
      %v1642 = vld [vmem:[%s231 + $0x204] sm:$0xf]
      %v1643 = vld [vmem:[%s231 + $0x208] sm:$0xf]
      %v1644 = vld [vmem:[%s231 + $0x20c] sm:$0xf]
      %v1645 = vld [vmem:[%s231 + $0x210] sm:$0xf]
      %v1646 = vld [vmem:[%s231 + $0x214] sm:$0xf]
      %v1647 = vld [vmem:[%s231 + $0x218] sm:$0xf]
      %v1648 = vld [vmem:[%s231 + $0x21c] sm:$0xf]
      %v1649 = vld [vmem:[%s231 + $0x220] sm:$0xf]
      %v1650 = vld [vmem:[%s231 + $0x224] sm:$0xf]
      %v1651 = vld [vmem:[%s231 + $0x228] sm:$0xf]
      %v1652 = vld [vmem:[%s231 + $0x22c] sm:$0xf]
      %v1653 = vld [vmem:[%s231 + $0x230] sm:$0xf]
      %v1654 = vld [vmem:[%s231 + $0x234] sm:$0xf]
      %v1655 = vld [vmem:[%s231 + $0x238] sm:$0xf]
      %v1656 = vld [vmem:[%s231 + $0x23c] sm:$0xf]
      %v1657 = vunpack.c.l.b16 %v1640
      %v1658 = vpack.c.b16 %v1657, %v1211
      %v1676 = vunpack.c.l.b16 %v1641
      %v1677 = vunpack.c.l.b16 %v1642
      %v1678 = vunpack.c.l.b16 %v1643
      %v1679 = vunpack.c.l.b16 %v1644
      %v1680 = vunpack.c.l.b16 %v1645
      %v1681 = vunpack.c.l.b16 %v1646
      %v1682 = vunpack.c.l.b16 %v1647
      %v1683 = vunpack.c.l.b16 %v1648
      %v1684 = vunpack.c.l.b16 %v1649
      %v1685 = vunpack.c.l.b16 %v1650
      %v1686 = vunpack.c.l.b16 %v1651
      %v1687 = vunpack.c.l.b16 %v1652
      %v1688 = vunpack.c.l.b16 %v1653
      %v1689 = vunpack.c.l.b16 %v1654
      %v1690 = vunpack.c.l.b16 %v1655
      %v1691 = vunpack.c.l.b16 %v1656
      %v1692 = vpack.c.b16 %v1677, %v1676
      %v1693 = vpack.c.b16 %v1679, %v1678
      %v1694 = vpack.c.b16 %v1681, %v1680
      %v1695 = vpack.c.b16 %v1683, %v1682
      %v1696 = vpack.c.b16 %v1685, %v1684
      %v1697 = vpack.c.b16 %v1687, %v1686
      %v1698 = vpack.c.b16 %v1689, %v1688
      %v1699 = vpack.c.b16 %v1691, %v1690
      %1708 = vmatprep.subr.bf16.mxu0 0
      %1709 = vmatpush1.bf16.msra.mxu0 %v1692
      %1710 = vmatprep.subr.bf16.mxu0 0
      %1711 = vmatpush1.bf16.msra.mxu0 %v1693
      %1712 = vmatprep.subr.bf16.mxu0 0
      %1713 = vmatpush1.bf16.msra.mxu0 %v1694
      %1714 = vmatprep.subr.bf16.mxu0 0
      %1715 = vmatpush1.bf16.msra.mxu0 %v1695
      %1716 = vmatprep.subr.bf16.mxu0 0
      %1717 = vmatpush1.bf16.msra.mxu0 %v1696
      %1718 = vmatprep.subr.bf16.mxu0 0
      %1719 = vmatpush1.bf16.msra.mxu0 %v1697
      %1720 = vmatprep.subr.bf16.mxu0 0
      %1721 = vmatpush1.bf16.msra.mxu0 %v1698
      %1722 = vmatprep.subr.bf16.mxu0 0
      %1723 = vmatpush1.bf16.msra.mxu0 %v1699
      %1724 = vmatprep.subr.bf16.mxu0 0
      %1725 = vmatpush1.bf16.msra.mxu0 0
      %1726 = vmatprep.subr.bf16.mxu0 0
      %1727 = vmatpush1.bf16.msra.mxu0 0
      %1728 = vmatprep.subr.bf16.mxu0 0
      %1729 = vmatpush1.bf16.msra.mxu0 0
      %1730 = vmatprep.subr.bf16.mxu0 0
      %1731 = vmatpush1.bf16.msra.mxu0 0
      %1732 = vmatprep.subr.bf16.mxu0 0
      %1733 = vmatpush1.bf16.msra.mxu0 0
      %1734 = vmatprep.subr.bf16.mxu0 0
      %1735 = vmatpush1.bf16.msra.mxu0 0
      %1736 = vmatprep.subr.bf16.mxu0 0
      %1737 = vmatpush1.bf16.msra.mxu0 0
      %1738 = vmatprep.subr.bf16.mxu0 0
      %1739 = vmatpush1.bf16.msra.mxu0 0
      %1740 = vmatprep.mubr.bf16.mxu0 0
      %1741 = vmatmul.mubr.bf16.gmra.mrb[0].mxu0 %v755
      %v1742 = vpop.f32.mrb[0].mxu0
      %v1743 = vadd.f32 0.0, %v1742
      %v1744 = vpop.f32.mrb[0].mxu0
      %v1745 = vpop.f32.mrb[0].mxu0
      %v1746 = vadd.f32 0.0, %v1745
      %v1747 = vpop.f32.mrb[0].mxu0
      %1748 = vmatprep.mubr.bf16.mxu0 0
      %1749 = vmatmul.mubr.bf16.gmra.mrb[0].mxu0 %v756
      %v1750 = vpop.f32.mrb[0].mxu0
      %v1751 = vadd.f32 0.0, %v1750
      %v1752 = vpop.f32.mrb[0].mxu0
      %v1753 = vpop.f32.mrb[0].mxu0
      %v1754 = vadd.f32 0.0, %v1753
      %v1755 = vpop.f32.mrb[0].mxu0
      %1756 = vmatprep.mubr.bf16.mxu0 0
      %1757 = vmatmul.mubr.bf16.gmra.mrb[0].mxu0 %v757
      %v1758 = vpop.f32.mrb[0].mxu0
      %v1759 = vadd.f32 0.0, %v1758
      %v1760 = vpop.f32.mrb[0].mxu0
      %v1761 = vpop.f32.mrb[0].mxu0
      %v1762 = vadd.f32 0.0, %v1761
      %v1763 = vpop.f32.mrb[0].mxu0
      %1764 = vmatprep.mubr.bf16.mxu0 0
      %1765 = vmatmul.mubr.bf16.gmra.mrb[0].mxu0 %v1658
      %v1766 = vpop.f32.mrb[0].mxu0
      %v1767 = vadd.f32 0.0, %v1766
      %v1768 = vpop.f32.mrb[0].mxu0
      %v1769 = vpop.f32.mrb[0].mxu0
      %v1770 = vadd.f32 0.0, %v1769
      %v1771 = vpop.f32.mrb[0].mxu0
      %1772 = vdwg.mxu0
      %v1773 = vadd.f32 %v1628, %v1743
      %v1774 = vadd.f32 %v1629, %v1746
      %v1775 = vadd.f32 %v1630, %v1751
      %v1776 = vadd.f32 %v1631, %v1754
      %v1777 = vadd.f32 %v1632, %v1759
      %v1778 = vadd.f32 %v1633, %v1762
      %v1779 = vadd.f32 %v1634, %v1767
      %v1780 = vadd.f32 %v1635, %v1770
      %v1781 = vld [vmem:[#allocation2] sm:$0xff]
      %v1782 = vld [vmem:[#allocation2 + $0x8] sm:$0xff]
      %v1783 = vld [vmem:[#allocation2 + $0x10] sm:$0xff]
      %v1784 = vld [vmem:[#allocation2 + $0x18] sm:$0xff]
      %v1785 = vld [vmem:[#allocation2 + $0x20] sm:$0xff]
      %v1786 = vld [vmem:[#allocation2 + $0x28] sm:$0xff]
      %v1787 = vld [vmem:[#allocation2 + $0x30] sm:$0xff]
      %v1788 = vld [vmem:[#allocation2 + $0x38] sm:$0xff]
      %v1789 = vadd.f32 %v1781, %v1773
      %v1790 = vadd.f32 %v1782, %v1774
      %v1791 = vadd.f32 %v1783, %v1775
      %v1792 = vadd.f32 %v1784, %v1776
      %v1793 = vadd.f32 %v1785, %v1777
      %v1794 = vadd.f32 %v1786, %v1778
      %v1795 = vadd.f32 %v1787, %v1779
      %v1796 = vadd.f32 %v1788, %v1780
      %1797 = vst [vmem:[#allocation2] sm:$0xff] %v1789
      %1798 = vst [vmem:[#allocation2 + $0x8] sm:$0xff] %v1790
      %1799 = vst [vmem:[#allocation2 + $0x10] sm:$0xff] %v1791
      %1800 = vst [vmem:[#allocation2 + $0x18] sm:$0xff] %v1792
      %1801 = vst [vmem:[#allocation2 + $0x20] sm:$0xff] %v1793
      %1802 = vst [vmem:[#allocation2 + $0x28] sm:$0xff] %v1794
      %1803 = vst [vmem:[#allocation2 + $0x30] sm:$0xff] %v1795
      %1804 = vst [vmem:[#allocation2 + $0x38] sm:$0xff] %v1796
      %p1805 = scmp.eq.s32.totalorder %s21, 2
      // Predicated region
      $region37: #{meta_block_forward.3} parent=31 // pred_check
        %p1806 = pneg %p1805
      $region38: #{meta_block_forward.3} parent=31 // pred_check_branch
        %1808 = sbr.rel (%p1806) target = $region40
      $region39: #{meta_block_forward.3} parent=31 // pred_region
        %v1809 = vld [vmem:[#allocation2] sm:$0xff]
        %v1810 = vld [vmem:[#allocation2 + $0x8] sm:$0xff]
        %v1811 = vld [vmem:[#allocation2 + $0x10] sm:$0xff]
        %v1812 = vld [vmem:[#allocation2 + $0x18] sm:$0xff]
        %v1813 = vld [vmem:[#allocation2 + $0x20] sm:$0xff]
        %v1814 = vld [vmem:[#allocation2 + $0x28] sm:$0xff]
        %v1815 = vld [vmem:[#allocation2 + $0x30] sm:$0xff]
        %v1816 = vld [vmem:[#allocation2 + $0x38] sm:$0xff]
        %v1817 = vld [vmem:[%s2] sm:$0x1]
        %v1819 = vlaneseq
        %v1820 = vshrl.u32 %v1819, 7
        %v1821 = vsub.s32 0, %v1820
        %v1822 = vrot.slane %v1817, %v1821
        %v1824 = vadd.f32 %v1809, %v1822
        %v1825 = vadd.f32 %v1810, %v1822
        %v1826 = vadd.f32 %v1811, %v1822
        %v1827 = vadd.f32 %v1812, %v1822
        %v1828 = vadd.f32 %v1813, %v1822
        %v1829 = vadd.f32 %v1814, %v1822
        %v1830 = vadd.f32 %v1815, %v1822
        %v1831 = vadd.f32 %v1816, %v1822
        %v1832 = vmax.f32 %v1824, 0.0
        %v1833 = vmax.f32 %v1825, 0.0
        %v1834 = vmax.f32 %v1826, 0.0
        %v1835 = vmax.f32 %v1827, 0.0
        %v1836 = vmax.f32 %v1828, 0.0
        %v1837 = vmax.f32 %v1829, 0.0
        %v1838 = vmax.f32 %v1830, 0.0
        %v1839 = vmax.f32 %v1831, 0.0
        %v1840 = vpack.c.bf16 %v1833, %v1832
        %v1841 = vpack.c.bf16 %v1835, %v1834
        %v1842 = vpack.c.bf16 %v1837, %v1836
        %v1843 = vpack.c.bf16 %v1839, %v1838
        %v1848 = vunpack.c.l.b16 %v1840
        %v1849 = vunpack.c.h.b16 %v1840
        %v1850 = vunpack.c.l.b16 %v1841
        %v1851 = vunpack.c.h.b16 %v1841
        %v1852 = vunpack.c.l.b16 %v1842
        %v1853 = vunpack.c.h.b16 %v1842
        %v1854 = vunpack.c.l.b16 %v1843
        %v1855 = vunpack.c.h.b16 %v1843
        %v1856 = vpack.c.b16 %v1848, %v1848
        %v1857 = vpack.c.b16 %v1849, %v1849
        %v1858 = vpack.c.b16 %v1850, %v1850
        %v1859 = vpack.c.b16 %v1851, %v1851
        %v1860 = vpack.c.b16 %v1852, %v1852
        %v1861 = vpack.c.b16 %v1853, %v1853
        %v1862 = vpack.c.b16 %v1854, %v1854
        %v1863 = vpack.c.b16 %v1855, %v1855
        %1872 = vst [vmem:[%s240] sm:$0xf] %v1856
        %1873 = vst [vmem:[%s240 + $0x4] sm:$0xf] %v1857
        %1874 = vst [vmem:[%s240 + $0x8] sm:$0xf] %v1858
        %1875 = vst [vmem:[%s240 + $0xc] sm:$0xf] %v1859
        %1876 = vst [vmem:[%s240 + $0x10] sm:$0xf] %v1860
        %1877 = vst [vmem:[%s240 + $0x14] sm:$0xf] %v1861
        %1878 = vst [vmem:[%s240 + $0x18] sm:$0xf] %v1862
        %1879 = vst [vmem:[%s240 + $0x1c] sm:$0xf] %v1863
      $region40: #{meta_block_forward.3} parent=31 // pred_fallthru
        _
      %p1880 = scmp.lt.s32.totalorder %s19, 1
      %s1881 = scalar_select %p1880, %s19, 1
      %p1882 = scmp.lt.s32.totalorder %s20, 3
      %s1883 = scalar_select %p1882, %s20, 3
      %s1884 = smul.addr %s1883, 8
      %s1885 = smul.addr %s1881, 32
      %s1886 = sadd.s32 %s1884, %s1885
      %s1887 = smul.addr %s1886, 4
      %s1888 = scalar_lea.vmem %s3, %s1887
      // Predicated region
      $region41: #{meta_block_forward.3} parent=31 // pred_check
        %p1889 = pneg %p130
      $region42: #{meta_block_forward.3} parent=31 // pred_check_branch
        %1891 = sbr.rel (%p1889) target = $region44
      $region43: #{meta_block_forward.3} parent=31 // pred_region
        _
      $region44: #{meta_block_forward.3} parent=31 // pred_fallthru
        _
    $region32: #{meta_block_forward.3} parent=5 // pred_fallthru
      _
    %p1892 = scmp.le.s32.totalorder 2, %s9
    // Predicated region
    $region45: #{meta_block_forward.3} parent=5 // pred_check
      %p1893 = pneg %p1892
    $region46: #{meta_block_forward.3} parent=5 // pred_check_branch
      %1895 = sbr.rel (%p1893) target = $region48
    $region47: #{meta_block_forward.3} parent=5 // pred_region
      %s1896 = ssub.s32 %s9, 2
      // Predicated region
      $region49: #{meta_block_forward.3} parent=47 // pred_check
        %p1897 = pneg %p136
      $region50: #{meta_block_forward.3} parent=47 // pred_check_branch
        %1899 = sbr.rel (%p1897) target = $region52
      $region51: #{meta_block_forward.3} parent=47 // pred_region
        %p1900 = scmp.lt.s32.totalorder %s22, 1
        %s1901 = scalar_select %p1900, %s22, 1
        %p1902 = scmp.lt.s32.totalorder %s23, 3
        %s1903 = scalar_select %p1902, %s23, 3
        %s1904 = smul.addr %s1903, 8
        %s1905 = smul.addr %s1901, 32
        %s1906 = sadd.s32 %s1904, %s1905
        %s1907 = smul.addr %s1906, 4
        %s1908 = scalar_lea.vmem %s3, %s1907
      $region52: #{meta_block_forward.3} parent=47 // pred_fallthru
        _
    $region48: #{meta_block_forward.3} parent=5 // pred_fallthru
      _
  $region6: #{meta_block_forward.3} parent=0 // loop_footer
    %s13 = sadd.s32 1, %s9
  $region7: #{meta_block_forward.3} parent=0 // loop_footer_branch
    %8 = sbr.rel target = $region3
  $region8: #{meta_block_forward.3} parent=0 // loop_exit
    _

// kernel: meta_block_forward.5
$region0: #{meta_block_forward.5}
  #allocation0 [shape = 'u32[]', space=smem, size = 0x4, offset = 0x4, fixed_abs, tag = 'smem constant byte address 0x4 - core index']
  #allocation1 [shape = 'u32[144,128]{1,0:T(1,128)}', space=vmem, size = 0x12000, scoped, tag = 'internal scratch']
  %s0 = inlined_call_operand.vmem [shape: f32[2,4,64,128], index: 0, kind: input, shape index: {}]
  %s1 = inlined_call_operand.vmem [shape: f32[2,4,64,128], index: 1, kind: input, shape index: {}]
  %s2 = inlined_call_operand.vmem [shape: f32[2,4,64,1], index: 2, kind: input, shape index: {}]
  %s3 = inlined_call_operand.vmem [shape: f32[2,1,128], index: 3, kind: input, shape index: {}]
  %s4 = inlined_call_operand.vmem [shape: bf16[128,128], index: 4, kind: input, shape index: {}]
  %s5 = inlined_call_operand.vmem [shape: f32[1,128], index: 5, kind: input, shape index: {}]
  %s6 = inlined_call_operand.vmem [shape: f32[2,4,64,128], index: 6, kind: output, shape index: {}]
  %s7 = sld [smem:[#allocation0]]
  $region57: #{meta_block_forward.5} parent=0
    _
  %s9 = ssub.s32 1, %s7
  %s10 = scalar_select 0, %s9, %s7
  loop: start=0, step=1, limit=10
  $region2: #{meta_block_forward.5} parent=0 // loop_pre_header
    _
  $region3: #{meta_block_forward.5} parent=0 // loop_header
    %s12 = sphi 0, %s16
    %p13 = scmp.ge.s32.totalorder %s12, 10
    %s19 = sphi 0, %s31
    %s20 = sphi 0, %s27
    %s21 = sphi 0, %s19
    %s22 = sphi 0, %s20
    %s23 = sphi 0, %s21
    %s24 = sphi 0, %s22
    %s36 = sphi 0, %s38
    %s39 = sphi 0, %s36
    %s40 = sphi 0, %s39
    %s56 = sphi 0, %s40
    %s64 = sphi 0, %s66
    %s67 = sphi 0, %s64
    %s68 = sphi 0, %s67
    %s84 = sphi 0, %s68
    %s92 = sphi 0, %s94
    %s95 = sphi 0, %s92
    %s96 = sphi 0, %s95
    %s112 = sphi 0, %s96
    %s118 = sphi 0, %s120
    %s121 = sphi 0, %s118
    %s122 = sphi 0, %s121
    %s138 = sphi 0, %s122
    %s142 = sphi 0, %s142
    %s144 = sphi 0, %s142
    %s145 = sphi 0, %s144
    %s159 = sphi 0, %s145
    %s163 = sphi 0, %s163
    %s165 = sphi 0, %s163
    %s166 = sphi 0, %s165
    %s180 = sphi 0, %s166
    %s188 = sphi 0, %s190
    %s191 = sphi 0, %s188
    %s192 = sphi 0, %s191
    %s208 = sphi 0, %s192
  $region4: #{meta_block_forward.5} parent=0 // loop_header_branch
    %15 = sbr.rel (%p13) target = $region8
  $region5: #{meta_block_forward.5} parent=0 // loop_body
    %s17 = ssub.s32 %s12, 1
    %s18 = ssub.s32 %s12, 2
    %s25 = sadd.s32 1, %s20
    %p26 = scmp.ge.s32.totalorder %s25, 4
    %s27 = scalar_select %p26, 0, %s25
    %s28 = sadd.s32 1, %s19
    %s29 = scalar_select %p26, %s28, %s19
    %p30 = scmp.ge.s32.totalorder %s29, 2
    %s31 = scalar_select %p30, 0, %s29
    %s32 = ssub.s32 %s19, %s31
    %s33 = ssub.s32 %s20, %s27
    %s34 = sor.u32 %s32, %s33
    %p35 = scmp.eq.s32.totalorder %s34, 0
    %s37 = sadd.s32 %s36, 1
    %s38 = scalar_select %p35, %s36, %s37
    %p41 = pneg %p35
    %p42 = scmp.eq.s32.totalorder %s12, 7
    %p43 = por %p41, %p42
    %p44 = scmp.ne.s32.totalorder %s36, %s39
    %p45 = scmp.eq.s32.totalorder %s12, 0
    %p46 = por %p44, %p45
    %p47 = scmp.ne.s32.totalorder %s36, %s39
    %p48 = scmp.eq.s32.totalorder %s17, 7
    %p49 = por %p47, %p48
    %p50 = scmp.ne.s32.totalorder %s39, %s40
    %p51 = scmp.eq.s32.totalorder %s17, 0
    %p52 = por %p50, %p51
    %p53 = scmp.ne.s32.totalorder %s39, %s40
    %p54 = scmp.eq.s32.totalorder %s18, 7
    %p55 = por %p53, %p54
    %p57 = scmp.ne.s32.totalorder %s40, %s56
    %p58 = scmp.eq.s32.totalorder %s18, 0
    %p59 = por %p57, %p58
    %s60 = ssub.s32 %s19, %s31
    %s61 = ssub.s32 %s20, %s27
    %s62 = sor.u32 %s60, %s61
    %p63 = scmp.eq.s32.totalorder %s62, 0
    %s65 = sadd.s32 %s64, 1
    %s66 = scalar_select %p63, %s64, %s65
    %p69 = pneg %p63
    %p70 = scmp.eq.s32.totalorder %s12, 7
    %p71 = por %p69, %p70
    %p72 = scmp.ne.s32.totalorder %s64, %s67
    %p73 = scmp.eq.s32.totalorder %s12, 0
    %p74 = por %p72, %p73
    %p75 = scmp.ne.s32.totalorder %s64, %s67
    %p76 = scmp.eq.s32.totalorder %s17, 7
    %p77 = por %p75, %p76
    %p78 = scmp.ne.s32.totalorder %s67, %s68
    %p79 = scmp.eq.s32.totalorder %s17, 0
    %p80 = por %p78, %p79
    %p81 = scmp.ne.s32.totalorder %s67, %s68
    %p82 = scmp.eq.s32.totalorder %s18, 7
    %p83 = por %p81, %p82
    %p85 = scmp.ne.s32.totalorder %s68, %s84
    %p86 = scmp.eq.s32.totalorder %s18, 0
    %p87 = por %p85, %p86
    %s88 = ssub.s32 %s19, %s31
    %s89 = ssub.s32 %s20, %s27
    %s90 = sor.u32 %s88, %s89
    %p91 = scmp.eq.s32.totalorder %s90, 0
    %s93 = sadd.s32 %s92, 1
    %s94 = scalar_select %p91, %s92, %s93
    %p97 = pneg %p91
    %p98 = scmp.eq.s32.totalorder %s12, 7
    %p99 = por %p97, %p98
    %p100 = scmp.ne.s32.totalorder %s92, %s95
    %p101 = scmp.eq.s32.totalorder %s12, 0
    %p102 = por %p100, %p101
    %p103 = scmp.ne.s32.totalorder %s92, %s95
    %p104 = scmp.eq.s32.totalorder %s17, 7
    %p105 = por %p103, %p104
    %p106 = scmp.ne.s32.totalorder %s95, %s96
    %p107 = scmp.eq.s32.totalorder %s17, 0
    %p108 = por %p106, %p107
    %p109 = scmp.ne.s32.totalorder %s95, %s96
    %p110 = scmp.eq.s32.totalorder %s18, 7
    %p111 = por %p109, %p110
    %p113 = scmp.ne.s32.totalorder %s96, %s112
    %p114 = scmp.eq.s32.totalorder %s18, 0
    %p115 = por %p113, %p114
    %s116 = ssub.s32 %s19, %s31
    %p117 = scmp.eq.s32.totalorder %s116, 0
    %s119 = sadd.s32 %s118, 1
    %s120 = scalar_select %p117, %s118, %s119
    %p123 = pneg %p117
    %p124 = scmp.eq.s32.totalorder %s12, 7
    %p125 = por %p123, %p124
    %p126 = scmp.ne.s32.totalorder %s118, %s121
    %p127 = scmp.eq.s32.totalorder %s12, 0
    %p128 = por %p126, %p127
    %p129 = scmp.ne.s32.totalorder %s118, %s121
    %p130 = scmp.eq.s32.totalorder %s17, 7
    %p131 = por %p129, %p130
    %p132 = scmp.ne.s32.totalorder %s121, %s122
    %p133 = scmp.eq.s32.totalorder %s17, 0
    %p134 = por %p132, %p133
    %p135 = scmp.ne.s32.totalorder %s121, %s122
    %p136 = scmp.eq.s32.totalorder %s18, 7
    %p137 = por %p135, %p136
    %p139 = scmp.ne.s32.totalorder %s122, %s138
    %p140 = scmp.eq.s32.totalorder %s18, 0
    %p141 = por %p139, %p140
    %s143 = sadd.s32 %s142, 1
    %p146 = scmp.eq.s32.totalorder %s12, 7
    %p147 = scmp.ne.s32.totalorder %s142, %s144
    %p148 = scmp.eq.s32.totalorder %s12, 0
    %p149 = por %p147, %p148
    %p150 = scmp.ne.s32.totalorder %s142, %s144
    %p151 = scmp.eq.s32.totalorder %s17, 7
    %p152 = por %p150, %p151
    %p153 = scmp.ne.s32.totalorder %s144, %s145
    %p154 = scmp.eq.s32.totalorder %s17, 0
    %p155 = por %p153, %p154
    %p156 = scmp.ne.s32.totalorder %s144, %s145
    %p157 = scmp.eq.s32.totalorder %s18, 7
    %p158 = por %p156, %p157
    %p160 = scmp.ne.s32.totalorder %s145, %s159
    %p161 = scmp.eq.s32.totalorder %s18, 0
    %p162 = por %p160, %p161
    %s164 = sadd.s32 %s163, 1
    %p167 = scmp.eq.s32.totalorder %s12, 7
    %p168 = scmp.ne.s32.totalorder %s163, %s165
    %p169 = scmp.eq.s32.totalorder %s12, 0
    %p170 = por %p168, %p169
    %p171 = scmp.ne.s32.totalorder %s163, %s165
    %p172 = scmp.eq.s32.totalorder %s17, 7
    %p173 = por %p171, %p172
    %p174 = scmp.ne.s32.totalorder %s165, %s166
    %p175 = scmp.eq.s32.totalorder %s17, 0
    %p176 = por %p174, %p175
    %p177 = scmp.ne.s32.totalorder %s165, %s166
    %p178 = scmp.eq.s32.totalorder %s18, 7
    %p179 = por %p177, %p178
    %p181 = scmp.ne.s32.totalorder %s166, %s180
    %p182 = scmp.eq.s32.totalorder %s18, 0
    %p183 = por %p181, %p182
    %s184 = ssub.s32 %s19, %s31
    %s185 = ssub.s32 %s20, %s27
    %s186 = sor.u32 %s184, %s185
    %p187 = scmp.eq.s32.totalorder %s186, 0
    %s189 = sadd.s32 %s188, 1
    %s190 = scalar_select %p187, %s188, %s189
    %p193 = pneg %p187
    %p194 = scmp.eq.s32.totalorder %s12, 7
    %p195 = por %p193, %p194
    %p196 = scmp.ne.s32.totalorder %s188, %s191
    %p197 = scmp.eq.s32.totalorder %s12, 0
    %p198 = por %p196, %p197
    %p199 = scmp.ne.s32.totalorder %s188, %s191
    %p200 = scmp.eq.s32.totalorder %s17, 7
    %p201 = por %p199, %p200
    %p202 = scmp.ne.s32.totalorder %s191, %s192
    %p203 = scmp.eq.s32.totalorder %s17, 0
    %p204 = por %p202, %p203
    %p205 = scmp.ne.s32.totalorder %s191, %s192
    %p206 = scmp.eq.s32.totalorder %s18, 7
    %p207 = por %p205, %p206
    %p209 = scmp.ne.s32.totalorder %s192, %s208
    %p210 = scmp.eq.s32.totalorder %s18, 0
    %p211 = por %p209, %p210
    %p212 = scmp.le.s32.totalorder 1, %s12
    %p213 = scmp.lt.s32.totalorder %s12, 9
    %p214 = pnand %p212, %p213
    %p215 = pneg %p214
    // Predicated region
    $region9: #{meta_block_forward.5} parent=5 // pred_check
      _
    $region10: #{meta_block_forward.5} parent=5 // pred_check_branch
      %217 = sbr.rel (%p214) target = $region12
    $region11: #{meta_block_forward.5} parent=5 // pred_region
      %s218 = ssub.s32 %s12, 1
      // Predicated region
      $region13: #{meta_block_forward.5} parent=11 // pred_check
        %p219 = pneg %p155
      $region14: #{meta_block_forward.5} parent=11 // pred_check_branch
        %221 = sbr.rel (%p219) target = $region16
      $region15: #{meta_block_forward.5} parent=11 // pred_region
        _
      $region16: #{meta_block_forward.5} parent=11 // pred_fallthru
        _
      // Predicated region
      $region17: #{meta_block_forward.5} parent=11 // pred_check
        %p222 = pneg %p176
      $region18: #{meta_block_forward.5} parent=11 // pred_check_branch
        %224 = sbr.rel (%p222) target = $region20
      $region19: #{meta_block_forward.5} parent=11 // pred_region
        _
      $region20: #{meta_block_forward.5} parent=11 // pred_fallthru
        _
    $region12: #{meta_block_forward.5} parent=5 // pred_fallthru
      _
    %p225 = scmp.lt.s32.totalorder %s12, 8
    // Predicated region
    $region21: #{meta_block_forward.5} parent=5 // pred_check
      %p226 = pneg %p225
    $region22: #{meta_block_forward.5} parent=5 // pred_check_branch
      %228 = sbr.rel (%p226) target = $region24
    $region23: #{meta_block_forward.5} parent=5 // pred_region
      // Predicated region
      $region25: #{meta_block_forward.5} parent=23 // pred_check
        %p229 = pneg %p46
      $region26: #{meta_block_forward.5} parent=23 // pred_check_branch
        %231 = sbr.rel (%p229) target = $region28
      $region27: #{meta_block_forward.5} parent=23 // pred_region
        %p232 = scmp.lt.s32.totalorder %s19, 1
        %s233 = scalar_select %p232, %s19, 1
        %p234 = scmp.lt.s32.totalorder %s20, 3
        %s235 = scalar_select %p234, %s20, 3
        %s236 = smul.addr %s235, 8
        %s237 = smul.addr %s233, 32
        %s238 = sadd.s32 %s236, %s237
        %s239 = smul.addr %s238, 8
        %s240 = scalar_lea.vmem %s0, %s239
      $region28: #{meta_block_forward.5} parent=23 // pred_fallthru
        _
      // Predicated region
      $region29: #{meta_block_forward.5} parent=23 // pred_check
        %p241 = pneg %p74
      $region30: #{meta_block_forward.5} parent=23 // pred_check_branch
        %243 = sbr.rel (%p241) target = $region32
      $region31: #{meta_block_forward.5} parent=23 // pred_region
        %p244 = scmp.lt.s32.totalorder %s19, 1
        %s245 = scalar_select %p244, %s19, 1
        %p246 = scmp.lt.s32.totalorder %s20, 3
        %s247 = scalar_select %p246, %s20, 3
        %s248 = smul.addr %s247, 8
        %s249 = smul.addr %s245, 32
        %s250 = sadd.s32 %s248, %s249
        %s251 = smul.addr %s250, 8
        %s252 = scalar_lea.vmem %s1, %s251
      $region32: #{meta_block_forward.5} parent=23 // pred_fallthru
        _
      // Predicated region
      $region33: #{meta_block_forward.5} parent=23 // pred_check
        %p253 = pneg %p102
      $region34: #{meta_block_forward.5} parent=23 // pred_check_branch
        %255 = sbr.rel (%p253) target = $region36
      $region35: #{meta_block_forward.5} parent=23 // pred_region
        %p256 = scmp.lt.s32.totalorder %s19, 1
        %s257 = scalar_select %p256, %s19, 1
        %p258 = scmp.lt.s32.totalorder %s20, 3
        %s259 = scalar_select %p258, %s20, 3
        %s260 = smul.addr %s259, 8
        %s261 = smul.addr %s257, 32
        %s262 = sadd.s32 %s260, %s261
        %s263 = smul.addr %s262, 8
        %s264 = scalar_lea.vmem %s2, %s263
      $region36: #{meta_block_forward.5} parent=23 // pred_fallthru
        _
      // Predicated region
      $region37: #{meta_block_forward.5} parent=23 // pred_check
        %p265 = pneg %p128
      $region38: #{meta_block_forward.5} parent=23 // pred_check_branch
        %267 = sbr.rel (%p265) target = $region40
      $region39: #{meta_block_forward.5} parent=23 // pred_region
        %p268 = scmp.lt.s32.totalorder %s19, 1
        %s269 = scalar_select %p268, %s19, 1
        %s270 = scalar_lea.vmem %s3, %s269
      $region40: #{meta_block_forward.5} parent=23 // pred_fallthru
        _
    $region24: #{meta_block_forward.5} parent=5 // pred_fallthru
      _
    %p271 = scmp.le.s32.totalorder 1, %s12
    %p272 = scmp.lt.s32.totalorder %s12, 9
    %p273 = pnand %p271, %p272
    %p274 = pneg %p273
    // Predicated region
    $region41: #{meta_block_forward.5} parent=5 // pred_check
      _
    $region42: #{meta_block_forward.5} parent=5 // pred_check_branch
      %276 = sbr.rel (%p273) target = $region44
    $region43: #{meta_block_forward.5} parent=5 // pred_region
      %s277 = ssub.s32 %s12, 1
      %p278 = scmp.lt.s32.totalorder %s21, 1
      %s279 = scalar_select %p278, %s21, 1
      %p280 = scmp.lt.s32.totalorder %s22, 3
      %s281 = scalar_select %p280, %s22, 3
      %s282 = smul.addr %s281, 8
      %s283 = smul.addr %s279, 32
      %s284 = sadd.s32 %s282, %s283
      %s285 = smul.addr %s284, 8
      %s286 = scalar_lea.vmem %s0, %s285
      %p287 = pneg %p52
      %p288 = pneg %p49
      %p289 = scmp.lt.s32.totalorder %s21, 1
      %s290 = scalar_select %p289, %s21, 1
      %p291 = scmp.lt.s32.totalorder %s22, 3
      %s292 = scalar_select %p291, %s22, 3
      %s293 = smul.addr %s292, 8
      %s294 = smul.addr %s290, 32
      %s295 = sadd.s32 %s293, %s294
      %s296 = smul.addr %s295, 8
      %s297 = scalar_lea.vmem %s1, %s296
      %p298 = pneg %p80
      %p299 = pneg %p77
      %p300 = scmp.lt.s32.totalorder %s21, 1
      %s301 = scalar_select %p300, %s21, 1
      %p302 = scmp.lt.s32.totalorder %s22, 3
      %s303 = scalar_select %p302, %s22, 3
      %s304 = smul.addr %s303, 8
      %s305 = smul.addr %s301, 32
      %s306 = sadd.s32 %s304, %s305
      %s307 = smul.addr %s306, 8
      %s308 = scalar_lea.vmem %s2, %s307
      %p309 = pneg %p108
      %p310 = pneg %p105
      %p311 = scmp.lt.s32.totalorder %s21, 1
      %s312 = scalar_select %p311, %s21, 1
      %s313 = scalar_lea.vmem %s3, %s312
      %p314 = pneg %p134
      %p315 = pneg %p131
      %p316 = pneg %p155
      %p317 = pneg %p152
      %p318 = pneg %p176
      %p319 = pneg %p173
      %p320 = pneg %p204
      %p321 = pneg %p201
      %p322 = scmp.lt.s32.totalorder %s21, 1
      %s323 = scalar_select %p322, %s21, 1
      %p324 = scmp.lt.s32.totalorder %s22, 3
      %s325 = scalar_select %p324, %s22, 3
      %s326 = smul.addr %s325, 8
      %s327 = smul.addr %s323, 32
      %s328 = sadd.s32 %s326, %s327
      %s329 = smul.addr %s328, 8
      %s330 = scalar_lea.vmem %s6, %s329
      %p331 = scmp.lt.s32.totalorder %s21, 1
      %s332 = scalar_select %p331, %s21, 1
      %p333 = scmp.lt.s32.totalorder %s22, 3
      %s334 = scalar_select %p333, %s22, 3
      %s335 = smul.addr %s334, 8
      %s336 = smul.addr %s332, 32
      %s337 = sadd.s32 %s335, %s336
      %s338 = smul.addr %s337, 8
      %s339 = scalar_lea.vmem %s0, %s338
      %p340 = scmp.lt.s32.totalorder %s21, 1
      %s341 = scalar_select %p340, %s21, 1
      %p342 = scmp.lt.s32.totalorder %s22, 3
      %s343 = scalar_select %p342, %s22, 3
      %s344 = smul.addr %s343, 8
      %s345 = smul.addr %s341, 32
      %s346 = sadd.s32 %s344, %s345
      %s347 = smul.addr %s346, 8
      %s348 = scalar_lea.vmem %s1, %s347
      %p349 = scmp.lt.s32.totalorder %s21, 1
      %s350 = scalar_select %p349, %s21, 1
      %p351 = scmp.lt.s32.totalorder %s22, 3
      %s352 = scalar_select %p351, %s22, 3
      %s353 = smul.addr %s352, 8
      %s354 = smul.addr %s350, 32
      %s355 = sadd.s32 %s353, %s354
      %s356 = smul.addr %s355, 8
      %s357 = scalar_lea.vmem %s2, %s356
      %p358 = scmp.lt.s32.totalorder %s21, 1
      %s359 = scalar_select %p358, %s21, 1
      %s360 = scalar_lea.vmem %s3, %s359
      %p361 = scmp.lt.s32.totalorder %s21, 1
      %s362 = scalar_select %p361, %s21, 1
      %p363 = scmp.lt.s32.totalorder %s22, 3
      %s364 = scalar_select %p363, %s22, 3
      %s365 = smul.addr %s364, 8
      %s366 = smul.addr %s362, 32
      %s367 = sadd.s32 %s365, %s366
      %s368 = smul.addr %s367, 8
      %s369 = scalar_lea.vmem %s6, %s368
      %v371 = vld [vmem:[%s339] sm:$0xff]
      %v372 = vld [vmem:[%s339 + $0x8] sm:$0xff]
      %v373 = vld [vmem:[%s339 + $0x10] sm:$0xff]
      %v374 = vld [vmem:[%s339 + $0x18] sm:$0xff]
      %v375 = vld [vmem:[%s339 + $0x20] sm:$0xff]
      %v376 = vld [vmem:[%s339 + $0x28] sm:$0xff]
      %v377 = vld [vmem:[%s339 + $0x30] sm:$0xff]
      %v378 = vld [vmem:[%s339 + $0x38] sm:$0xff]
      %v379 = vld [vmem:[%s348] sm:$0xff]
      %v380 = vld [vmem:[%s348 + $0x8] sm:$0xff]
      %v381 = vld [vmem:[%s348 + $0x10] sm:$0xff]
      %v382 = vld [vmem:[%s348 + $0x18] sm:$0xff]
      %v383 = vld [vmem:[%s348 + $0x20] sm:$0xff]
      %v384 = vld [vmem:[%s348 + $0x28] sm:$0xff]
      %v385 = vld [vmem:[%s348 + $0x30] sm:$0xff]
      %v386 = vld [vmem:[%s348 + $0x38] sm:$0xff]
      %v387 = vld [vmem:[%s357] sm:$0xff]
      %v388 = vld [vmem:[%s357 + $0x8] sm:$0xff]
      %v389 = vld [vmem:[%s357 + $0x10] sm:$0xff]
      %v390 = vld [vmem:[%s357 + $0x18] sm:$0xff]
      %v391 = vld [vmem:[%s357 + $0x20] sm:$0xff]
      %v392 = vld [vmem:[%s357 + $0x28] sm:$0xff]
      %v393 = vld [vmem:[%s357 + $0x30] sm:$0xff]
      %v394 = vld [vmem:[%s357 + $0x38] sm:$0xff]
      %v395 = vld [vmem:[%s360] sm:$0x1]
      %397 = vset.pattern.permute.xlu0 0
      %398 = vperm.xlu0 %397, %v387
      %v399 = vpop.permute.xlu0 %398
      %402 = vset.pattern.permute.xlu0 0
      %403 = vperm.xlu0 %402, %v388
      %v404 = vpop.permute.xlu0 %403
      %407 = vset.pattern.permute.xlu0 0
      %408 = vperm.xlu0 %407, %v389
      %v409 = vpop.permute.xlu0 %408
      %412 = vset.pattern.permute.xlu0 0
      %413 = vperm.xlu0 %412, %v390
      %v414 = vpop.permute.xlu0 %413
      %417 = vset.pattern.permute.xlu0 0
      %418 = vperm.xlu0 %417, %v391
      %v419 = vpop.permute.xlu0 %418
      %422 = vset.pattern.permute.xlu0 0
      %423 = vperm.xlu0 %422, %v392
      %v424 = vpop.permute.xlu0 %423
      %427 = vset.pattern.permute.xlu0 0
      %428 = vperm.xlu0 %427, %v393
      %v429 = vpop.permute.xlu0 %428
      %432 = vset.pattern.permute.xlu0 0
      %433 = vperm.xlu0 %432, %v394
      %v434 = vpop.permute.xlu0 %433
      %v437 = vlaneseq
      %v438 = vshrl.u32 %v437, 7
      %v439 = vsub.s32 0, %v438
      %v440 = vrot.slane %v395, %v439
      %v442 = vadd.f32 %v399, %v440
      %v443 = vadd.f32 %v404, %v440
      %v444 = vadd.f32 %v409, %v440
      %v445 = vadd.f32 %v414, %v440
      %v446 = vadd.f32 %v419, %v440
      %v447 = vadd.f32 %v424, %v440
      %v448 = vadd.f32 %v429, %v440
      %v449 = vadd.f32 %v434, %v440
      %v450 = vxor.u32 %v442, 2147483648
      %v451 = vxor.u32 %v443, 2147483648
      %v452 = vxor.u32 %v444, 2147483648
      %v453 = vxor.u32 %v445, 2147483648
      %v454 = vxor.u32 %v446, 2147483648
      %v455 = vxor.u32 %v447, 2147483648
      %v456 = vxor.u32 %v448, 2147483648
      %v457 = vxor.u32 %v449, 2147483648
      %v458 = vmul.f32 %v450, 1.442695
      %v459 = vpow.pop %v458
      %v460 = vmul.f32 %v451, 1.442695
      %v461 = vpow.pop %v460
      %v462 = vmul.f32 %v452, 1.442695
      %v463 = vpow.pop %v462
      %v464 = vmul.f32 %v453, 1.442695
      %v465 = vpow.pop %v464
      %v466 = vmul.f32 %v454, 1.442695
      %v467 = vpow.pop %v466
      %v468 = vmul.f32 %v455, 1.442695
      %v469 = vpow.pop %v468
      %v470 = vmul.f32 %v456, 1.442695
      %v471 = vpow.pop %v470
      %v472 = vmul.f32 %v457, 1.442695
      %v473 = vpow.pop %v472
      %v474 = vadd.f32 %v459, 1.0
      %v475 = vadd.f32 %v461, 1.0
      %v476 = vadd.f32 %v463, 1.0
      %v477 = vadd.f32 %v465, 1.0
      %v478 = vadd.f32 %v467, 1.0
      %v479 = vadd.f32 %v469, 1.0
      %v480 = vadd.f32 %v471, 1.0
      %v481 = vadd.f32 %v473, 1.0
      %v482 = vrcp.pop %v474
      %v483 = vmul.f32 1.0, %v482
      %v484 = vrcp.pop %v475
      %v485 = vmul.f32 1.0, %v484
      %v486 = vrcp.pop %v476
      %v487 = vmul.f32 1.0, %v486
      %v488 = vrcp.pop %v477
      %v489 = vmul.f32 1.0, %v488
      %v490 = vrcp.pop %v478
      %v491 = vmul.f32 1.0, %v490
      %v492 = vrcp.pop %v479
      %v493 = vmul.f32 1.0, %v492
      %v494 = vrcp.pop %v480
      %v495 = vmul.f32 1.0, %v494
      %v496 = vrcp.pop %v481
      %v497 = vmul.f32 1.0, %v496
      %v498 = vmul.f32 %v371, %v483
      %v499 = vmul.f32 %v372, %v485
      %v500 = vmul.f32 %v373, %v487
      %v501 = vmul.f32 %v374, %v489
      %v502 = vmul.f32 %v375, %v491
      %v503 = vmul.f32 %v376, %v493
      %v504 = vmul.f32 %v377, %v495
      %v505 = vmul.f32 %v378, %v497
      %v506 = vadd.f32 %v379, %v498
      %v507 = vadd.f32 %v380, %v499
      %v508 = vadd.f32 %v381, %v500
      %v509 = vadd.f32 %v382, %v501
      %v510 = vadd.f32 %v383, %v502
      %v511 = vadd.f32 %v384, %v503
      %v512 = vadd.f32 %v385, %v504
      %v513 = vadd.f32 %v386, %v505
      %v514 = vmax.f32 %v506, 0.0
      %v515 = vmax.f32 %v507, 0.0
      %v516 = vmax.f32 %v508, 0.0
      %v517 = vmax.f32 %v509, 0.0
      %v518 = vmax.f32 %v510, 0.0
      %v519 = vmax.f32 %v511, 0.0
      %v520 = vmax.f32 %v512, 0.0
      %v521 = vmax.f32 %v513, 0.0
      %v522 = vpack.c.bf16 %v515, %v514
      %v523 = vpack.c.bf16 %v517, %v516
      %v524 = vpack.c.bf16 %v519, %v518
      %v525 = vpack.c.bf16 %v521, %v520
      %v526 = vld [vmem:[%s4] sm:$0xf]
      %v527 = vld [vmem:[%s4 + $0x4] sm:$0xf]
      %v528 = vld [vmem:[%s4 + $0x8] sm:$0xf]
      %v529 = vld [vmem:[%s4 + $0xc] sm:$0xf]
      %v530 = vld [vmem:[%s4 + $0x10] sm:$0xf]
      %v531 = vld [vmem:[%s4 + $0x14] sm:$0xf]
      %v532 = vld [vmem:[%s4 + $0x18] sm:$0xf]
      %v533 = vld [vmem:[%s4 + $0x1c] sm:$0xf]
      %v534 = vld [vmem:[%s4 + $0x20] sm:$0xf]
      %v535 = vld [vmem:[%s4 + $0x24] sm:$0xf]
      %v536 = vld [vmem:[%s4 + $0x28] sm:$0xf]
      %v537 = vld [vmem:[%s4 + $0x2c] sm:$0xf]
      %v538 = vld [vmem:[%s4 + $0x30] sm:$0xf]
      %v539 = vld [vmem:[%s4 + $0x34] sm:$0xf]
      %v540 = vld [vmem:[%s4 + $0x38] sm:$0xf]
      %v541 = vld [vmem:[%s4 + $0x3c] sm:$0xf]
      %v542 = vld [vmem:[%s5] sm:$0x1]
      %v544 = vlaneseq
      %v545 = vshrl.u32 %v544, 7
      %v546 = vsub.s32 0, %v545
      %v547 = vrot.slane %v542, %v546
      %v565 = vunpack.c.l.b16 %v526
      %v566 = vunpack.c.l.b16 %v527
      %v567 = vunpack.c.l.b16 %v528
      %v568 = vunpack.c.l.b16 %v529
      %v569 = vunpack.c.l.b16 %v530
      %v570 = vunpack.c.l.b16 %v531
      %v571 = vunpack.c.l.b16 %v532
      %v572 = vunpack.c.l.b16 %v533
      %v573 = vunpack.c.l.b16 %v534
      %v574 = vunpack.c.l.b16 %v535
      %v575 = vunpack.c.l.b16 %v536
      %v576 = vunpack.c.l.b16 %v537
      %v577 = vunpack.c.l.b16 %v538
      %v578 = vunpack.c.l.b16 %v539
      %v579 = vunpack.c.l.b16 %v540
      %v580 = vunpack.c.l.b16 %v541
      %v581 = vpack.c.b16 %v566, %v565
      %v582 = vpack.c.b16 %v568, %v567
      %v583 = vpack.c.b16 %v570, %v569
      %v584 = vpack.c.b16 %v572, %v571
      %v585 = vpack.c.b16 %v574, %v573
      %v586 = vpack.c.b16 %v576, %v575
      %v587 = vpack.c.b16 %v578, %v577
      %v588 = vpack.c.b16 %v580, %v579
      %597 = vmatprep.subr.bf16.mxu0 0
      %598 = vmatpush1.bf16.msra.mxu0 %v581
      %599 = vmatprep.subr.bf16.mxu0 0
      %600 = vmatpush1.bf16.msra.mxu0 %v582
      %601 = vmatprep.subr.bf16.mxu0 0
      %602 = vmatpush1.bf16.msra.mxu0 %v583
      %603 = vmatprep.subr.bf16.mxu0 0
      %604 = vmatpush1.bf16.msra.mxu0 %v584
      %605 = vmatprep.subr.bf16.mxu0 0
      %606 = vmatpush1.bf16.msra.mxu0 %v585
      %607 = vmatprep.subr.bf16.mxu0 0
      %608 = vmatpush1.bf16.msra.mxu0 %v586
      %609 = vmatprep.subr.bf16.mxu0 0
      %610 = vmatpush1.bf16.msra.mxu0 %v587
      %611 = vmatprep.subr.bf16.mxu0 0
      %612 = vmatpush1.bf16.msra.mxu0 %v588
      %613 = vmatprep.subr.bf16.mxu0 0
      %614 = vmatpush1.bf16.msra.mxu0 0
      %615 = vmatprep.subr.bf16.mxu0 0
      %616 = vmatpush1.bf16.msra.mxu0 0
      %617 = vmatprep.subr.bf16.mxu0 0
      %618 = vmatpush1.bf16.msra.mxu0 0
      %619 = vmatprep.subr.bf16.mxu0 0
      %620 = vmatpush1.bf16.msra.mxu0 0
      %621 = vmatprep.subr.bf16.mxu0 0
      %622 = vmatpush1.bf16.msra.mxu0 0
      %623 = vmatprep.subr.bf16.mxu0 0
      %624 = vmatpush1.bf16.msra.mxu0 0
      %625 = vmatprep.subr.bf16.mxu0 0
      %626 = vmatpush1.bf16.msra.mxu0 0
      %627 = vmatprep.subr.bf16.mxu0 0
      %628 = vmatpush1.bf16.msra.mxu0 0
      %629 = vmatprep.mubr.bf16.mxu0 0
      %630 = vmatmul.mubr.bf16.gmra.mrb[0].mxu0 %v522
      %v631 = vpop.f32.mrb[0].mxu0
      %v632 = vadd.f32 %v547, %v631
      %v633 = vpop.f32.mrb[0].mxu0
      %v634 = vpop.f32.mrb[0].mxu0
      %v635 = vadd.f32 %v547, %v634
      %v636 = vpop.f32.mrb[0].mxu0
      %637 = vmatprep.mubr.bf16.mxu0 0
      %638 = vmatmul.mubr.bf16.gmra.mrb[0].mxu0 %v523
      %v639 = vpop.f32.mrb[0].mxu0
      %v640 = vadd.f32 %v547, %v639
      %v641 = vpop.f32.mrb[0].mxu0
      %v642 = vpop.f32.mrb[0].mxu0
      %v643 = vadd.f32 %v547, %v642
      %v644 = vpop.f32.mrb[0].mxu0
      %645 = vmatprep.mubr.bf16.mxu0 0
      %646 = vmatmul.mubr.bf16.gmra.mrb[0].mxu0 %v524
      %v647 = vpop.f32.mrb[0].mxu0
      %v648 = vadd.f32 %v547, %v647
      %v649 = vpop.f32.mrb[0].mxu0
      %v650 = vpop.f32.mrb[0].mxu0
      %v651 = vadd.f32 %v547, %v650
      %v652 = vpop.f32.mrb[0].mxu0
      %653 = vmatprep.mubr.bf16.mxu0 0
      %654 = vmatmul.mubr.bf16.gmra.mrb[0].mxu0 %v525
      %v655 = vpop.f32.mrb[0].mxu0
      %v656 = vadd.f32 %v547, %v655
      %v657 = vpop.f32.mrb[0].mxu0
      %v658 = vpop.f32.mrb[0].mxu0
      %v659 = vadd.f32 %v547, %v658
      %v660 = vpop.f32.mrb[0].mxu0
      %661 = vdwg.mxu0
      %662 = vst [vmem:[%s369] sm:$0xff] %v632
      %663 = vst [vmem:[%s369 + $0x8] sm:$0xff] %v635
      %664 = vst [vmem:[%s369 + $0x10] sm:$0xff] %v640
      %665 = vst [vmem:[%s369 + $0x18] sm:$0xff] %v643
      %666 = vst [vmem:[%s369 + $0x20] sm:$0xff] %v648
      %667 = vst [vmem:[%s369 + $0x28] sm:$0xff] %v651
      %668 = vst [vmem:[%s369 + $0x30] sm:$0xff] %v656
      %669 = vst [vmem:[%s369 + $0x38] sm:$0xff] %v659
      %p670 = scmp.lt.s32.totalorder %s21, 1
      %s671 = scalar_select %p670, %s21, 1
      %p672 = scmp.lt.s32.totalorder %s22, 3
      %s673 = scalar_select %p672, %s22, 3
      %s674 = smul.addr %s673, 8
      %s675 = smul.addr %s671, 32
      %s676 = sadd.s32 %s674, %s675
      %s677 = smul.addr %s676, 8
      %s678 = scalar_lea.vmem %s6, %s677
      // Predicated region
      $region45: #{meta_block_forward.5} parent=43 // pred_check
        %p679 = pneg %p201
      $region46: #{meta_block_forward.5} parent=43 // pred_check_branch
        %681 = sbr.rel (%p679) target = $region48
      $region47: #{meta_block_forward.5} parent=43 // pred_region
        _
      $region48: #{meta_block_forward.5} parent=43 // pred_fallthru
        _
    $region44: #{meta_block_forward.5} parent=5 // pred_fallthru
      _
    %p682 = scmp.le.s32.totalorder 2, %s12
    // Predicated region
    $region49: #{meta_block_forward.5} parent=5 // pred_check
      %p683 = pneg %p682
    $region50: #{meta_block_forward.5} parent=5 // pred_check_branch
      %685 = sbr.rel (%p683) target = $region52
    $region51: #{meta_block_forward.5} parent=5 // pred_region
      %s686 = ssub.s32 %s12, 2
      // Predicated region
      $region53: #{meta_block_forward.5} parent=51 // pred_check
        %p687 = pneg %p207
      $region54: #{meta_block_forward.5} parent=51 // pred_check_branch
        %689 = sbr.rel (%p687) target = $region56
      $region55: #{meta_block_forward.5} parent=51 // pred_region
        %p690 = scmp.lt.s32.totalorder %s23, 1
        %s691 = scalar_select %p690, %s23, 1
        %p692 = scmp.lt.s32.totalorder %s24, 3
        %s693 = scalar_select %p692, %s24, 3
        %s694 = smul.addr %s693, 8
        %s695 = smul.addr %s691, 32
        %s696 = sadd.s32 %s694, %s695
        %s697 = smul.addr %s696, 8
        %s698 = scalar_lea.vmem %s6, %s697
      $region56: #{meta_block_forward.5} parent=51 // pred_fallthru
        _
    $region52: #{meta_block_forward.5} parent=5 // pred_fallthru
      _
  $region6: #{meta_block_forward.5} parent=0 // loop_footer
    %s16 = sadd.s32 1, %s12
  $region7: #{meta_block_forward.5} parent=0 // loop_footer_branch
    %11 = sbr.rel target = $region3
  $region8: #{meta_block_forward.5} parent=0 // loop_exit
    _

</llo_original>
